<compile_context>
chip_gen: v6e
topology: v6e:2x2x1
jax: 0.10.0
libtpu: 0.0.40
codegen_flags: <defaults>
</compile_context>

<pallas_src>
import functools

import jax
import jax.numpy as jnp
from jax.experimental import pallas as pl
from jax.experimental.pallas import tpu as pltpu


# ----------------------------------------------------------------------------
# Fused kernel: all TCN residual blocks + pooling + spatial head + fc1/fc2,
# for one tile of BB samples.
# ----------------------------------------------------------------------------
def _fused_tcn_kernel(
    feats_ref, sp_ref,
    w1_ref, b1_ref, w2_ref, b2_ref, wd_ref, bd_ref,
    ws_ref, bs_ref, w1a_ref, w1b_ref, bh1_ref, wh2_ref, bh2_ref,
    out_ref,
    abuf,
    *, dilations, has_downsample, filter_width, pad, seq_len, batch_tile,
):
    K, L, PAD, BB = filter_width, seq_len, pad, batch_tile
    H = abuf.shape[-1]
    M = BB * L

    # Per-sample zero halo: rows [0, PAD) of every sample stay zero for the
    # whole kernel (fresh causal left padding for every dilated conv); rows
    # [PAD, PAD+L) hold the live activation.  Re-zeroed every grid step (with
    # megacore "parallel" sharding each core owns its own scratch).
    if PAD > 0:
        abuf[:, pl.ds(0, PAD), :] = jnp.zeros((BB, PAD, H), jnp.float32)
    abuf[:, pl.ds(PAD, L), :] = feats_ref[...].astype(jnp.float32)

    def dilated_conv(w_ref, b_ref, d, dil):
        # Causal dilated conv as K accumulated (BB*L, H) @ (H, H) MXU dots,
        # one per tap, on causally shifted static views of the haloed scratch.
        # (No concat-im2col -> no cross-lane shuffles, no (L, K*H) VMEM temp.)
        acc = None
        for k in range(K):
            shift = (K - 1 - k) * dil
            tap = abuf[:, pl.ds(PAD - shift, L), :].reshape(M, H)
            part = jnp.dot(tap, w_ref[d, k], preferred_element_type=jnp.float32)
            acc = part if acc is None else acc + part
        return acc + b_ref[d]

    for d, dil in enumerate(dilations):                  # static unroll (small depth)
        x = abuf[:, pl.ds(PAD, L), :].reshape(M, H)      # residual input (BB*L, H)
        h = jnp.maximum(dilated_conv(w1_ref, b1_ref, d, dil), 0.0)
        abuf[:, pl.ds(PAD, L), :] = h.reshape(BB, L, H)  # expose h to conv2's taps
        h = jnp.maximum(dilated_conv(w2_ref, b2_ref, d, dil), 0.0)
        if has_downsample[d]:
            res = (jnp.dot(x, wd_ref[d], preferred_element_type=jnp.float32)
                   + bd_ref[d])
        else:
            res = x
        abuf[:, pl.ds(PAD, L), :] = jnp.maximum(h + res, 0.0).reshape(BB, L, H)

    # Head, once per batch tile: AdaptiveAvgPool1d(1) over time, spatial head,
    # fc1 (+LeakyReLU), fc2 -- all batched over the BB samples of this tile.
    act = abuf[:, pl.ds(PAD, L), :]                      # (BB, L, H)
    pooled = jnp.sum(act, axis=1) * (1.0 / L)            # (BB, H)
    se = (jnp.dot(sp_ref[...], ws_ref[...], preferred_element_type=jnp.float32)
          + bs_ref[...])                                 # (BB, E)
    # fc1 on concat([pooled, se]) == pooled @ W1a + se @ W1b + b1
    z = (jnp.dot(pooled, w1a_ref[...], preferred_element_type=jnp.float32)
         + jnp.dot(se, w1b_ref[...], preferred_element_type=jnp.float32)
         + bh1_ref[...])
    z = jnp.where(z > 0, z, 0.01 * z)                    # LeakyReLU (slope 0.01)
    out = jnp.dot(z, wh2_ref[...], preferred_element_type=jnp.float32) + bh2_ref[...]
    out_ref[...] = out.astype(out_ref.dtype)             # (BB, O)


# ----------------------------------------------------------------------------
# Wrapper: pack weights into the fused layout and launch one pallas_call.
# ----------------------------------------------------------------------------
def _pack_block_weights(blocks, hidden):
    """Pad Cin -> hidden, keep per-tap layout (K, hidden, H), stack over depth."""
    w1s, b1s, w2s, b2s, wds, bds = [], [], [], [], [], []
    for blk in blocks:
        _, cin, _ = blk["w1"].shape
        pc = hidden - cin
        w1s.append(jnp.pad(blk["w1"], ((0, 0), (0, pc), (0, 0))))   # (K, hidden, H)
        w2s.append(blk["w2"])                                       # (K, hidden, H)
        wds.append(jnp.pad(blk["wd"], ((0, pc), (0, 0))))           # (hidden, H)
        b1s.append(blk["b1"]); b2s.append(blk["b2"]); bds.append(blk["bd"])
    return (jnp.stack(w1s), jnp.stack(b1s), jnp.stack(w2s), jnp.stack(b2s),
            jnp.stack(wds), jnp.stack(bds))


def spatial_regression_tcn_forward(x, blocks, headp, *, spatial_dim,
                                   use_skip_connections=False, batch_tile=8):
    """x: (B, L, feature_dim + spatial_dim) -> (B, output_dim)."""
    if use_skip_connections:
        # TODO(synk): WaveNet-style skip-sum aggregation not implemented in the
        # fused kernel (demo instantiates use_skip_connections=False).
        raise NotImplementedError("use_skip_connections=True not supported")

    B, L, _ = x.shape
    # L must be sublane-aligned so the (BB, L, H) <-> (BB*L, H) collapse is a
    # layout no-op.  TODO(synk): pad L to a multiple of 8 for generic seq lens.
    assert L % 8 == 0, "seq_len must be a multiple of 8 for this fused layout"

    spatial = x[:, 0, -spatial_dim:]                      # (B, S)
    feats = x[:, :, :-spatial_dim]                        # (B, L, F)
    F = feats.shape[-1]
    K, _, H = blocks[0]["w1"].shape
    assert F <= H
    depth = len(blocks)
    dilations = tuple(int(b["dilation"]) for b in blocks)
    has_ds = tuple(bool(b["has_downsample"]) for b in blocks)
    PAD = (K - 1) * max(dilations)

    # Batch tile: BB samples per grid step, batch zero-padded up to a multiple.
    BB = max(1, min(batch_tile, B))
    Bp = int(pl.cdiv(B, BB)) * BB

    # Pad input channels F -> H (zero cols) so every block shares one layout,
    # and pad the batch for the tiling.
    feats_p = jnp.pad(feats, ((0, Bp - B), (0, 0), (0, H - F))).astype(jnp.float32)
    spatial_p = jnp.pad(spatial, ((0, Bp - B), (0, 0))).astype(jnp.float32)
    w1_stk, b1_stk, w2_stk, b2_stk, wd_stk, bd_stk = _pack_block_weights(blocks, H)

    S = spatial.shape[-1]
    E = headp["ws"].shape[1]
    O = headp["w2"].shape[1]

    kern = functools.partial(
        _fused_tcn_kernel, dilations=dilations, has_downsample=has_ds,
        filter_width=K, pad=PAD, seq_len=L, batch_tile=BB)

    # Advisory cost estimate for XLA's scheduler.
    conv_flops = 2 * depth * 2 * K * Bp * L * H * H
    ds_flops = 2 * Bp * L * H * H * sum(has_ds)
    head_flops = 2 * Bp * (S * E + H * H + E * H + H * O)
    weight_elems = (w1_stk.size + b1_stk.size + w2_stk.size + b2_stk.size
                    + wd_stk.size + bd_stk.size
                    + sum(headp[k].size for k in
                          ("ws", "bs", "w1a", "w1b", "b1", "w2", "b2")))
    bytes_accessed = 4 * (feats_p.size + spatial_p.size + Bp * O + weight_elems)

    out = pl.pallas_call(
        kern,
        out_shape=jax.ShapeDtypeStruct((Bp, O), jnp.float32),
        grid=(Bp // BB,),
        in_specs=[
            pl.BlockSpec((BB, L, H), lambda b: (b, 0, 0)),            # feats
            pl.BlockSpec((BB, S), lambda b: (b, 0)),                  # spatial
            pl.BlockSpec((depth, K, H, H), lambda b: (0, 0, 0, 0)),   # w1 per-tap
            pl.BlockSpec((depth, 1, H), lambda b: (0, 0, 0)),         # b1
            pl.BlockSpec((depth, K, H, H), lambda b: (0, 0, 0, 0)),   # w2 per-tap
            pl.BlockSpec((depth, 1, H), lambda b: (0, 0, 0)),         # b2
            pl.BlockSpec((depth, H, H), lambda b: (0, 0, 0)),         # wd (1x1 res)
            pl.BlockSpec((depth, 1, H), lambda b: (0, 0, 0)),         # bd
            pl.BlockSpec((S, E), lambda b: (0, 0)),                   # spatial head W
            pl.BlockSpec((1, E), lambda b: (0, 0)),
            pl.BlockSpec((H, H), lambda b: (0, 0)),                   # fc1 (tcn part)
            pl.BlockSpec((E, H), lambda b: (0, 0)),                   # fc1 (spatial)
            pl.BlockSpec((1, H), lambda b: (0, 0)),
            pl.BlockSpec((H, O), lambda b: (0, 0)),                   # fc2
            pl.BlockSpec((1, O), lambda b: (0, 0)),
        ],
        out_specs=pl.BlockSpec((BB, O), lambda b: (b, 0)),
        scratch_shapes=[pltpu.VMEM((BB, PAD + L, H), jnp.float32)],
        compiler_params=pltpu.CompilerParams(
            dimension_semantics=("parallel",),
            vmem_limit_bytes=32 * 1024 * 1024),
        cost_estimate=pl.CostEstimate(
            flops=int(conv_flops + ds_flops + head_flops),
            transcendentals=0,
            bytes_accessed=int(bytes_accessed)),
    )(feats_p, spatial_p,
      w1_stk, b1_stk, w2_stk, b2_stk, wd_stk, bd_stk,
      headp["ws"], headp["bs"], headp["w1a"], headp["w1b"], headp["b1"],
      headp["w2"], headp["b2"])
    return out[:B]


# ----------------------------------------------------------------------------
# Parameter init (synthetic, shapes from the module __init__)
# ----------------------------------------------------------------------------
def init_params(key, *, feature_dim, spatial_dim, spatial_embedding_dim,
                output_dim, hidden_channels, network_depth, filter_width):
    keys = iter(jax.random.split(key, 8 * network_depth + 16))

    def w(shape, scale=0.2):
        return (scale * jax.random.normal(next(keys), shape)).astype(jnp.float32)

    blocks = []
    for i in range(network_depth):
        cin = feature_dim if i == 0 else hidden_channels
        blocks.append(dict(
            w1=w((filter_width, cin, hidden_channels)),
            b1=w((1, hidden_channels), 0.05),
            w2=w((filter_width, hidden_channels, hidden_channels)),
            b2=w((1, hidden_channels), 0.05),
            wd=w((cin, hidden_channels)),
            bd=w((1, hidden_channels), 0.05),
            dilation=2 ** i,
            has_downsample=(cin != hidden_channels),
        ))
    headp = dict(
        ws=w((spatial_dim, spatial_embedding_dim)),
        bs=w((1, spatial_embedding_dim), 0.05),
        w1a=w((hidden_channels, hidden_channels)),
        w1b=w((spatial_embedding_dim, hidden_channels)),
        b1=w((1, hidden_channels), 0.05),
        w2=w((hidden_channels, output_dim)),
        b2=w((1, output_dim), 0.05),
    )
    return blocks, headp


# ----------------------------------------------------------------------------
# Pure-JAX reference (correctness check only)
# ----------------------------------------------------------------------------
def _ref_forward(x, blocks, headp, *, spatial_dim):
    sp = x[:, 0, -spatial_dim:]
    h = x[:, :, :-spatial_dim]
    B, L, _ = h.shape

    def conv(a, w, b, d):
        K = w.shape[0]
        out = jnp.zeros((B, L, w.shape[2]), jnp.float32) + b
        for k in range(K):
            shift = (K - 1 - k) * d
            if shift >= L:
                continue
            a_sh = jnp.pad(a, ((0, 0), (shift, 0), (0, 0)))[:, :L, :]
            out = out + jnp.einsum("blc,co->blo", a_sh, w[k])
        return out

    for blk in blocks:
        y = jnp.maximum(conv(h, blk["w1"], blk["b1"], blk["dilation"]), 0.0)
        y = jnp.maximum(conv(y, blk["w2"], blk["b2"], blk["dilation"]), 0.0)
        res = (jnp.einsum("blc,co->blo", h, blk["wd"]) + blk["bd"]
               if blk["has_downsample"] else h)
        h = jnp.maximum(y + res, 0.0)

    pooled = jnp.mean(h, axis=1)
    se = sp @ headp["ws"] + headp["bs"]
    z = pooled @ headp["w1a"] + se @ headp["w1b"] + headp["b1"]
    z = jnp.where(z > 0, z, 0.01 * z)
    return z @ headp["w2"] + headp["b2"]


# ----------------------------------------------------------------------------
if __name__ == "__main__":
    feature_dim = 6
    spatial_dim = 4
    spatial_embedding_dim = 8
    time_dim = 16
    output_dim = 3
    hidden_channels = 32
    network_depth = 3
    filter_width = 3
    batch = 16          # 2 grid steps of 8 samples -> both TCs busy on v7x

    key = jax.random.PRNGKey(0)
    k_x, k_p = jax.random.split(key)

    x = jax.random.normal(
        k_x, (batch, time_dim, feature_dim + spatial_dim), dtype=jnp.float32
    )
    blocks, headp = init_params(
        k_p,
        feature_dim=feature_dim,
        spatial_dim=spatial_dim,
        spatial_embedding_dim=spatial_embedding_dim,
        output_dim=output_dim,
        hidden_channels=hidden_channels,
        network_depth=network_depth,
        filter_width=filter_width,
    )

    out = spatial_regression_tcn_forward(
        x, blocks, headp, spatial_dim=spatial_dim,
        use_skip_connections=False, batch_tile=8,
    )
    out = jax.block_until_ready(out)

    ref = _ref_forward(x, blocks, headp, spatial_dim=spatial_dim)
    assert out.shape == (batch, output_dim), out.shape
    assert jnp.allclose(out, ref, rtol=2e-3, atol=2e-3), (out, ref)

    print("KERNEL_OK")
</pallas_src>

<mosaic_0001>
module attributes {stable_mosaic.version = 11 : i64} {
  func.func @_fused_tcn_kernel(%arg0: i32, %arg1: memref<8x16x32xf32, #tpu.memory_space<vmem>>, %arg2: memref<8x4xf32, #tpu.memory_space<vmem>>, %arg3: memref<3x3x32x32xf32, #tpu.memory_space<vmem>>, %arg4: memref<3x1x32xf32, #tpu.memory_space<vmem>>, %arg5: memref<3x3x32x32xf32, #tpu.memory_space<vmem>>, %arg6: memref<3x1x32xf32, #tpu.memory_space<vmem>>, %arg7: memref<3x32x32xf32, #tpu.memory_space<vmem>>, %arg8: memref<3x1x32xf32, #tpu.memory_space<vmem>>, %arg9: memref<4x8xf32, #tpu.memory_space<vmem>>, %arg10: memref<1x8xf32, #tpu.memory_space<vmem>>, %arg11: memref<32x32xf32, #tpu.memory_space<vmem>>, %arg12: memref<8x32xf32, #tpu.memory_space<vmem>>, %arg13: memref<1x32xf32, #tpu.memory_space<vmem>>, %arg14: memref<32x3xf32, #tpu.memory_space<vmem>>, %arg15: memref<1x3xf32, #tpu.memory_space<vmem>>, %arg16: memref<8x3xf32, #tpu.memory_space<vmem>>, %arg17: memref<8x24x32xf32, #tpu.memory_space<vmem>>) attributes {dimension_semantics = [#tpu.dimension_semantics<parallel>], iteration_bounds = array<i64: 2>, scalar_prefetch = 0 : i64, scratch_operands = 1 : i64, tpu.core_type = #tpu.core_type<tc>, window_params = [{transform_indices = @transform_0, window_bounds = array<i64: 8, 16, 32>}, {transform_indices = @transform_1, window_bounds = array<i64: 8, 4>}, {pipeline_mode = #tpu.pipeline_mode<synchronous>, transform_indices = @transform_2, window_bounds = array<i64: 3, 3, 32, 32>}, {pipeline_mode = #tpu.pipeline_mode<synchronous>, transform_indices = @transform_3, window_bounds = array<i64: 3, 1, 32>}, {pipeline_mode = #tpu.pipeline_mode<synchronous>, transform_indices = @transform_4, window_bounds = array<i64: 3, 3, 32, 32>}, {pipeline_mode = #tpu.pipeline_mode<synchronous>, transform_indices = @transform_5, window_bounds = array<i64: 3, 1, 32>}, {pipeline_mode = #tpu.pipeline_mode<synchronous>, transform_indices = @transform_6, window_bounds = array<i64: 3, 32, 32>}, {pipeline_mode = #tpu.pipeline_mode<synchronous>, transform_indices = @transform_7, window_bounds = array<i64: 3, 1, 32>}, {pipeline_mode = #tpu.pipeline_mode<synchronous>, transform_indices = @transform_8, window_bounds = array<i64: 4, 8>}, {pipeline_mode = #tpu.pipeline_mode<synchronous>, transform_indices = @transform_9, window_bounds = array<i64: 1, 8>}, {pipeline_mode = #tpu.pipeline_mode<synchronous>, transform_indices = @transform_10, window_bounds = array<i64: 32, 32>}, {pipeline_mode = #tpu.pipeline_mode<synchronous>, transform_indices = @transform_11, window_bounds = array<i64: 8, 32>}, {pipeline_mode = #tpu.pipeline_mode<synchronous>, transform_indices = @transform_12, window_bounds = array<i64: 1, 32>}, {pipeline_mode = #tpu.pipeline_mode<synchronous>, transform_indices = @transform_13, window_bounds = array<i64: 32, 3>}, {pipeline_mode = #tpu.pipeline_mode<synchronous>, transform_indices = @transform_14, window_bounds = array<i64: 1, 3>}, {transform_indices = @transform_15, window_bounds = array<i64: 8, 3>}]} {
    %cst = arith.constant 0.000000e+00 : f32
    %0 = vector.broadcast %cst : f32 to vector<8x8x32xf32>
    %c0 = arith.constant 0 : index
    %c0_0 = arith.constant 0 : index
    %c0_1 = arith.constant 0 : index
    %1 = vector.load %arg17[%c0, %c0_0, %c0_1] : memref<8x24x32xf32, #tpu.memory_space<vmem>>, vector<8x8x32xf32>
    tpu.vector_store %arg17[%c0, %c0_0, %c0_1], %0 {strides = array<i32>} : memref<8x24x32xf32, #tpu.memory_space<vmem>>, vector<8x8x32xf32>,
    %c0_2 = arith.constant 0 : index
    %c0_3 = arith.constant 0 : index
    %c0_4 = arith.constant 0 : index
    %2 = vector.load %arg1[%c0_2, %c0_3, %c0_4] : memref<8x16x32xf32, #tpu.memory_space<vmem>>, vector<8x16x32xf32>
    %c0_5 = arith.constant 0 : index
    %c8 = arith.constant 8 : index
    %c0_6 = arith.constant 0 : index
    %3 = vector.load %arg17[%c0_5, %c8, %c0_6] : memref<8x24x32xf32, #tpu.memory_space<vmem>>, vector<8x16x32xf32>
    tpu.vector_store %arg17[%c0_5, %c8, %c0_6], %2 {strides = array<i32>} : memref<8x24x32xf32, #tpu.memory_space<vmem>>, vector<8x16x32xf32>,
    %c0_7 = arith.constant 0 : index
    %c8_8 = arith.constant 8 : index
    %c0_9 = arith.constant 0 : index
    %4 = vector.load %arg17[%c0_7, %c8_8, %c0_9] : memref<8x24x32xf32, #tpu.memory_space<vmem>>, vector<8x16x32xf32>
    %5 = vector.shape_cast %4 : vector<8x16x32xf32> to vector<128x32xf32>
    %c0_10 = arith.constant 0 : index
    %c6 = arith.constant 6 : index
    %c0_11 = arith.constant 0 : index
    %6 = vector.load %arg17[%c0_10, %c6, %c0_11] : memref<8x24x32xf32, #tpu.memory_space<vmem>>, vector<8x16x32xf32>
    %7 = vector.shape_cast %6 : vector<8x16x32xf32> to vector<128x32xf32>
    %c0_12 = arith.constant 0 : index
    %c0_13 = arith.constant 0 : index
    %c0_14 = arith.constant 0 : index
    %c0_15 = arith.constant 0 : index
    %8 = vector.load %arg3[%c0_12, %c0_13, %c0_14, %c0_15] : memref<3x3x32x32xf32, #tpu.memory_space<vmem>>, vector<1x1x32x32xf32>
    %9 = vector.shape_cast %8 : vector<1x1x32x32xf32> to vector<32x32xf32>
    %cst_16 = arith.constant dense<0.000000e+00> : vector<128x32xf32>
    %10 = tpu.matmul %7, %9, %cst_16 {dimension_numbers = #tpu.dot_dimension_numbers<[1], [0], [0], [1], [0, 0, 1, 1], [], []>} : vector<128x32xf32>, vector<32x32xf32>, vector<128x32xf32> -> vector<128x32xf32>
    %c0_17 = arith.constant 0 : index
    %c7 = arith.constant 7 : index
    %c0_18 = arith.constant 0 : index
    %11 = vector.load %arg17[%c0_17, %c7, %c0_18] : memref<8x24x32xf32, #tpu.memory_space<vmem>>, vector<8x16x32xf32>
    %12 = vector.shape_cast %11 : vector<8x16x32xf32> to vector<128x32xf32>
    %c0_19 = arith.constant 0 : index
    %c1 = arith.constant 1 : index
    %c0_20 = arith.constant 0 : index
    %c0_21 = arith.constant 0 : index
    %13 = vector.load %arg3[%c0_19, %c1, %c0_20, %c0_21] : memref<3x3x32x32xf32, #tpu.memory_space<vmem>>, vector<1x1x32x32xf32>
    %14 = vector.shape_cast %13 : vector<1x1x32x32xf32> to vector<32x32xf32>
    %cst_22 = arith.constant dense<0.000000e+00> : vector<128x32xf32>
    %15 = tpu.matmul %12, %14, %cst_22 {dimension_numbers = #tpu.dot_dimension_numbers<[1], [0], [0], [1], [0, 0, 1, 1], [], []>} : vector<128x32xf32>, vector<32x32xf32>, vector<128x32xf32> -> vector<128x32xf32>
    %16 = arith.addf %10, %15 : vector<128x32xf32>
    %c0_23 = arith.constant 0 : index
    %c8_24 = arith.constant 8 : index
    %c0_25 = arith.constant 0 : index
    %17 = vector.load %arg17[%c0_23, %c8_24, %c0_25] : memref<8x24x32xf32, #tpu.memory_space<vmem>>, vector<8x16x32xf32>
    %18 = vector.shape_cast %17 : vector<8x16x32xf32> to vector<128x32xf32>
    %c0_26 = arith.constant 0 : index
    %c2 = arith.constant 2 : index
    %c0_27 = arith.constant 0 : index
    %c0_28 = arith.constant 0 : index
    %19 = vector.load %arg3[%c0_26, %c2, %c0_27, %c0_28] : memref<3x3x32x32xf32, #tpu.memory_space<vmem>>, vector<1x1x32x32xf32>
    %20 = vector.shape_cast %19 : vector<1x1x32x32xf32> to vector<32x32xf32>
    %cst_29 = arith.constant dense<0.000000e+00> : vector<128x32xf32>
    %21 = tpu.matmul %18, %20, %cst_29 {dimension_numbers = #tpu.dot_dimension_numbers<[1], [0], [0], [1], [0, 0, 1, 1], [], []>} : vector<128x32xf32>, vector<32x32xf32>, vector<128x32xf32> -> vector<128x32xf32>
    %22 = arith.addf %16, %21 : vector<128x32xf32>
    %c0_30 = arith.constant 0 : index
    %c0_31 = arith.constant 0 : index
    %c0_32 = arith.constant 0 : index
    %23 = vector.load %arg4[%c0_30, %c0_31, %c0_32] : memref<3x1x32xf32, #tpu.memory_space<vmem>>, vector<1x1x32xf32>
    %24 = vector.shape_cast %23 : vector<1x1x32xf32> to vector<1x32xf32>
    %25 = vector.broadcast %24 : vector<1x32xf32> to vector<128x32xf32>
    %26 = arith.addf %22, %25 : vector<128x32xf32>
    %cst_33 = arith.constant 0.000000e+00 : f32
    %27 = vector.broadcast %cst_33 : f32 to vector<128x32xf32>
    %28 = arith.maximumf %26, %27 : vector<128x32xf32>
    %29 = vector.shape_cast %28 : vector<128x32xf32> to vector<8x16x32xf32>
    %c0_34 = arith.constant 0 : index
    %c8_35 = arith.constant 8 : index
    %c0_36 = arith.constant 0 : index
    %30 = vector.load %arg17[%c0_34, %c8_35, %c0_36] : memref<8x24x32xf32, #tpu.memory_space<vmem>>, vector<8x16x32xf32>
    tpu.vector_store %arg17[%c0_34, %c8_35, %c0_36], %29 {strides = array<i32>} : memref<8x24x32xf32, #tpu.memory_space<vmem>>, vector<8x16x32xf32>,
    %c0_37 = arith.constant 0 : index
    %c6_38 = arith.constant 6 : index
    %c0_39 = arith.constant 0 : index
    %31 = vector.load %arg17[%c0_37, %c6_38, %c0_39] : memref<8x24x32xf32, #tpu.memory_space<vmem>>, vector<8x16x32xf32>
    %32 = vector.shape_cast %31 : vector<8x16x32xf32> to vector<128x32xf32>
    %c0_40 = arith.constant 0 : index
    %c0_41 = arith.constant 0 : index
    %c0_42 = arith.constant 0 : index
    %c0_43 = arith.constant 0 : index
    %33 = vector.load %arg5[%c0_40, %c0_41, %c0_42, %c0_43] : memref<3x3x32x32xf32, #tpu.memory_space<vmem>>, vector<1x1x32x32xf32>
    %34 = vector.shape_cast %33 : vector<1x1x32x32xf32> to vector<32x32xf32>
    %cst_44 = arith.constant dense<0.000000e+00> : vector<128x32xf32>
    %35 = tpu.matmul %32, %34, %cst_44 {dimension_numbers = #tpu.dot_dimension_numbers<[1], [0], [0], [1], [0, 0, 1, 1], [], []>} : vector<128x32xf32>, vector<32x32xf32>, vector<128x32xf32> -> vector<128x32xf32>
    %c0_45 = arith.constant 0 : index
    %c7_46 = arith.constant 7 : index
    %c0_47 = arith.constant 0 : index
    %36 = vector.load %arg17[%c0_45, %c7_46, %c0_47] : memref<8x24x32xf32, #tpu.memory_space<vmem>>, vector<8x16x32xf32>
    %37 = vector.shape_cast %36 : vector<8x16x32xf32> to vector<128x32xf32>
    %c0_48 = arith.constant 0 : index
    %c1_49 = arith.constant 1 : index
    %c0_50 = arith.constant 0 : index
    %c0_51 = arith.constant 0 : index
    %38 = vector.load %arg5[%c0_48, %c1_49, %c0_50, %c0_51] : memref<3x3x32x32xf32, #tpu.memory_space<vmem>>, vector<1x1x32x32xf32>
    %39 = vector.shape_cast %38 : vector<1x1x32x32xf32> to vector<32x32xf32>
    %cst_52 = arith.constant dense<0.000000e+00> : vector<128x32xf32>
    %40 = tpu.matmul %37, %39, %cst_52 {dimension_numbers = #tpu.dot_dimension_numbers<[1], [0], [0], [1], [0, 0, 1, 1], [], []>} : vector<128x32xf32>, vector<32x32xf32>, vector<128x32xf32> -> vector<128x32xf32>
    %41 = arith.addf %35, %40 : vector<128x32xf32>
    %c0_53 = arith.constant 0 : index
    %c8_54 = arith.constant 8 : index
    %c0_55 = arith.constant 0 : index
    %42 = vector.load %arg17[%c0_53, %c8_54, %c0_55] : memref<8x24x32xf32, #tpu.memory_space<vmem>>, vector<8x16x32xf32>
    %43 = vector.shape_cast %42 : vector<8x16x32xf32> to vector<128x32xf32>
    %c0_56 = arith.constant 0 : index
    %c2_57 = arith.constant 2 : index
    %c0_58 = arith.constant 0 : index
    %c0_59 = arith.constant 0 : index
    %44 = vector.load %arg5[%c0_56, %c2_57, %c0_58, %c0_59] : memref<3x3x32x32xf32, #tpu.memory_space<vmem>>, vector<1x1x32x32xf32>
    %45 = vector.shape_cast %44 : vector<1x1x32x32xf32> to vector<32x32xf32>
    %cst_60 = arith.constant dense<0.000000e+00> : vector<128x32xf32>
    %46 = tpu.matmul %43, %45, %cst_60 {dimension_numbers = #tpu.dot_dimension_numbers<[1], [0], [0], [1], [0, 0, 1, 1], [], []>} : vector<128x32xf32>, vector<32x32xf32>, vector<128x32xf32> -> vector<128x32xf32>
    %47 = arith.addf %41, %46 : vector<128x32xf32>
    %c0_61 = arith.constant 0 : index
    %c0_62 = arith.constant 0 : index
    %c0_63 = arith.constant 0 : index
    %48 = vector.load %arg6[%c0_61, %c0_62, %c0_63] : memref<3x1x32xf32, #tpu.memory_space<vmem>>, vector<1x1x32xf32>
    %49 = vector.shape_cast %48 : vector<1x1x32xf32> to vector<1x32xf32>
    %50 = vector.broadcast %49 : vector<1x32xf32> to vector<128x32xf32>
    %51 = arith.addf %47, %50 : vector<128x32xf32>
    %cst_64 = arith.constant 0.000000e+00 : f32
    %52 = vector.broadcast %cst_64 : f32 to vector<128x32xf32>
    %53 = arith.maximumf %51, %52 : vector<128x32xf32>
    %c0_65 = arith.constant 0 : index
    %c0_66 = arith.constant 0 : index
    %c0_67 = arith.constant 0 : index
    %54 = vector.load %arg7[%c0_65, %c0_66, %c0_67] : memref<3x32x32xf32, #tpu.memory_space<vmem>>, vector<1x32x32xf32>
    %55 = vector.shape_cast %54 : vector<1x32x32xf32> to vector<32x32xf32>
    %cst_68 = arith.constant dense<0.000000e+00> : vector<128x32xf32>
    %56 = tpu.matmul %5, %55, %cst_68 {dimension_numbers = #tpu.dot_dimension_numbers<[1], [0], [0], [1], [0, 0, 1, 1], [], []>} : vector<128x32xf32>, vector<32x32xf32>, vector<128x32xf32> -> vector<128x32xf32>
    %c0_69 = arith.constant 0 : index
    %c0_70 = arith.constant 0 : index
    %c0_71 = arith.constant 0 : index
    %57 = vector.load %arg8[%c0_69, %c0_70, %c0_71] : memref<3x1x32xf32, #tpu.memory_space<vmem>>, vector<1x1x32xf32>
    %58 = vector.shape_cast %57 : vector<1x1x32xf32> to vector<1x32xf32>
    %59 = vector.broadcast %58 : vector<1x32xf32> to vector<128x32xf32>
    %60 = arith.addf %56, %59 : vector<128x32xf32>
    %61 = arith.addf %53, %60 : vector<128x32xf32>
    %cst_72 = arith.constant 0.000000e+00 : f32
    %62 = vector.broadcast %cst_72 : f32 to vector<128x32xf32>
    %63 = arith.maximumf %61, %62 : vector<128x32xf32>
    %64 = vector.shape_cast %63 : vector<128x32xf32> to vector<8x16x32xf32>
    %c0_73 = arith.constant 0 : index
    %c8_74 = arith.constant 8 : index
    %c0_75 = arith.constant 0 : index
    %65 = vector.load %arg17[%c0_73, %c8_74, %c0_75] : memref<8x24x32xf32, #tpu.memory_space<vmem>>, vector<8x16x32xf32>
    tpu.vector_store %arg17[%c0_73, %c8_74, %c0_75], %64 {strides = array<i32>} : memref<8x24x32xf32, #tpu.memory_space<vmem>>, vector<8x16x32xf32>,
    %c0_76 = arith.constant 0 : index
    %c8_77 = arith.constant 8 : index
    %c0_78 = arith.constant 0 : index
    %66 = vector.load %arg17[%c0_76, %c8_77, %c0_78] : memref<8x24x32xf32, #tpu.memory_space<vmem>>, vector<8x16x32xf32>
    %67 = vector.shape_cast %66 : vector<8x16x32xf32> to vector<128x32xf32>
    %c0_79 = arith.constant 0 : index
    %c4 = arith.constant 4 : index
    %c0_80 = arith.constant 0 : index
    %68 = vector.load %arg17[%c0_79, %c4, %c0_80] : memref<8x24x32xf32, #tpu.memory_space<vmem>>, vector<8x16x32xf32>
    %69 = vector.shape_cast %68 : vector<8x16x32xf32> to vector<128x32xf32>
    %c1_81 = arith.constant 1 : index
    %c0_82 = arith.constant 0 : index
    %c0_83 = arith.constant 0 : index
    %c0_84 = arith.constant 0 : index
    %70 = vector.load %arg3[%c1_81, %c0_82, %c0_83, %c0_84] : memref<3x3x32x32xf32, #tpu.memory_space<vmem>>, vector<1x1x32x32xf32>
    %71 = vector.shape_cast %70 : vector<1x1x32x32xf32> to vector<32x32xf32>
    %cst_85 = arith.constant dense<0.000000e+00> : vector<128x32xf32>
    %72 = tpu.matmul %69, %71, %cst_85 {dimension_numbers = #tpu.dot_dimension_numbers<[1], [0], [0], [1], [0, 0, 1, 1], [], []>} : vector<128x32xf32>, vector<32x32xf32>, vector<128x32xf32> -> vector<128x32xf32>
    %c0_86 = arith.constant 0 : index
    %c6_87 = arith.constant 6 : index
    %c0_88 = arith.constant 0 : index
    %73 = vector.load %arg17[%c0_86, %c6_87, %c0_88] : memref<8x24x32xf32, #tpu.memory_space<vmem>>, vector<8x16x32xf32>
    %74 = vector.shape_cast %73 : vector<8x16x32xf32> to vector<128x32xf32>
    %c1_89 = arith.constant 1 : index
    %c1_90 = arith.constant 1 : index
    %c0_91 = arith.constant 0 : index
    %c0_92 = arith.constant 0 : index
    %75 = vector.load %arg3[%c1_89, %c1_90, %c0_91, %c0_92] : memref<3x3x32x32xf32, #tpu.memory_space<vmem>>, vector<1x1x32x32xf32>
    %76 = vector.shape_cast %75 : vector<1x1x32x32xf32> to vector<32x32xf32>
    %cst_93 = arith.constant dense<0.000000e+00> : vector<128x32xf32>
    %77 = tpu.matmul %74, %76, %cst_93 {dimension_numbers = #tpu.dot_dimension_numbers<[1], [0], [0], [1], [0, 0, 1, 1], [], []>} : vector<128x32xf32>, vector<32x32xf32>, vector<128x32xf32> -> vector<128x32xf32>
    %78 = arith.addf %72, %77 : vector<128x32xf32>
    %c0_94 = arith.constant 0 : index
    %c8_95 = arith.constant 8 : index
    %c0_96 = arith.constant 0 : index
    %79 = vector.load %arg17[%c0_94, %c8_95, %c0_96] : memref<8x24x32xf32, #tpu.memory_space<vmem>>, vector<8x16x32xf32>
    %80 = vector.shape_cast %79 : vector<8x16x32xf32> to vector<128x32xf32>
    %c1_97 = arith.constant 1 : index
    %c2_98 = arith.constant 2 : index
    %c0_99 = arith.constant 0 : index
    %c0_100 = arith.constant 0 : index
    %81 = vector.load %arg3[%c1_97, %c2_98, %c0_99, %c0_100] : memref<3x3x32x32xf32, #tpu.memory_space<vmem>>, vector<1x1x32x32xf32>
    %82 = vector.shape_cast %81 : vector<1x1x32x32xf32> to vector<32x32xf32>
    %cst_101 = arith.constant dense<0.000000e+00> : vector<128x32xf32>
    %83 = tpu.matmul %80, %82, %cst_101 {dimension_numbers = #tpu.dot_dimension_numbers<[1], [0], [0], [1], [0, 0, 1, 1], [], []>} : vector<128x32xf32>, vector<32x32xf32>, vector<128x32xf32> -> vector<128x32xf32>
    %84 = arith.addf %78, %83 : vector<128x32xf32>
    %c1_102 = arith.constant 1 : index
    %c0_103 = arith.constant 0 : index
    %c0_104 = arith.constant 0 : index
    %85 = vector.load %arg4[%c1_102, %c0_103, %c0_104] : memref<3x1x32xf32, #tpu.memory_space<vmem>>, vector<1x1x32xf32>
    %86 = vector.shape_cast %85 : vector<1x1x32xf32> to vector<1x32xf32>
    %87 = vector.broadcast %86 : vector<1x32xf32> to vector<128x32xf32>
    %88 = arith.addf %84, %87 : vector<128x32xf32>
    %cst_105 = arith.constant 0.000000e+00 : f32
    %89 = vector.broadcast %cst_105 : f32 to vector<128x32xf32>
    %90 = arith.maximumf %88, %89 : vector<128x32xf32>
    %91 = vector.shape_cast %90 : vector<128x32xf32> to vector<8x16x32xf32>
    %c0_106 = arith.constant 0 : index
    %c8_107 = arith.constant 8 : index
    %c0_108 = arith.constant 0 : index
    %92 = vector.load %arg17[%c0_106, %c8_107, %c0_108] : memref<8x24x32xf32, #tpu.memory_space<vmem>>, vector<8x16x32xf32>
    tpu.vector_store %arg17[%c0_106, %c8_107, %c0_108], %91 {strides = array<i32>} : memref<8x24x32xf32, #tpu.memory_space<vmem>>, vector<8x16x32xf32>,
    %c0_109 = arith.constant 0 : index
    %c4_110 = arith.constant 4 : index
    %c0_111 = arith.constant 0 : index
    %93 = vector.load %arg17[%c0_109, %c4_110, %c0_111] : memref<8x24x32xf32, #tpu.memory_space<vmem>>, vector<8x16x32xf32>
    %94 = vector.shape_cast %93 : vector<8x16x32xf32> to vector<128x32xf32>
    %c1_112 = arith.constant 1 : index
    %c0_113 = arith.constant 0 : index
    %c0_114 = arith.constant 0 : index
    %c0_115 = arith.constant 0 : index
    %95 = vector.load %arg5[%c1_112, %c0_113, %c0_114, %c0_115] : memref<3x3x32x32xf32, #tpu.memory_space<vmem>>, vector<1x1x32x32xf32>
    %96 = vector.shape_cast %95 : vector<1x1x32x32xf32> to vector<32x32xf32>
    %cst_116 = arith.constant dense<0.000000e+00> : vector<128x32xf32>
    %97 = tpu.matmul %94, %96, %cst_116 {dimension_numbers = #tpu.dot_dimension_numbers<[1], [0], [0], [1], [0, 0, 1, 1], [], []>} : vector<128x32xf32>, vector<32x32xf32>, vector<128x32xf32> -> vector<128x32xf32>
    %c0_117 = arith.constant 0 : index
    %c6_118 = arith.constant 6 : index
    %c0_119 = arith.constant 0 : index
    %98 = vector.load %arg17[%c0_117, %c6_118, %c0_119] : memref<8x24x32xf32, #tpu.memory_space<vmem>>, vector<8x16x32xf32>
    %99 = vector.shape_cast %98 : vector<8x16x32xf32> to vector<128x32xf32>
    %c1_120 = arith.constant 1 : index
    %c1_121 = arith.constant 1 : index
    %c0_122 = arith.constant 0 : index
    %c0_123 = arith.constant 0 : index
    %100 = vector.load %arg5[%c1_120, %c1_121, %c0_122, %c0_123] : memref<3x3x32x32xf32, #tpu.memory_space<vmem>>, vector<1x1x32x32xf32>
    %101 = vector.shape_cast %100 : vector<1x1x32x32xf32> to vector<32x32xf32>
    %cst_124 = arith.constant dense<0.000000e+00> : vector<128x32xf32>
    %102 = tpu.matmul %99, %101, %cst_124 {dimension_numbers = #tpu.dot_dimension_numbers<[1], [0], [0], [1], [0, 0, 1, 1], [], []>} : vector<128x32xf32>, vector<32x32xf32>, vector<128x32xf32> -> vector<128x32xf32>
    %103 = arith.addf %97, %102 : vector<128x32xf32>
    %c0_125 = arith.constant 0 : index
    %c8_126 = arith.constant 8 : index
    %c0_127 = arith.constant 0 : index
    %104 = vector.load %arg17[%c0_125, %c8_126, %c0_127] : memref<8x24x32xf32, #tpu.memory_space<vmem>>, vector<8x16x32xf32>
    %105 = vector.shape_cast %104 : vector<8x16x32xf32> to vector<128x32xf32>
    %c1_128 = arith.constant 1 : index
    %c2_129 = arith.constant 2 : index
    %c0_130 = arith.constant 0 : index
    %c0_131 = arith.constant 0 : index
    %106 = vector.load %arg5[%c1_128, %c2_129, %c0_130, %c0_131] : memref<3x3x32x32xf32, #tpu.memory_space<vmem>>, vector<1x1x32x32xf32>
    %107 = vector.shape_cast %106 : vector<1x1x32x32xf32> to vector<32x32xf32>
    %cst_132 = arith.constant dense<0.000000e+00> : vector<128x32xf32>
    %108 = tpu.matmul %105, %107, %cst_132 {dimension_numbers = #tpu.dot_dimension_numbers<[1], [0], [0], [1], [0, 0, 1, 1], [], []>} : vector<128x32xf32>, vector<32x32xf32>, vector<128x32xf32> -> vector<128x32xf32>
    %109 = arith.addf %103, %108 : vector<128x32xf32>
    %c1_133 = arith.constant 1 : index
    %c0_134 = arith.constant 0 : index
    %c0_135 = arith.constant 0 : index
    %110 = vector.load %arg6[%c1_133, %c0_134, %c0_135] : memref<3x1x32xf32, #tpu.memory_space<vmem>>, vector<1x1x32xf32>
    %111 = vector.shape_cast %110 : vector<1x1x32xf32> to vector<1x32xf32>
    %112 = vector.broadcast %111 : vector<1x32xf32> to vector<128x32xf32>
    %113 = arith.addf %109, %112 : vector<128x32xf32>
    %cst_136 = arith.constant 0.000000e+00 : f32
    %114 = vector.broadcast %cst_136 : f32 to vector<128x32xf32>
    %115 = arith.maximumf %113, %114 : vector<128x32xf32>
    %116 = arith.addf %115, %67 : vector<128x32xf32>
    %cst_137 = arith.constant 0.000000e+00 : f32
    %117 = vector.broadcast %cst_137 : f32 to vector<128x32xf32>
    %118 = arith.maximumf %116, %117 : vector<128x32xf32>
    %119 = vector.shape_cast %118 : vector<128x32xf32> to vector<8x16x32xf32>
    %c0_138 = arith.constant 0 : index
    %c8_139 = arith.constant 8 : index
    %c0_140 = arith.constant 0 : index
    %120 = vector.load %arg17[%c0_138, %c8_139, %c0_140] : memref<8x24x32xf32, #tpu.memory_space<vmem>>, vector<8x16x32xf32>
    tpu.vector_store %arg17[%c0_138, %c8_139, %c0_140], %119 {strides = array<i32>} : memref<8x24x32xf32, #tpu.memory_space<vmem>>, vector<8x16x32xf32>,
    %c0_141 = arith.constant 0 : index
    %c8_142 = arith.constant 8 : index
    %c0_143 = arith.constant 0 : index
    %121 = vector.load %arg17[%c0_141, %c8_142, %c0_143] : memref<8x24x32xf32, #tpu.memory_space<vmem>>, vector<8x16x32xf32>
    %122 = vector.shape_cast %121 : vector<8x16x32xf32> to vector<128x32xf32>
    %c0_144 = arith.constant 0 : index
    %c0_145 = arith.constant 0 : index
    %c0_146 = arith.constant 0 : index
    %123 = vector.load %arg17[%c0_144, %c0_145, %c0_146] : memref<8x24x32xf32, #tpu.memory_space<vmem>>, vector<8x16x32xf32>
    %124 = vector.shape_cast %123 : vector<8x16x32xf32> to vector<128x32xf32>
    %c2_147 = arith.constant 2 : index
    %c0_148 = arith.constant 0 : index
    %c0_149 = arith.constant 0 : index
    %c0_150 = arith.constant 0 : index
    %125 = vector.load %arg3[%c2_147, %c0_148, %c0_149, %c0_150] : memref<3x3x32x32xf32, #tpu.memory_space<vmem>>, vector<1x1x32x32xf32>
    %126 = vector.shape_cast %125 : vector<1x1x32x32xf32> to vector<32x32xf32>
    %cst_151 = arith.constant dense<0.000000e+00> : vector<128x32xf32>
    %127 = tpu.matmul %124, %126, %cst_151 {dimension_numbers = #tpu.dot_dimension_numbers<[1], [0], [0], [1], [0, 0, 1, 1], [], []>} : vector<128x32xf32>, vector<32x32xf32>, vector<128x32xf32> -> vector<128x32xf32>
    %c0_152 = arith.constant 0 : index
    %c4_153 = arith.constant 4 : index
    %c0_154 = arith.constant 0 : index
    %128 = vector.load %arg17[%c0_152, %c4_153, %c0_154] : memref<8x24x32xf32, #tpu.memory_space<vmem>>, vector<8x16x32xf32>
    %129 = vector.shape_cast %128 : vector<8x16x32xf32> to vector<128x32xf32>
    %c2_155 = arith.constant 2 : index
    %c1_156 = arith.constant 1 : index
    %c0_157 = arith.constant 0 : index
    %c0_158 = arith.constant 0 : index
    %130 = vector.load %arg3[%c2_155, %c1_156, %c0_157, %c0_158] : memref<3x3x32x32xf32, #tpu.memory_space<vmem>>, vector<1x1x32x32xf32>
    %131 = vector.shape_cast %130 : vector<1x1x32x32xf32> to vector<32x32xf32>
    %cst_159 = arith.constant dense<0.000000e+00> : vector<128x32xf32>
    %132 = tpu.matmul %129, %131, %cst_159 {dimension_numbers = #tpu.dot_dimension_numbers<[1], [0], [0], [1], [0, 0, 1, 1], [], []>} : vector<128x32xf32>, vector<32x32xf32>, vector<128x32xf32> -> vector<128x32xf32>
    %133 = arith.addf %127, %132 : vector<128x32xf32>
    %c0_160 = arith.constant 0 : index
    %c8_161 = arith.constant 8 : index
    %c0_162 = arith.constant 0 : index
    %134 = vector.load %arg17[%c0_160, %c8_161, %c0_162] : memref<8x24x32xf32, #tpu.memory_space<vmem>>, vector<8x16x32xf32>
    %135 = vector.shape_cast %134 : vector<8x16x32xf32> to vector<128x32xf32>
    %c2_163 = arith.constant 2 : index
    %c2_164 = arith.constant 2 : index
    %c0_165 = arith.constant 0 : index
    %c0_166 = arith.constant 0 : index
    %136 = vector.load %arg3[%c2_163, %c2_164, %c0_165, %c0_166] : memref<3x3x32x32xf32, #tpu.memory_space<vmem>>, vector<1x1x32x32xf32>
    %137 = vector.shape_cast %136 : vector<1x1x32x32xf32> to vector<32x32xf32>
    %cst_167 = arith.constant dense<0.000000e+00> : vector<128x32xf32>
    %138 = tpu.matmul %135, %137, %cst_167 {dimension_numbers = #tpu.dot_dimension_numbers<[1], [0], [0], [1], [0, 0, 1, 1], [], []>} : vector<128x32xf32>, vector<32x32xf32>, vector<128x32xf32> -> vector<128x32xf32>
    %139 = arith.addf %133, %138 : vector<128x32xf32>
    %c2_168 = arith.constant 2 : index
    %c0_169 = arith.constant 0 : index
    %c0_170 = arith.constant 0 : index
    %140 = vector.load %arg4[%c2_168, %c0_169, %c0_170] : memref<3x1x32xf32, #tpu.memory_space<vmem>>, vector<1x1x32xf32>
    %141 = vector.shape_cast %140 : vector<1x1x32xf32> to vector<1x32xf32>
    %142 = vector.broadcast %141 : vector<1x32xf32> to vector<128x32xf32>
    %143 = arith.addf %139, %142 : vector<128x32xf32>
    %cst_171 = arith.constant 0.000000e+00 : f32
    %144 = vector.broadcast %cst_171 : f32 to vector<128x32xf32>
    %145 = arith.maximumf %143, %144 : vector<128x32xf32>
    %146 = vector.shape_cast %145 : vector<128x32xf32> to vector<8x16x32xf32>
    %c0_172 = arith.constant 0 : index
    %c8_173 = arith.constant 8 : index
    %c0_174 = arith.constant 0 : index
    %147 = vector.load %arg17[%c0_172, %c8_173, %c0_174] : memref<8x24x32xf32, #tpu.memory_space<vmem>>, vector<8x16x32xf32>
    tpu.vector_store %arg17[%c0_172, %c8_173, %c0_174], %146 {strides = array<i32>} : memref<8x24x32xf32, #tpu.memory_space<vmem>>, vector<8x16x32xf32>,
    %c0_175 = arith.constant 0 : index
    %c0_176 = arith.constant 0 : index
    %c0_177 = arith.constant 0 : index
    %148 = vector.load %arg17[%c0_175, %c0_176, %c0_177] : memref<8x24x32xf32, #tpu.memory_space<vmem>>, vector<8x16x32xf32>
    %149 = vector.shape_cast %148 : vector<8x16x32xf32> to vector<128x32xf32>
    %c2_178 = arith.constant 2 : index
    %c0_179 = arith.constant 0 : index
    %c0_180 = arith.constant 0 : index
    %c0_181 = arith.constant 0 : index
    %150 = vector.load %arg5[%c2_178, %c0_179, %c0_180, %c0_181] : memref<3x3x32x32xf32, #tpu.memory_space<vmem>>, vector<1x1x32x32xf32>
    %151 = vector.shape_cast %150 : vector<1x1x32x32xf32> to vector<32x32xf32>
    %cst_182 = arith.constant dense<0.000000e+00> : vector<128x32xf32>
    %152 = tpu.matmul %149, %151, %cst_182 {dimension_numbers = #tpu.dot_dimension_numbers<[1], [0], [0], [1], [0, 0, 1, 1], [], []>} : vector<128x32xf32>, vector<32x32xf32>, vector<128x32xf32> -> vector<128x32xf32>
    %c0_183 = arith.constant 0 : index
    %c4_184 = arith.constant 4 : index
    %c0_185 = arith.constant 0 : index
    %153 = vector.load %arg17[%c0_183, %c4_184, %c0_185] : memref<8x24x32xf32, #tpu.memory_space<vmem>>, vector<8x16x32xf32>
    %154 = vector.shape_cast %153 : vector<8x16x32xf32> to vector<128x32xf32>
    %c2_186 = arith.constant 2 : index
    %c1_187 = arith.constant 1 : index
    %c0_188 = arith.constant 0 : index
    %c0_189 = arith.constant 0 : index
    %155 = vector.load %arg5[%c2_186, %c1_187, %c0_188, %c0_189] : memref<3x3x32x32xf32, #tpu.memory_space<vmem>>, vector<1x1x32x32xf32>
    %156 = vector.shape_cast %155 : vector<1x1x32x32xf32> to vector<32x32xf32>
    %cst_190 = arith.constant dense<0.000000e+00> : vector<128x32xf32>
    %157 = tpu.matmul %154, %156, %cst_190 {dimension_numbers = #tpu.dot_dimension_numbers<[1], [0], [0], [1], [0, 0, 1, 1], [], []>} : vector<128x32xf32>, vector<32x32xf32>, vector<128x32xf32> -> vector<128x32xf32>
    %158 = arith.addf %152, %157 : vector<128x32xf32>
    %c0_191 = arith.constant 0 : index
    %c8_192 = arith.constant 8 : index
    %c0_193 = arith.constant 0 : index
    %159 = vector.load %arg17[%c0_191, %c8_192, %c0_193] : memref<8x24x32xf32, #tpu.memory_space<vmem>>, vector<8x16x32xf32>
    %160 = vector.shape_cast %159 : vector<8x16x32xf32> to vector<128x32xf32>
    %c2_194 = arith.constant 2 : index
    %c2_195 = arith.constant 2 : index
    %c0_196 = arith.constant 0 : index
    %c0_197 = arith.constant 0 : index
    %161 = vector.load %arg5[%c2_194, %c2_195, %c0_196, %c0_197] : memref<3x3x32x32xf32, #tpu.memory_space<vmem>>, vector<1x1x32x32xf32>
    %162 = vector.shape_cast %161 : vector<1x1x32x32xf32> to vector<32x32xf32>
    %cst_198 = arith.constant dense<0.000000e+00> : vector<128x32xf32>
    %163 = tpu.matmul %160, %162, %cst_198 {dimension_numbers = #tpu.dot_dimension_numbers<[1], [0], [0], [1], [0, 0, 1, 1], [], []>} : vector<128x32xf32>, vector<32x32xf32>, vector<128x32xf32> -> vector<128x32xf32>
    %164 = arith.addf %158, %163 : vector<128x32xf32>
    %c2_199 = arith.constant 2 : index
    %c0_200 = arith.constant 0 : index
    %c0_201 = arith.constant 0 : index
    %165 = vector.load %arg6[%c2_199, %c0_200, %c0_201] : memref<3x1x32xf32, #tpu.memory_space<vmem>>, vector<1x1x32xf32>
    %166 = vector.shape_cast %165 : vector<1x1x32xf32> to vector<1x32xf32>
    %167 = vector.broadcast %166 : vector<1x32xf32> to vector<128x32xf32>
    %168 = arith.addf %164, %167 : vector<128x32xf32>
    %cst_202 = arith.constant 0.000000e+00 : f32
    %169 = vector.broadcast %cst_202 : f32 to vector<128x32xf32>
    %170 = arith.maximumf %168, %169 : vector<128x32xf32>
    %171 = arith.addf %170, %122 : vector<128x32xf32>
    %cst_203 = arith.constant 0.000000e+00 : f32
    %172 = vector.broadcast %cst_203 : f32 to vector<128x32xf32>
    %173 = arith.maximumf %171, %172 : vector<128x32xf32>
    %174 = vector.shape_cast %173 : vector<128x32xf32> to vector<8x16x32xf32>
    %c0_204 = arith.constant 0 : index
    %c8_205 = arith.constant 8 : index
    %c0_206 = arith.constant 0 : index
    %175 = vector.load %arg17[%c0_204, %c8_205, %c0_206] : memref<8x24x32xf32, #tpu.memory_space<vmem>>, vector<8x16x32xf32>
    tpu.vector_store %arg17[%c0_204, %c8_205, %c0_206], %174 {strides = array<i32>} : memref<8x24x32xf32, #tpu.memory_space<vmem>>, vector<8x16x32xf32>,
    %c0_207 = arith.constant 0 : index
    %c8_208 = arith.constant 8 : index
    %c0_209 = arith.constant 0 : index
    %176 = vector.load %arg17[%c0_207, %c8_208, %c0_209] : memref<8x24x32xf32, #tpu.memory_space<vmem>>, vector<8x16x32xf32>
    %cst_210 = arith.constant dense<0.000000e+00> : vector<8x32xf32>
    %177 = vector.multi_reduction <add>, %176, %cst_210 [1] : vector<8x16x32xf32> to vector<8x32xf32>
    %cst_211 = arith.constant 6.250000e-02 : f32
    %178 = vector.broadcast %cst_211 : f32 to vector<8x32xf32>
    %179 = arith.mulf %177, %178 : vector<8x32xf32>
    %c0_212 = arith.constant 0 : index
    %c0_213 = arith.constant 0 : index
    %180 = vector.load %arg2[%c0_212, %c0_213] : memref<8x4xf32, #tpu.memory_space<vmem>>, vector<8x4xf32>
    %c0_214 = arith.constant 0 : index
    %c0_215 = arith.constant 0 : index
    %181 = vector.load %arg9[%c0_214, %c0_215] : memref<4x8xf32, #tpu.memory_space<vmem>>, vector<4x8xf32>
    %cst_216 = arith.constant dense<0.000000e+00> : vector<8x8xf32>
    %182 = tpu.matmul %180, %181, %cst_216 {dimension_numbers = #tpu.dot_dimension_numbers<[1], [0], [0], [1], [0, 0, 1, 1], [], []>} : vector<8x4xf32>, vector<4x8xf32>, vector<8x8xf32> -> vector<8x8xf32>
    %c0_217 = arith.constant 0 : index
    %c0_218 = arith.constant 0 : index
    %183 = vector.load %arg10[%c0_217, %c0_218] : memref<1x8xf32, #tpu.memory_space<vmem>>, vector<1x8xf32>
    %184 = vector.broadcast %183 : vector<1x8xf32> to vector<8x8xf32>
    %185 = arith.addf %182, %184 : vector<8x8xf32>
    %c0_219 = arith.constant 0 : index
    %c0_220 = arith.constant 0 : index
    %186 = vector.load %arg11[%c0_219, %c0_220] : memref<32x32xf32, #tpu.memory_space<vmem>>, vector<32x32xf32>
    %cst_221 = arith.constant dense<0.000000e+00> : vector<8x32xf32>
    %187 = tpu.matmul %179, %186, %cst_221 {dimension_numbers = #tpu.dot_dimension_numbers<[1], [0], [0], [1], [0, 0, 1, 1], [], []>} : vector<8x32xf32>, vector<32x32xf32>, vector<8x32xf32> -> vector<8x32xf32>
    %c0_222 = arith.constant 0 : index
    %c0_223 = arith.constant 0 : index
    %188 = vector.load %arg12[%c0_222, %c0_223] : memref<8x32xf32, #tpu.memory_space<vmem>>, vector<8x32xf32>
    %cst_224 = arith.constant dense<0.000000e+00> : vector<8x32xf32>
    %189 = tpu.matmul %185, %188, %cst_224 {dimension_numbers = #tpu.dot_dimension_numbers<[1], [0], [0], [1], [0, 0, 1, 1], [], []>} : vector<8x8xf32>, vector<8x32xf32>, vector<8x32xf32> -> vector<8x32xf32>
    %190 = arith.addf %187, %189 : vector<8x32xf32>
    %c0_225 = arith.constant 0 : index
    %c0_226 = arith.constant 0 : index
    %191 = vector.load %arg13[%c0_225, %c0_226] : memref<1x32xf32, #tpu.memory_space<vmem>>, vector<1x32xf32>
    %192 = vector.broadcast %191 : vector<1x32xf32> to vector<8x32xf32>
    %193 = arith.addf %190, %192 : vector<8x32xf32>
    %cst_227 = arith.constant 0.000000e+00 : f32
    %194 = vector.broadcast %cst_227 : f32 to vector<8x32xf32>
    %195 = arith.cmpf ogt, %193, %194 : vector<8x32xf32>
    %cst_228 = arith.constant 0.00999999977 : f32
    %196 = vector.broadcast %cst_228 : f32 to vector<8x32xf32>
    %197 = arith.mulf %196, %193 : vector<8x32xf32>
    %198 = arith.select %195, %193, %197 : vector<8x32xi1>, vector<8x32xf32>
    %c0_229 = arith.constant 0 : index
    %c0_230 = arith.constant 0 : index
    %199 = vector.load %arg14[%c0_229, %c0_230] : memref<32x3xf32, #tpu.memory_space<vmem>>, vector<32x3xf32>
    %cst_231 = arith.constant dense<0.000000e+00> : vector<8x3xf32>
    %200 = tpu.matmul %198, %199, %cst_231 {dimension_numbers = #tpu.dot_dimension_numbers<[1], [0], [0], [1], [0, 0, 1, 1], [], []>} : vector<8x32xf32>, vector<32x3xf32>, vector<8x3xf32> -> vector<8x3xf32>
    %c0_232 = arith.constant 0 : index
    %c0_233 = arith.constant 0 : index
    %201 = vector.load %arg15[%c0_232, %c0_233] : memref<1x3xf32, #tpu.memory_space<vmem>>, vector<1x3xf32>
    %202 = vector.broadcast %201 : vector<1x3xf32> to vector<8x3xf32>
    %203 = arith.addf %200, %202 : vector<8x3xf32>
    %c0_234 = arith.constant 0 : index
    %c0_235 = arith.constant 0 : index
    %204 = vector.load %arg16[%c0_234, %c0_235] : memref<8x3xf32, #tpu.memory_space<vmem>>, vector<8x3xf32>
    tpu.vector_store %arg16[%c0_234, %c0_235], %203 {strides = array<i32>} : memref<8x3xf32, #tpu.memory_space<vmem>>, vector<8x3xf32>,
    return
  }
  func.func @transform_0(%arg0: i32) -> (i32, i32, i32) {
    %c0_i32 = arith.constant 0 : i32
    %c0_i32_0 = arith.constant 0 : i32
    %c0_i32_1 = arith.constant 0 : i32
    return %arg0, %c0_i32, %c0_i32_0 : i32, i32, i32
  }
  func.func @transform_1(%arg0: i32) -> (i32, i32) {
    %c0_i32 = arith.constant 0 : i32
    %c0_i32_0 = arith.constant 0 : i32
    return %arg0, %c0_i32 : i32, i32
  }
  func.func @transform_2(%arg0: i32) -> (i32, i32, i32, i32) {
    %c0_i32 = arith.constant 0 : i32
    %c0_i32_0 = arith.constant 0 : i32
    %c0_i32_1 = arith.constant 0 : i32
    %c0_i32_2 = arith.constant 0 : i32
    %c0_i32_3 = arith.constant 0 : i32
    return %c0_i32, %c0_i32_0, %c0_i32_1, %c0_i32_2 : i32, i32, i32, i32
  }
  func.func @transform_3(%arg0: i32) -> (i32, i32, i32) {
    %c0_i32 = arith.constant 0 : i32
    %c0_i32_0 = arith.constant 0 : i32
    %c0_i32_1 = arith.constant 0 : i32
    %c0_i32_2 = arith.constant 0 : i32
    return %c0_i32, %c0_i32_0, %c0_i32_1 : i32, i32, i32
  }
  func.func @transform_4(%arg0: i32) -> (i32, i32, i32, i32) {
    %c0_i32 = arith.constant 0 : i32
    %c0_i32_0 = arith.constant 0 : i32
    %c0_i32_1 = arith.constant 0 : i32
    %c0_i32_2 = arith.constant 0 : i32
    %c0_i32_3 = arith.constant 0 : i32
    return %c0_i32, %c0_i32_0, %c0_i32_1, %c0_i32_2 : i32, i32, i32, i32
  }
  func.func @transform_5(%arg0: i32) -> (i32, i32, i32) {
    %c0_i32 = arith.constant 0 : i32
    %c0_i32_0 = arith.constant 0 : i32
    %c0_i32_1 = arith.constant 0 : i32
    %c0_i32_2 = arith.constant 0 : i32
    return %c0_i32, %c0_i32_0, %c0_i32_1 : i32, i32, i32
  }
  func.func @transform_6(%arg0: i32) -> (i32, i32, i32) {
    %c0_i32 = arith.constant 0 : i32
    %c0_i32_0 = arith.constant 0 : i32
    %c0_i32_1 = arith.constant 0 : i32
    %c0_i32_2 = arith.constant 0 : i32
    return %c0_i32, %c0_i32_0, %c0_i32_1 : i32, i32, i32
  }
  func.func @transform_7(%arg0: i32) -> (i32, i32, i32) {
    %c0_i32 = arith.constant 0 : i32
    %c0_i32_0 = arith.constant 0 : i32
    %c0_i32_1 = arith.constant 0 : i32
    %c0_i32_2 = arith.constant 0 : i32
    return %c0_i32, %c0_i32_0, %c0_i32_1 : i32, i32, i32
  }
  func.func @transform_8(%arg0: i32) -> (i32, i32) {
    %c0_i32 = arith.constant 0 : i32
    %c0_i32_0 = arith.constant 0 : i32
    %c0_i32_1 = arith.constant 0 : i32
    return %c0_i32, %c0_i32_0 : i32, i32
  }
  func.func @transform_9(%arg0: i32) -> (i32, i32) {
    %c0_i32 = arith.constant 0 : i32
    %c0_i32_0 = arith.constant 0 : i32
    %c0_i32_1 = arith.constant 0 : i32
    return %c0_i32, %c0_i32_0 : i32, i32
  }
  func.func @transform_10(%arg0: i32) -> (i32, i32) {
    %c0_i32 = arith.constant 0 : i32
    %c0_i32_0 = arith.constant 0 : i32
    %c0_i32_1 = arith.constant 0 : i32
    return %c0_i32, %c0_i32_0 : i32, i32
  }
  func.func @transform_11(%arg0: i32) -> (i32, i32) {
    %c0_i32 = arith.constant 0 : i32
    %c0_i32_0 = arith.constant 0 : i32
    %c0_i32_1 = arith.constant 0 : i32
    return %c0_i32, %c0_i32_0 : i32, i32
  }
  func.func @transform_12(%arg0: i32) -> (i32, i32) {
    %c0_i32 = arith.constant 0 : i32
    %c0_i32_0 = arith.constant 0 : i32
    %c0_i32_1 = arith.constant 0 : i32
    return %c0_i32, %c0_i32_0 : i32, i32
  }
  func.func @transform_13(%arg0: i32) -> (i32, i32) {
    %c0_i32 = arith.constant 0 : i32
    %c0_i32_0 = arith.constant 0 : i32
    %c0_i32_1 = arith.constant 0 : i32
    return %c0_i32, %c0_i32_0 : i32, i32
  }
  func.func @transform_14(%arg0: i32) -> (i32, i32) {
    %c0_i32 = arith.constant 0 : i32
    %c0_i32_0 = arith.constant 0 : i32
    %c0_i32_1 = arith.constant 0 : i32
    return %c0_i32, %c0_i32_0 : i32, i32
  }
  func.func @transform_15(%arg0: i32) -> (i32, i32) {
    %c0_i32 = arith.constant 0 : i32
    %c0_i32_0 = arith.constant 0 : i32
    return %arg0, %c0_i32 : i32, i32
  }
}

</mosaic_0001>

<llo_original>
// kernel: tpu_custom_call.1
$region0: #{tpu_custom_call.1}
  #allocation0 [shape = 'u32[]', space=smem, size = 0x4, offset = 0x4, fixed_abs, tag = 'smem constant byte address 0x4 - core index']
  #allocation1 [shape = 'u32[144,128]{1,0:T(1,128)}', space=vmem, size = 0x12000, scoped, tag = 'internal scratch']
  #allocation2 [shape = 'f32[8,24,32]{2,1,0:T(8,128)}', space=vmem, size = 0x18000, scoped, tag = 'scratch operand']
  %s0 = inlined_call_operand.hbm [shape: f32[16,16,32], index: 0, kind: input, shape index: {}]
  %s1 = inlined_call_operand.vmem [shape: f32[16,4], index: 1, kind: input, shape index: {}]
  %s2 = inlined_call_operand.hbm [shape: f32[3,3,32,32], index: 2, kind: input, shape index: {}]
  %s3 = inlined_call_operand.vmem [shape: f32[3,1,32], index: 3, kind: input, shape index: {}]
  %s4 = inlined_call_operand.hbm [shape: f32[3,3,32,32], index: 4, kind: input, shape index: {}]
  %s5 = inlined_call_operand.vmem [shape: f32[3,1,32], index: 5, kind: input, shape index: {}]
  %s6 = inlined_call_operand.hbm [shape: f32[3,32,32], index: 6, kind: input, shape index: {}]
  %s7 = inlined_call_operand.vmem [shape: f32[3,1,32], index: 7, kind: input, shape index: {}]
  %s8 = inlined_call_operand.vmem [shape: f32[4,8], index: 8, kind: input, shape index: {}]
  %s9 = inlined_call_operand.vmem [shape: f32[1,8], index: 9, kind: input, shape index: {}]
  %s10 = inlined_call_operand.vmem [shape: f32[32,32], index: 10, kind: input, shape index: {}]
  %s11 = inlined_call_operand.vmem [shape: f32[8,32], index: 11, kind: input, shape index: {}]
  %s12 = inlined_call_operand.vmem [shape: f32[1,32], index: 12, kind: input, shape index: {}]
  %s13 = inlined_call_operand.vmem [shape: f32[32,3], index: 13, kind: input, shape index: {}]
  %s14 = inlined_call_operand.vmem [shape: f32[1,3], index: 14, kind: input, shape index: {}]
  %s15 = inlined_call_operand.vmem [shape: f32[16,3], index: 15, kind: output, shape index: {}]
  %s16 = sld [smem:[#allocation0]]
  $region109: #{tpu_custom_call.1} parent=0
    _
  %s18 = ssub.s32 1, %s16
  %s19 = scalar_select 0, %s18, %s16
  $region1: #{tpu_custom_call.1} parent=0
    #allocation3 [shape = 'u8[131072]{0}', space=vmem, size = 0x20000, scoped, tag = 'input window, operand 0']
    #allocation4 [shape = 's32[2]{0}', space=sflag, size = 0x8, scoped, tag = 'scoped memory for tpu_custom_call.1']
    #allocation5 [shape = 'u8[147456]{0}', space=vmem, size = 0x24000, scoped, tag = 'input window, operand 2, single buffered']
    #allocation6 [shape = 's32[1]{0}', space=sflag, size = 0x4, scoped, tag = 'scoped memory for tpu_custom_call.1']
    #allocation7 [shape = 'u8[147456]{0}', space=vmem, size = 0x24000, scoped, tag = 'input window, operand 4, single buffered']
    #allocation8 [shape = 'u8[49152]{0}', space=vmem, size = 0xc000, scoped, tag = 'input window, operand 6, single buffered']
    #allocation9 [shape = 's32[1]{0}', space=sflag, size = 0x4, scoped, tag = 'scoped memory for tpu_custom_call.1']
    %20 = vsyncpa [#allocation4], 0
    %s21 = scalar_lea.sflag [#allocation4], 1
    %22 = vsyncpa %s21, 0
    %23 = vsyncpa [#allocation6], 0
    %24 = vsyncpa [#allocation9], 0
    loop: start=0, step=1, limit=4
    $region2: #{tpu_custom_call.1} parent=1 // loop_pre_header
      _
    $region3: #{tpu_custom_call.1} parent=1 // loop_header
      %s26 = sphi 0, %s30
      %p27 = scmp.ge.s32.totalorder %s26, 4
      %s36 = sphi 0, %s38
      %s39 = sphi 0, %s36
      %s40 = sphi 0, %s39
      %s56 = sphi 0, %s40
      %s62 = sphi 0, %s64
      %s65 = sphi 0, %s62
      %s66 = sphi 0, %s65
      %s82 = sphi 0, %s66
      %s86 = sphi 0, %s86
      %s88 = sphi 0, %s86
      %s89 = sphi 0, %s88
      %s103 = sphi 0, %s89
      %s107 = sphi 0, %s107
      %s109 = sphi 0, %s107
      %s110 = sphi 0, %s109
      %s124 = sphi 0, %s110
      %s128 = sphi 0, %s128
      %s130 = sphi 0, %s128
      %s131 = sphi 0, %s130
      %s145 = sphi 0, %s131
      %s149 = sphi 0, %s149
      %s151 = sphi 0, %s149
      %s152 = sphi 0, %s151
      %s166 = sphi 0, %s152
      %s170 = sphi 0, %s170
      %s172 = sphi 0, %s170
      %s173 = sphi 0, %s172
      %s187 = sphi 0, %s173
      %s191 = sphi 0, %s191
      %s193 = sphi 0, %s191
      %s194 = sphi 0, %s193
      %s208 = sphi 0, %s194
      %s212 = sphi 0, %s212
      %s214 = sphi 0, %s212
      %s215 = sphi 0, %s214
      %s229 = sphi 0, %s215
      %s233 = sphi 0, %s233
      %s235 = sphi 0, %s233
      %s236 = sphi 0, %s235
      %s250 = sphi 0, %s236
      %s254 = sphi 0, %s254
      %s256 = sphi 0, %s254
      %s257 = sphi 0, %s256
      %s271 = sphi 0, %s257
      %s275 = sphi 0, %s275
      %s277 = sphi 0, %s275
      %s278 = sphi 0, %s277
      %s292 = sphi 0, %s278
      %s296 = sphi 0, %s296
      %s298 = sphi 0, %s296
      %s299 = sphi 0, %s298
      %s313 = sphi 0, %s299
      %s317 = sphi 0, %s317
      %s319 = sphi 0, %s317
      %s320 = sphi 0, %s319
      %s334 = sphi 0, %s320
      %s338 = sphi 0, %s338
      %s340 = sphi 0, %s338
      %s341 = sphi 0, %s340
      %s355 = sphi 0, %s341
      %s361 = sphi 0, %s363
      %s364 = sphi 0, %s361
      %s365 = sphi 0, %s364
      %s381 = sphi 0, %s365
    $region4: #{tpu_custom_call.1} parent=1 // loop_header_branch
      %29 = sbr.rel (%p27) target = $region8
    $region5: #{tpu_custom_call.1} parent=1 // loop_body
      %s31 = ssub.s32 %s26, 1
      %s32 = ssub.s32 %s26, 2
      %s33 = sadd.s32 %s26, 1
      %s34 = ssub.s32 %s26, %s33
      %p35 = scmp.eq.s32.totalorder %s34, 0
      %s37 = sadd.s32 %s36, 1
      %s38 = scalar_select %p35, %s36, %s37
      %p41 = pneg %p35
      %p42 = scmp.eq.s32.totalorder %s26, 1
      %p43 = por %p41, %p42
      %p44 = scmp.ne.s32.totalorder %s36, %s39
      %p45 = scmp.eq.s32.totalorder %s26, 0
      %p46 = por %p44, %p45
      %p47 = scmp.ne.s32.totalorder %s36, %s39
      %p48 = scmp.eq.s32.totalorder %s31, 1
      %p49 = por %p47, %p48
      %p50 = scmp.ne.s32.totalorder %s39, %s40
      %p51 = scmp.eq.s32.totalorder %s31, 0
      %p52 = por %p50, %p51
      %p53 = scmp.ne.s32.totalorder %s39, %s40
      %p54 = scmp.eq.s32.totalorder %s32, 1
      %p55 = por %p53, %p54
      %p57 = scmp.ne.s32.totalorder %s40, %s56
      %p58 = scmp.eq.s32.totalorder %s32, 0
      %p59 = por %p57, %p58
      %s60 = ssub.s32 %s26, %s33
      %p61 = scmp.eq.s32.totalorder %s60, 0
      %s63 = sadd.s32 %s62, 1
      %s64 = scalar_select %p61, %s62, %s63
      %p67 = pneg %p61
      %p68 = scmp.eq.s32.totalorder %s26, 1
      %p69 = por %p67, %p68
      %p70 = scmp.ne.s32.totalorder %s62, %s65
      %p71 = scmp.eq.s32.totalorder %s26, 0
      %p72 = por %p70, %p71
      %p73 = scmp.ne.s32.totalorder %s62, %s65
      %p74 = scmp.eq.s32.totalorder %s31, 1
      %p75 = por %p73, %p74
      %p76 = scmp.ne.s32.totalorder %s65, %s66
      %p77 = scmp.eq.s32.totalorder %s31, 0
      %p78 = por %p76, %p77
      %p79 = scmp.ne.s32.totalorder %s65, %s66
      %p80 = scmp.eq.s32.totalorder %s32, 1
      %p81 = por %p79, %p80
      %p83 = scmp.ne.s32.totalorder %s66, %s82
      %p84 = scmp.eq.s32.totalorder %s32, 0
      %p85 = por %p83, %p84
      %s87 = sadd.s32 %s86, 1
      %p90 = scmp.eq.s32.totalorder %s26, 1
      %p91 = scmp.ne.s32.totalorder %s86, %s88
      %p92 = scmp.eq.s32.totalorder %s26, 0
      %p93 = por %p91, %p92
      %p94 = scmp.ne.s32.totalorder %s86, %s88
      %p95 = scmp.eq.s32.totalorder %s31, 1
      %p96 = por %p94, %p95
      %p97 = scmp.ne.s32.totalorder %s88, %s89
      %p98 = scmp.eq.s32.totalorder %s31, 0
      %p99 = por %p97, %p98
      %p100 = scmp.ne.s32.totalorder %s88, %s89
      %p101 = scmp.eq.s32.totalorder %s32, 1
      %p102 = por %p100, %p101
      %p104 = scmp.ne.s32.totalorder %s89, %s103
      %p105 = scmp.eq.s32.totalorder %s32, 0
      %p106 = por %p104, %p105
      %s108 = sadd.s32 %s107, 1
      %p111 = scmp.eq.s32.totalorder %s26, 1
      %p112 = scmp.ne.s32.totalorder %s107, %s109
      %p113 = scmp.eq.s32.totalorder %s26, 0
      %p114 = por %p112, %p113
      %p115 = scmp.ne.s32.totalorder %s107, %s109
      %p116 = scmp.eq.s32.totalorder %s31, 1
      %p117 = por %p115, %p116
      %p118 = scmp.ne.s32.totalorder %s109, %s110
      %p119 = scmp.eq.s32.totalorder %s31, 0
      %p120 = por %p118, %p119
      %p121 = scmp.ne.s32.totalorder %s109, %s110
      %p122 = scmp.eq.s32.totalorder %s32, 1
      %p123 = por %p121, %p122
      %p125 = scmp.ne.s32.totalorder %s110, %s124
      %p126 = scmp.eq.s32.totalorder %s32, 0
      %p127 = por %p125, %p126
      %s129 = sadd.s32 %s128, 1
      %p132 = scmp.eq.s32.totalorder %s26, 1
      %p133 = scmp.ne.s32.totalorder %s128, %s130
      %p134 = scmp.eq.s32.totalorder %s26, 0
      %p135 = por %p133, %p134
      %p136 = scmp.ne.s32.totalorder %s128, %s130
      %p137 = scmp.eq.s32.totalorder %s31, 1
      %p138 = por %p136, %p137
      %p139 = scmp.ne.s32.totalorder %s130, %s131
      %p140 = scmp.eq.s32.totalorder %s31, 0
      %p141 = por %p139, %p140
      %p142 = scmp.ne.s32.totalorder %s130, %s131
      %p143 = scmp.eq.s32.totalorder %s32, 1
      %p144 = por %p142, %p143
      %p146 = scmp.ne.s32.totalorder %s131, %s145
      %p147 = scmp.eq.s32.totalorder %s32, 0
      %p148 = por %p146, %p147
      %s150 = sadd.s32 %s149, 1
      %p153 = scmp.eq.s32.totalorder %s26, 1
      %p154 = scmp.ne.s32.totalorder %s149, %s151
      %p155 = scmp.eq.s32.totalorder %s26, 0
      %p156 = por %p154, %p155
      %p157 = scmp.ne.s32.totalorder %s149, %s151
      %p158 = scmp.eq.s32.totalorder %s31, 1
      %p159 = por %p157, %p158
      %p160 = scmp.ne.s32.totalorder %s151, %s152
      %p161 = scmp.eq.s32.totalorder %s31, 0
      %p162 = por %p160, %p161
      %p163 = scmp.ne.s32.totalorder %s151, %s152
      %p164 = scmp.eq.s32.totalorder %s32, 1
      %p165 = por %p163, %p164
      %p167 = scmp.ne.s32.totalorder %s152, %s166
      %p168 = scmp.eq.s32.totalorder %s32, 0
      %p169 = por %p167, %p168
      %s171 = sadd.s32 %s170, 1
      %p174 = scmp.eq.s32.totalorder %s26, 1
      %p175 = scmp.ne.s32.totalorder %s170, %s172
      %p176 = scmp.eq.s32.totalorder %s26, 0
      %p177 = por %p175, %p176
      %p178 = scmp.ne.s32.totalorder %s170, %s172
      %p179 = scmp.eq.s32.totalorder %s31, 1
      %p180 = por %p178, %p179
      %p181 = scmp.ne.s32.totalorder %s172, %s173
      %p182 = scmp.eq.s32.totalorder %s31, 0
      %p183 = por %p181, %p182
      %p184 = scmp.ne.s32.totalorder %s172, %s173
      %p185 = scmp.eq.s32.totalorder %s32, 1
      %p186 = por %p184, %p185
      %p188 = scmp.ne.s32.totalorder %s173, %s187
      %p189 = scmp.eq.s32.totalorder %s32, 0
      %p190 = por %p188, %p189
      %s192 = sadd.s32 %s191, 1
      %p195 = scmp.eq.s32.totalorder %s26, 1
      %p196 = scmp.ne.s32.totalorder %s191, %s193
      %p197 = scmp.eq.s32.totalorder %s26, 0
      %p198 = por %p196, %p197
      %p199 = scmp.ne.s32.totalorder %s191, %s193
      %p200 = scmp.eq.s32.totalorder %s31, 1
      %p201 = por %p199, %p200
      %p202 = scmp.ne.s32.totalorder %s193, %s194
      %p203 = scmp.eq.s32.totalorder %s31, 0
      %p204 = por %p202, %p203
      %p205 = scmp.ne.s32.totalorder %s193, %s194
      %p206 = scmp.eq.s32.totalorder %s32, 1
      %p207 = por %p205, %p206
      %p209 = scmp.ne.s32.totalorder %s194, %s208
      %p210 = scmp.eq.s32.totalorder %s32, 0
      %p211 = por %p209, %p210
      %s213 = sadd.s32 %s212, 1
      %p216 = scmp.eq.s32.totalorder %s26, 1
      %p217 = scmp.ne.s32.totalorder %s212, %s214
      %p218 = scmp.eq.s32.totalorder %s26, 0
      %p219 = por %p217, %p218
      %p220 = scmp.ne.s32.totalorder %s212, %s214
      %p221 = scmp.eq.s32.totalorder %s31, 1
      %p222 = por %p220, %p221
      %p223 = scmp.ne.s32.totalorder %s214, %s215
      %p224 = scmp.eq.s32.totalorder %s31, 0
      %p225 = por %p223, %p224
      %p226 = scmp.ne.s32.totalorder %s214, %s215
      %p227 = scmp.eq.s32.totalorder %s32, 1
      %p228 = por %p226, %p227
      %p230 = scmp.ne.s32.totalorder %s215, %s229
      %p231 = scmp.eq.s32.totalorder %s32, 0
      %p232 = por %p230, %p231
      %s234 = sadd.s32 %s233, 1
      %p237 = scmp.eq.s32.totalorder %s26, 1
      %p238 = scmp.ne.s32.totalorder %s233, %s235
      %p239 = scmp.eq.s32.totalorder %s26, 0
      %p240 = por %p238, %p239
      %p241 = scmp.ne.s32.totalorder %s233, %s235
      %p242 = scmp.eq.s32.totalorder %s31, 1
      %p243 = por %p241, %p242
      %p244 = scmp.ne.s32.totalorder %s235, %s236
      %p245 = scmp.eq.s32.totalorder %s31, 0
      %p246 = por %p244, %p245
      %p247 = scmp.ne.s32.totalorder %s235, %s236
      %p248 = scmp.eq.s32.totalorder %s32, 1
      %p249 = por %p247, %p248
      %p251 = scmp.ne.s32.totalorder %s236, %s250
      %p252 = scmp.eq.s32.totalorder %s32, 0
      %p253 = por %p251, %p252
      %s255 = sadd.s32 %s254, 1
      %p258 = scmp.eq.s32.totalorder %s26, 1
      %p259 = scmp.ne.s32.totalorder %s254, %s256
      %p260 = scmp.eq.s32.totalorder %s26, 0
      %p261 = por %p259, %p260
      %p262 = scmp.ne.s32.totalorder %s254, %s256
      %p263 = scmp.eq.s32.totalorder %s31, 1
      %p264 = por %p262, %p263
      %p265 = scmp.ne.s32.totalorder %s256, %s257
      %p266 = scmp.eq.s32.totalorder %s31, 0
      %p267 = por %p265, %p266
      %p268 = scmp.ne.s32.totalorder %s256, %s257
      %p269 = scmp.eq.s32.totalorder %s32, 1
      %p270 = por %p268, %p269
      %p272 = scmp.ne.s32.totalorder %s257, %s271
      %p273 = scmp.eq.s32.totalorder %s32, 0
      %p274 = por %p272, %p273
      %s276 = sadd.s32 %s275, 1
      %p279 = scmp.eq.s32.totalorder %s26, 1
      %p280 = scmp.ne.s32.totalorder %s275, %s277
      %p281 = scmp.eq.s32.totalorder %s26, 0
      %p282 = por %p280, %p281
      %p283 = scmp.ne.s32.totalorder %s275, %s277
      %p284 = scmp.eq.s32.totalorder %s31, 1
      %p285 = por %p283, %p284
      %p286 = scmp.ne.s32.totalorder %s277, %s278
      %p287 = scmp.eq.s32.totalorder %s31, 0
      %p288 = por %p286, %p287
      %p289 = scmp.ne.s32.totalorder %s277, %s278
      %p290 = scmp.eq.s32.totalorder %s32, 1
      %p291 = por %p289, %p290
      %p293 = scmp.ne.s32.totalorder %s278, %s292
      %p294 = scmp.eq.s32.totalorder %s32, 0
      %p295 = por %p293, %p294
      %s297 = sadd.s32 %s296, 1
      %p300 = scmp.eq.s32.totalorder %s26, 1
      %p301 = scmp.ne.s32.totalorder %s296, %s298
      %p302 = scmp.eq.s32.totalorder %s26, 0
      %p303 = por %p301, %p302
      %p304 = scmp.ne.s32.totalorder %s296, %s298
      %p305 = scmp.eq.s32.totalorder %s31, 1
      %p306 = por %p304, %p305
      %p307 = scmp.ne.s32.totalorder %s298, %s299
      %p308 = scmp.eq.s32.totalorder %s31, 0
      %p309 = por %p307, %p308
      %p310 = scmp.ne.s32.totalorder %s298, %s299
      %p311 = scmp.eq.s32.totalorder %s32, 1
      %p312 = por %p310, %p311
      %p314 = scmp.ne.s32.totalorder %s299, %s313
      %p315 = scmp.eq.s32.totalorder %s32, 0
      %p316 = por %p314, %p315
      %s318 = sadd.s32 %s317, 1
      %p321 = scmp.eq.s32.totalorder %s26, 1
      %p322 = scmp.ne.s32.totalorder %s317, %s319
      %p323 = scmp.eq.s32.totalorder %s26, 0
      %p324 = por %p322, %p323
      %p325 = scmp.ne.s32.totalorder %s317, %s319
      %p326 = scmp.eq.s32.totalorder %s31, 1
      %p327 = por %p325, %p326
      %p328 = scmp.ne.s32.totalorder %s319, %s320
      %p329 = scmp.eq.s32.totalorder %s31, 0
      %p330 = por %p328, %p329
      %p331 = scmp.ne.s32.totalorder %s319, %s320
      %p332 = scmp.eq.s32.totalorder %s32, 1
      %p333 = por %p331, %p332
      %p335 = scmp.ne.s32.totalorder %s320, %s334
      %p336 = scmp.eq.s32.totalorder %s32, 0
      %p337 = por %p335, %p336
      %s339 = sadd.s32 %s338, 1
      %p342 = scmp.eq.s32.totalorder %s26, 1
      %p343 = scmp.ne.s32.totalorder %s338, %s340
      %p344 = scmp.eq.s32.totalorder %s26, 0
      %p345 = por %p343, %p344
      %p346 = scmp.ne.s32.totalorder %s338, %s340
      %p347 = scmp.eq.s32.totalorder %s31, 1
      %p348 = por %p346, %p347
      %p349 = scmp.ne.s32.totalorder %s340, %s341
      %p350 = scmp.eq.s32.totalorder %s31, 0
      %p351 = por %p349, %p350
      %p352 = scmp.ne.s32.totalorder %s340, %s341
      %p353 = scmp.eq.s32.totalorder %s32, 1
      %p354 = por %p352, %p353
      %p356 = scmp.ne.s32.totalorder %s341, %s355
      %p357 = scmp.eq.s32.totalorder %s32, 0
      %p358 = por %p356, %p357
      %s359 = ssub.s32 %s26, %s33
      %p360 = scmp.eq.s32.totalorder %s359, 0
      %s362 = sadd.s32 %s361, 1
      %s363 = scalar_select %p360, %s361, %s362
      %p366 = pneg %p360
      %p367 = scmp.eq.s32.totalorder %s26, 1
      %p368 = por %p366, %p367
      %p369 = scmp.ne.s32.totalorder %s361, %s364
      %p370 = scmp.eq.s32.totalorder %s26, 0
      %p371 = por %p369, %p370
      %p372 = scmp.ne.s32.totalorder %s361, %s364
      %p373 = scmp.eq.s32.totalorder %s31, 1
      %p374 = por %p372, %p373
      %p375 = scmp.ne.s32.totalorder %s364, %s365
      %p376 = scmp.eq.s32.totalorder %s31, 0
      %p377 = por %p375, %p376
      %p378 = scmp.ne.s32.totalorder %s364, %s365
      %p379 = scmp.eq.s32.totalorder %s32, 1
      %p380 = por %p378, %p379
      %p382 = scmp.ne.s32.totalorder %s365, %s381
      %p383 = scmp.eq.s32.totalorder %s32, 0
      %p384 = por %p382, %p383
      %p385 = scmp.le.s32.totalorder 1, %s26
      %p386 = scmp.lt.s32.totalorder %s26, 3
      %p387 = pnand %p385, %p386
      %p388 = pneg %p387
      // Predicated region
      $region9: #{tpu_custom_call.1} parent=5 // pred_check
        _
      $region10: #{tpu_custom_call.1} parent=5 // pred_check_branch
        %390 = sbr.rel (%p387) target = $region12
      $region11: #{tpu_custom_call.1} parent=5 // pred_region
        %s391 = ssub.s32 %s26, 1
        // Predicated region
        $region13: #{tpu_custom_call.1} parent=11 // pred_check
          %p392 = pneg %p99
        $region14: #{tpu_custom_call.1} parent=11 // pred_check_branch
          %394 = sbr.rel (%p392) target = $region16
        $region15: #{tpu_custom_call.1} parent=11 // pred_region
          %s396 = ssub.s32 4608, 4608
          %397 = vsyncadd [#allocation6], %s396
          %s398 = sshll.u32 [#allocation5], 4
          %s399 = int_to_ptr.vmem [resolvable:$true] %s398
          %404 = dma.hbm_to_vmem [thread:$0]  %s2, 4608, %s399, [#allocation6], 128, 128, 8
        $region16: #{tpu_custom_call.1} parent=11 // pred_fallthru
          _
        // Predicated region
        $region17: #{tpu_custom_call.1} parent=11 // pred_check
          %p405 = pneg %p120
        $region18: #{tpu_custom_call.1} parent=11 // pred_check_branch
          %407 = sbr.rel (%p405) target = $region20
        $region19: #{tpu_custom_call.1} parent=11 // pred_region
          _
        $region20: #{tpu_custom_call.1} parent=11 // pred_fallthru
          _
        // Predicated region
        $region21: #{tpu_custom_call.1} parent=11 // pred_check
          %p408 = pneg %p141
        $region22: #{tpu_custom_call.1} parent=11 // pred_check_branch
          %410 = sbr.rel (%p408) target = $region24
        $region23: #{tpu_custom_call.1} parent=11 // pred_region
          %s412 = ssub.s32 4608, 4608
          %413 = vsyncadd [#allocation6], %s412
          %s414 = sshll.u32 [#allocation7], 4
          %s415 = int_to_ptr.vmem [resolvable:$true] %s414
          %420 = dma.hbm_to_vmem [thread:$0]  %s4, 4608, %s415, [#allocation6], 128, 128, 8
        $region24: #{tpu_custom_call.1} parent=11 // pred_fallthru
          _
        // Predicated region
        $region25: #{tpu_custom_call.1} parent=11 // pred_check
          %p421 = pneg %p162
        $region26: #{tpu_custom_call.1} parent=11 // pred_check_branch
          %423 = sbr.rel (%p421) target = $region28
        $region27: #{tpu_custom_call.1} parent=11 // pred_region
          _
        $region28: #{tpu_custom_call.1} parent=11 // pred_fallthru
          _
        // Predicated region
        $region29: #{tpu_custom_call.1} parent=11 // pred_check
          %p424 = pneg %p183
        $region30: #{tpu_custom_call.1} parent=11 // pred_check_branch
          %426 = sbr.rel (%p424) target = $region32
        $region31: #{tpu_custom_call.1} parent=11 // pred_region
          %s428 = ssub.s32 1536, 1536
          %429 = vsyncadd [#allocation9], %s428
          %s430 = sshll.u32 [#allocation8], 4
          %s431 = int_to_ptr.vmem [resolvable:$true] %s430
          %436 = dma.hbm_to_vmem [thread:$0]  %s6, 1536, %s431, [#allocation9], 128, 128, 8
        $region32: #{tpu_custom_call.1} parent=11 // pred_fallthru
          _
        // Predicated region
        $region33: #{tpu_custom_call.1} parent=11 // pred_check
          %p437 = pneg %p204
        $region34: #{tpu_custom_call.1} parent=11 // pred_check_branch
          %439 = sbr.rel (%p437) target = $region36
        $region35: #{tpu_custom_call.1} parent=11 // pred_region
          _
        $region36: #{tpu_custom_call.1} parent=11 // pred_fallthru
          _
        // Predicated region
        $region37: #{tpu_custom_call.1} parent=11 // pred_check
          %p440 = pneg %p225
        $region38: #{tpu_custom_call.1} parent=11 // pred_check_branch
          %442 = sbr.rel (%p440) target = $region40
        $region39: #{tpu_custom_call.1} parent=11 // pred_region
          _
        $region40: #{tpu_custom_call.1} parent=11 // pred_fallthru
          _
        // Predicated region
        $region41: #{tpu_custom_call.1} parent=11 // pred_check
          %p443 = pneg %p246
        $region42: #{tpu_custom_call.1} parent=11 // pred_check_branch
          %445 = sbr.rel (%p443) target = $region44
        $region43: #{tpu_custom_call.1} parent=11 // pred_region
          _
        $region44: #{tpu_custom_call.1} parent=11 // pred_fallthru
          _
        // Predicated region
        $region45: #{tpu_custom_call.1} parent=11 // pred_check
          %p446 = pneg %p267
        $region46: #{tpu_custom_call.1} parent=11 // pred_check_branch
          %448 = sbr.rel (%p446) target = $region48
        $region47: #{tpu_custom_call.1} parent=11 // pred_region
          _
        $region48: #{tpu_custom_call.1} parent=11 // pred_fallthru
          _
        // Predicated region
        $region49: #{tpu_custom_call.1} parent=11 // pred_check
          %p449 = pneg %p288
        $region50: #{tpu_custom_call.1} parent=11 // pred_check_branch
          %451 = sbr.rel (%p449) target = $region52
        $region51: #{tpu_custom_call.1} parent=11 // pred_region
          _
        $region52: #{tpu_custom_call.1} parent=11 // pred_fallthru
          _
        // Predicated region
        $region53: #{tpu_custom_call.1} parent=11 // pred_check
          %p452 = pneg %p309
        $region54: #{tpu_custom_call.1} parent=11 // pred_check_branch
          %454 = sbr.rel (%p452) target = $region56
        $region55: #{tpu_custom_call.1} parent=11 // pred_region
          _
        $region56: #{tpu_custom_call.1} parent=11 // pred_fallthru
          _
        // Predicated region
        $region57: #{tpu_custom_call.1} parent=11 // pred_check
          %p455 = pneg %p330
        $region58: #{tpu_custom_call.1} parent=11 // pred_check_branch
          %457 = sbr.rel (%p455) target = $region60
        $region59: #{tpu_custom_call.1} parent=11 // pred_region
          _
        $region60: #{tpu_custom_call.1} parent=11 // pred_fallthru
          _
        // Predicated region
        $region61: #{tpu_custom_call.1} parent=11 // pred_check
          %p458 = pneg %p351
        $region62: #{tpu_custom_call.1} parent=11 // pred_check_branch
          %460 = sbr.rel (%p458) target = $region64
        $region63: #{tpu_custom_call.1} parent=11 // pred_region
          _
        $region64: #{tpu_custom_call.1} parent=11 // pred_fallthru
          _
      $region12: #{tpu_custom_call.1} parent=5 // pred_fallthru
        _
      %p461 = scmp.lt.s32.totalorder %s26, 2
      // Predicated region
      $region65: #{tpu_custom_call.1} parent=5 // pred_check
        %p462 = pneg %p461
      $region66: #{tpu_custom_call.1} parent=5 // pred_check_branch
        %464 = sbr.rel (%p462) target = $region68
      $region67: #{tpu_custom_call.1} parent=5 // pred_region
        // Predicated region
        $region69: #{tpu_custom_call.1} parent=67 // pred_check
          %p465 = pneg %p46
        $region70: #{tpu_custom_call.1} parent=67 // pred_check_branch
          %467 = sbr.rel (%p465) target = $region72
        $region71: #{tpu_custom_call.1} parent=67 // pred_region
          %s468 = sand.u32 %s36, 1
          %s469 = scalar_lea.sflag [#allocation4], %s468
          %s470 = sand.u32 %s36, 1
          %s471 = smul.addr %s470, 128
          %s472 = scalar_lea.vmem [#allocation3], %s471
          %s473 = smul.u32 8, %s26
          %s475 = ssub.s32 2048, 2048
          %476 = vsyncadd %s469, %s475
          %s477 = smul.addr %s473, 2
          %s478 = smul.addr %s477, 128
          %s479 = scalar_lea.hbm %s0, %s478
          %s480 = sshll.u32 %s472, 4
          %s481 = int_to_ptr.vmem [resolvable:$true] %s480
          %486 = dma.hbm_to_vmem [thread:$0]  %s479, 2048, %s481, %s469, 128, 128, 8
        $region72: #{tpu_custom_call.1} parent=67 // pred_fallthru
          _
        // Predicated region
        $region73: #{tpu_custom_call.1} parent=67 // pred_check
          %p487 = pneg %p72
        $region74: #{tpu_custom_call.1} parent=67 // pred_check_branch
          %489 = sbr.rel (%p487) target = $region76
        $region75: #{tpu_custom_call.1} parent=67 // pred_region
          %p490 = scmp.lt.s32.totalorder %s26, 1
          %s491 = scalar_select %p490, %s26, 1
          %s492 = smul.addr %s491, 8
          %s493 = scalar_lea.vmem %s1, %s492
        $region76: #{tpu_custom_call.1} parent=67 // pred_fallthru
          _
      $region68: #{tpu_custom_call.1} parent=5 // pred_fallthru
        _
      %p494 = scmp.le.s32.totalorder 1, %s26
      %p495 = scmp.lt.s32.totalorder %s26, 3
      %p496 = pnand %p494, %p495
      %p497 = pneg %p496
      // Predicated region
      $region77: #{tpu_custom_call.1} parent=5 // pred_check
        _
      $region78: #{tpu_custom_call.1} parent=5 // pred_check_branch
        %499 = sbr.rel (%p496) target = $region80
      $region79: #{tpu_custom_call.1} parent=5 // pred_region
        %s500 = ssub.s32 %s26, 1
        %s501 = sand.u32 %s39, 1
        %s502 = scalar_lea.sflag [#allocation4], %s501
        %s503 = sand.u32 %s39, 1
        %s504 = smul.addr %s503, 128
        %s505 = scalar_lea.vmem [#allocation3], %s504
        // Predicated region
        $region81: #{tpu_custom_call.1} parent=79 // pred_check
          %p506 = pneg %p52
        $region82: #{tpu_custom_call.1} parent=79 // pred_check_branch
          %508 = sbr.rel (%p506) target = $region84
        $region83: #{tpu_custom_call.1} parent=79 // pred_region
          %509 = dma.done %s502, 2048
        $region84: #{tpu_custom_call.1} parent=79 // pred_fallthru
          _
        // Predicated region
        $region85: #{tpu_custom_call.1} parent=79 // pred_check
          %p510 = pneg %p99
        $region86: #{tpu_custom_call.1} parent=79 // pred_check_branch
          %512 = sbr.rel (%p510) target = $region88
        $region87: #{tpu_custom_call.1} parent=79 // pred_region
          %513 = dma.done [#allocation6], 4608
        $region88: #{tpu_custom_call.1} parent=79 // pred_fallthru
          _
        // Predicated region
        $region89: #{tpu_custom_call.1} parent=79 // pred_check
          %p514 = pneg %p141
        $region90: #{tpu_custom_call.1} parent=79 // pred_check_branch
          %516 = sbr.rel (%p514) target = $region92
        $region91: #{tpu_custom_call.1} parent=79 // pred_region
          %517 = dma.done [#allocation6], 4608
        $region92: #{tpu_custom_call.1} parent=79 // pred_fallthru
          _
        // Predicated region
        $region93: #{tpu_custom_call.1} parent=79 // pred_check
          %p518 = pneg %p183
        $region94: #{tpu_custom_call.1} parent=79 // pred_check_branch
          %520 = sbr.rel (%p518) target = $region96
        $region95: #{tpu_custom_call.1} parent=79 // pred_region
          %521 = dma.done [#allocation9], 1536
        $region96: #{tpu_custom_call.1} parent=79 // pred_fallthru
          _
        %s522 = sand.u32 %s39, 1
        %s523 = scalar_lea.sflag [#allocation4], %s522
        %s524 = sand.u32 %s39, 1
        %s525 = smul.addr %s524, 128
        %s526 = scalar_lea.vmem [#allocation3], %s525
        %p527 = pneg %p52
        %p528 = pneg %p49
        %p529 = scmp.lt.s32.totalorder %s31, 1
        %s530 = scalar_select %p529, %s31, 1
        %s531 = smul.addr %s530, 8
        %s532 = scalar_lea.vmem %s1, %s531
        %p533 = pneg %p78
        %p534 = pneg %p75
        %p535 = pneg %p99
        %p536 = pneg %p96
        %p537 = pneg %p120
        %p538 = pneg %p117
        %p539 = pneg %p141
        %p540 = pneg %p138
        %p541 = pneg %p162
        %p542 = pneg %p159
        %p543 = pneg %p183
        %p544 = pneg %p180
        %p545 = pneg %p204
        %p546 = pneg %p201
        %p547 = pneg %p225
        %p548 = pneg %p222
        %p549 = pneg %p246
        %p550 = pneg %p243
        %p551 = pneg %p267
        %p552 = pneg %p264
        %p553 = pneg %p288
        %p554 = pneg %p285
        %p555 = pneg %p309
        %p556 = pneg %p306
        %p557 = pneg %p330
        %p558 = pneg %p327
        %p559 = pneg %p351
        %p560 = pneg %p348
        %p561 = pneg %p377
        %p562 = pneg %p374
        %p563 = scmp.lt.s32.totalorder %s31, 1
        %s564 = scalar_select %p563, %s31, 1
        %s565 = smul.addr %s564, 8
        %s566 = scalar_lea.vmem %s15, %s565
        %s567 = smul.u32 8, %s31
        %p568 = scmp.lt.s32.totalorder %s31, 1
        %s569 = scalar_select %p568, %s31, 1
        %s570 = smul.addr %s569, 8
        %s571 = scalar_lea.vmem %s1, %s570
        %p572 = scmp.lt.s32.totalorder %s31, 1
        %s573 = scalar_select %p572, %s31, 1
        %s574 = smul.addr %s573, 8
        %s575 = scalar_lea.vmem %s15, %s574
        %vm576 = vcmask 261120
        %577 = vst.msk [vmem:[#allocation2] sm:$0xff] %vm576, 0.0
        %578 = vst.msk [vmem:[#allocation2 + $0x18] sm:$0xff] %vm576, 0.0
        %579 = vst.msk [vmem:[#allocation2 + $0x30] sm:$0xff] %vm576, 0.0
        %580 = vst.msk [vmem:[#allocation2 + $0x48] sm:$0xff] %vm576, 0.0
        %581 = vst.msk [vmem:[#allocation2 + $0x60] sm:$0xff] %vm576, 0.0
        %582 = vst.msk [vmem:[#allocation2 + $0x78] sm:$0xff] %vm576, 0.0
        %583 = vst.msk [vmem:[#allocation2 + $0x90] sm:$0xff] %vm576, 0.0
        %584 = vst.msk [vmem:[#allocation2 + $0xa8] sm:$0xff] %vm576, 0.0
        %v585 = vld [vmem:[%s505] sm:$0xff]
        %v586 = vld [vmem:[%s505 + $0x8] sm:$0xff]
        %v587 = vld [vmem:[%s505 + $0x10] sm:$0xff]
        %v588 = vld [vmem:[%s505 + $0x18] sm:$0xff]
        %v589 = vld [vmem:[%s505 + $0x20] sm:$0xff]
        %v590 = vld [vmem:[%s505 + $0x28] sm:$0xff]
        %v591 = vld [vmem:[%s505 + $0x30] sm:$0xff]
        %v592 = vld [vmem:[%s505 + $0x38] sm:$0xff]
        %v593 = vld [vmem:[%s505 + $0x40] sm:$0xff]
        %v594 = vld [vmem:[%s505 + $0x48] sm:$0xff]
        %v595 = vld [vmem:[%s505 + $0x50] sm:$0xff]
        %v596 = vld [vmem:[%s505 + $0x58] sm:$0xff]
        %v597 = vld [vmem:[%s505 + $0x60] sm:$0xff]
        %v598 = vld [vmem:[%s505 + $0x68] sm:$0xff]
        %v599 = vld [vmem:[%s505 + $0x70] sm:$0xff]
        %v600 = vld [vmem:[%s505 + $0x78] sm:$0xff]
        %601 = vst.msk [vmem:[#allocation2 + $0x8] sm:$0xff] %vm576, %v585
        %602 = vst.msk [vmem:[#allocation2 + $0x10] sm:$0xff] %vm576, %v586
        %603 = vst.msk [vmem:[#allocation2 + $0x20] sm:$0xff] %vm576, %v587
        %604 = vst.msk [vmem:[#allocation2 + $0x28] sm:$0xff] %vm576, %v588
        %605 = vst.msk [vmem:[#allocation2 + $0x38] sm:$0xff] %vm576, %v589
        %606 = vst.msk [vmem:[#allocation2 + $0x40] sm:$0xff] %vm576, %v590
        %607 = vst.msk [vmem:[#allocation2 + $0x50] sm:$0xff] %vm576, %v591
        %608 = vst.msk [vmem:[#allocation2 + $0x58] sm:$0xff] %vm576, %v592
        %609 = vst.msk [vmem:[#allocation2 + $0x68] sm:$0xff] %vm576, %v593
        %610 = vst.msk [vmem:[#allocation2 + $0x70] sm:$0xff] %vm576, %v594
        %611 = vst.msk [vmem:[#allocation2 + $0x80] sm:$0xff] %vm576, %v595
        %612 = vst.msk [vmem:[#allocation2 + $0x88] sm:$0xff] %vm576, %v596
        %613 = vst.msk [vmem:[#allocation2 + $0x98] sm:$0xff] %vm576, %v597
        %614 = vst.msk [vmem:[#allocation2 + $0xa0] sm:$0xff] %vm576, %v598
        %615 = vst.msk [vmem:[#allocation2 + $0xb0] sm:$0xff] %vm576, %v599
        %616 = vst.msk [vmem:[#allocation2 + $0xb8] sm:$0xff] %vm576, %v600
        %v617 = vld [vmem:[#allocation2 + $0x8] sm:$0xff]
        %v618 = vld [vmem:[#allocation2 + $0x10] sm:$0xff]
        %v619 = vld [vmem:[#allocation2 + $0x20] sm:$0xff]
        %v620 = vld [vmem:[#allocation2 + $0x28] sm:$0xff]
        %v621 = vld [vmem:[#allocation2 + $0x38] sm:$0xff]
        %v622 = vld [vmem:[#allocation2 + $0x40] sm:$0xff]
        %v623 = vld [vmem:[#allocation2 + $0x50] sm:$0xff]
        %v624 = vld [vmem:[#allocation2 + $0x58] sm:$0xff]
        %v625 = vld [vmem:[#allocation2 + $0x68] sm:$0xff]
        %v626 = vld [vmem:[#allocation2 + $0x70] sm:$0xff]
        %v627 = vld [vmem:[#allocation2 + $0x80] sm:$0xff]
        %v628 = vld [vmem:[#allocation2 + $0x88] sm:$0xff]
        %v629 = vld [vmem:[#allocation2 + $0x98] sm:$0xff]
        %v630 = vld [vmem:[#allocation2 + $0xa0] sm:$0xff]
        %v631 = vld [vmem:[#allocation2 + $0xb0] sm:$0xff]
        %v632 = vld [vmem:[#allocation2 + $0xb8] sm:$0xff]
        %v633 = vld [vmem:[#allocation2 + $0x6] sm:$0xff]
        %v634 = vld [vmem:[#allocation2 + $0xe] sm:$0xff]
        %v635 = vld [vmem:[#allocation2 + $0x1e] sm:$0xff]
        %v636 = vld [vmem:[#allocation2 + $0x26] sm:$0xff]
        %v637 = vld [vmem:[#allocation2 + $0x36] sm:$0xff]
        %v638 = vld [vmem:[#allocation2 + $0x3e] sm:$0xff]
        %v639 = vld [vmem:[#allocation2 + $0x4e] sm:$0xff]
        %v640 = vld [vmem:[#allocation2 + $0x56] sm:$0xff]
        %v641 = vld [vmem:[#allocation2 + $0x66] sm:$0xff]
        %v642 = vld [vmem:[#allocation2 + $0x6e] sm:$0xff]
        %v643 = vld [vmem:[#allocation2 + $0x7e] sm:$0xff]
        %v644 = vld [vmem:[#allocation2 + $0x86] sm:$0xff]
        %v645 = vld [vmem:[#allocation2 + $0x96] sm:$0xff]
        %v646 = vld [vmem:[#allocation2 + $0x9e] sm:$0xff]
        %v647 = vld [vmem:[#allocation2 + $0xae] sm:$0xff]
        %v648 = vld [vmem:[#allocation2 + $0xb6] sm:$0xff]
        %v649 = vld [vmem:[#allocation5] sm:$0xff]
        %v650 = vld [vmem:[#allocation5 + $0x8] sm:$0xff]
        %v651 = vld [vmem:[#allocation5 + $0x10] sm:$0xff]
        %v652 = vld [vmem:[#allocation5 + $0x18] sm:$0xff]
        %v653 = vld [vmem:[#allocation2 + $0x7] sm:$0xff]
        %v654 = vld [vmem:[#allocation2 + $0xf] sm:$0xff]
        %v655 = vld [vmem:[#allocation2 + $0x1f] sm:$0xff]
        %v656 = vld [vmem:[#allocation2 + $0x27] sm:$0xff]
        %v657 = vld [vmem:[#allocation2 + $0x37] sm:$0xff]
        %v658 = vld [vmem:[#allocation2 + $0x3f] sm:$0xff]
        %v659 = vld [vmem:[#allocation2 + $0x4f] sm:$0xff]
        %v660 = vld [vmem:[#allocation2 + $0x57] sm:$0xff]
        %v661 = vld [vmem:[#allocation2 + $0x67] sm:$0xff]
        %v662 = vld [vmem:[#allocation2 + $0x6f] sm:$0xff]
        %v663 = vld [vmem:[#allocation2 + $0x7f] sm:$0xff]
        %v664 = vld [vmem:[#allocation2 + $0x87] sm:$0xff]
        %v665 = vld [vmem:[#allocation2 + $0x97] sm:$0xff]
        %v666 = vld [vmem:[#allocation2 + $0x9f] sm:$0xff]
        %v667 = vld [vmem:[#allocation2 + $0xaf] sm:$0xff]
        %v668 = vld [vmem:[#allocation2 + $0xb7] sm:$0xff]
        %s669 = scalar_lea.vmem [#allocation5], 32
        %v670 = vld [vmem:[%s669] sm:$0xff]
        %v671 = vld [vmem:[%s669 + $0x8] sm:$0xff]
        %v672 = vld [vmem:[%s669 + $0x10] sm:$0xff]
        %v673 = vld [vmem:[%s669 + $0x18] sm:$0xff]
        %v675 = vsel %vm576, %v653, 0
        %v678 = vsel %vm576, %v654, 0
        %v681 = vsel %vm576, %v655, 0
        %v684 = vsel %vm576, %v656, 0
        %v687 = vsel %vm576, %v657, 0
        %v690 = vsel %vm576, %v658, 0
        %v693 = vsel %vm576, %v659, 0
        %v696 = vsel %vm576, %v660, 0
        %v699 = vsel %vm576, %v661, 0
        %v702 = vsel %vm576, %v662, 0
        %v705 = vsel %vm576, %v663, 0
        %v708 = vsel %vm576, %v664, 0
        %v711 = vsel %vm576, %v665, 0
        %v714 = vsel %vm576, %v666, 0
        %v717 = vsel %vm576, %v667, 0
        %v720 = vsel %vm576, %v668, 0
        %722 = vmatprep.subr.mxu0 0.0
        %723 = vmatpush1.msra.mxu0 0.0
        %724 = vmatprep.subr.mxu0 0.0
        %725 = vmatpush1.msra.mxu0 0.0
        %726 = vmatprep.subr.mxu0 0.0
        %727 = vmatpush1.msra.mxu0 0.0
        %728 = vmatprep.subr.mxu0 0.0
        %729 = vmatpush1.msra.mxu0 0.0
        %730 = vmatprep.subr.mxu0 0.0
        %731 = vmatpush1.msra.mxu0 0.0
        %732 = vmatprep.subr.mxu0 0.0
        %733 = vmatpush1.msra.mxu0 0.0
        %734 = vmatprep.subr.mxu0 0.0
        %735 = vmatpush1.msra.mxu0 0.0
        %736 = vmatprep.subr.mxu0 0.0
        %737 = vmatpush1.msra.mxu0 0.0
        %738 = vmatprep.subr.mxu0 0.0
        %739 = vmatpush1.msra.mxu0 0.0
        %740 = vmatprep.subr.mxu0 0.0
        %741 = vmatpush1.msra.mxu0 0.0
        %742 = vmatprep.subr.mxu0 0.0
        %743 = vmatpush1.msra.mxu0 0.0
        %744 = vmatprep.subr.mxu0 0.0
        %745 = vmatpush1.msra.mxu0 0.0
        %746 = vmatprep.subr.mxu0 0.0
        %747 = vmatpush1.msra.mxu0 %v673
        %748 = vmatprep.subr.mxu0 0.0
        %749 = vmatpush1.msra.mxu0 %v672
        %750 = vmatprep.subr.mxu0 0.0
        %751 = vmatpush1.msra.mxu0 %v671
        %752 = vmatprep.subr.mxu0 0.0
        %753 = vmatpush1.msra.mxu0 %v670
        %754 = vmatprep.subr.mxu0 0.0
        %755 = vmatpush2.msra.mxu0 0.0
        %756 = vmatprep.subr.mxu0 0.0
        %757 = vmatpush2.msra.mxu0 0.0
        %758 = vmatprep.subr.mxu0 0.0
        %759 = vmatpush2.msra.mxu0 0.0
        %760 = vmatprep.subr.mxu0 0.0
        %761 = vmatpush2.msra.mxu0 0.0
        %762 = vmatprep.subr.mxu0 0.0
        %763 = vmatpush2.msra.mxu0 0.0
        %764 = vmatprep.subr.mxu0 0.0
        %765 = vmatpush2.msra.mxu0 0.0
        %766 = vmatprep.subr.mxu0 0.0
        %767 = vmatpush2.msra.mxu0 0.0
        %768 = vmatprep.subr.mxu0 0.0
        %769 = vmatpush2.msra.mxu0 0.0
        %770 = vmatprep.subr.mxu0 0.0
        %771 = vmatpush2.msra.mxu0 0.0
        %772 = vmatprep.subr.mxu0 0.0
        %773 = vmatpush2.msra.mxu0 0.0
        %774 = vmatprep.subr.mxu0 0.0
        %775 = vmatpush2.msra.mxu0 0.0
        %776 = vmatprep.subr.mxu0 0.0
        %777 = vmatpush2.msra.mxu0 0.0
        %778 = vmatprep.subr.mxu0 0.0
        %779 = vmatpush2.msra.mxu0 0.0
        %780 = vmatprep.subr.mxu0 0.0
        %781 = vmatpush2.msra.mxu0 0.0
        %782 = vmatprep.subr.mxu0 0.0
        %783 = vmatpush2.msra.mxu0 0.0
        %784 = vmatprep.subr.mxu0 0.0
        %785 = vmatpush2.msra.mxu0 0.0
        %786 = vmatprep.mubr.f32.mxu0 0.0
        %787 = vmatmul.mubr.f32.gmra.mxu0 %v675
        %v788 = vpop.f32.mrf.mxu0
        %v789 = vadd.f32 0.0, %v788
        %v790 = vpop.f32.mrf.mxu0
        %791 = vmatprep.mubr.f32.mxu0 0.0
        %792 = vmatmul.mubr.f32.gmra.mxu0 %v678
        %v793 = vpop.f32.mrf.mxu0
        %v794 = vadd.f32 0.0, %v793
        %v795 = vpop.f32.mrf.mxu0
        %796 = vmatprep.mubr.f32.mxu0 0.0
        %797 = vmatmul.mubr.f32.gmra.mxu0 %v681
        %v798 = vpop.f32.mrf.mxu0
        %v799 = vadd.f32 0.0, %v798
        %v800 = vpop.f32.mrf.mxu0
        %801 = vmatprep.mubr.f32.mxu0 0.0
        %802 = vmatmul.mubr.f32.gmra.mxu0 %v684
        %v803 = vpop.f32.mrf.mxu0
        %v804 = vadd.f32 0.0, %v803
        %v805 = vpop.f32.mrf.mxu0
        %806 = vmatprep.mubr.f32.mxu0 0.0
        %807 = vmatmul.mubr.f32.gmra.mxu0 %v687
        %v808 = vpop.f32.mrf.mxu0
        %v809 = vadd.f32 0.0, %v808
        %v810 = vpop.f32.mrf.mxu0
        %811 = vmatprep.mubr.f32.mxu0 0.0
        %812 = vmatmul.mubr.f32.gmra.mxu0 %v690
        %v813 = vpop.f32.mrf.mxu0
        %v814 = vadd.f32 0.0, %v813
        %v815 = vpop.f32.mrf.mxu0
        %816 = vmatprep.mubr.f32.mxu0 0.0
        %817 = vmatmul.mubr.f32.gmra.mxu0 %v693
        %v818 = vpop.f32.mrf.mxu0
        %v819 = vadd.f32 0.0, %v818
        %v820 = vpop.f32.mrf.mxu0
        %821 = vmatprep.mubr.f32.mxu0 0.0
        %822 = vmatmul.mubr.f32.gmra.mxu0 %v696
        %v823 = vpop.f32.mrf.mxu0
        %v824 = vadd.f32 0.0, %v823
        %v825 = vpop.f32.mrf.mxu0
        %826 = vmatprep.mubr.f32.mxu0 0.0
        %827 = vmatmul.mubr.f32.gmra.mxu0 %v699
        %v828 = vpop.f32.mrf.mxu0
        %v829 = vadd.f32 0.0, %v828
        %v830 = vpop.f32.mrf.mxu0
        %831 = vmatprep.mubr.f32.mxu0 0.0
        %832 = vmatmul.mubr.f32.gmra.mxu0 %v702
        %v833 = vpop.f32.mrf.mxu0
        %v834 = vadd.f32 0.0, %v833
        %v835 = vpop.f32.mrf.mxu0
        %836 = vmatprep.mubr.f32.mxu0 0.0
        %837 = vmatmul.mubr.f32.gmra.mxu0 %v705
        %v838 = vpop.f32.mrf.mxu0
        %v839 = vadd.f32 0.0, %v838
        %v840 = vpop.f32.mrf.mxu0
        %841 = vmatprep.mubr.f32.mxu0 0.0
        %842 = vmatmul.mubr.f32.gmra.mxu0 %v708
        %v843 = vpop.f32.mrf.mxu0
        %v844 = vadd.f32 0.0, %v843
        %v845 = vpop.f32.mrf.mxu0
        %846 = vmatprep.mubr.f32.mxu0 0.0
        %847 = vmatmul.mubr.f32.gmra.mxu0 %v711
        %v848 = vpop.f32.mrf.mxu0
        %v849 = vadd.f32 0.0, %v848
        %v850 = vpop.f32.mrf.mxu0
        %851 = vmatprep.mubr.f32.mxu0 0.0
        %852 = vmatmul.mubr.f32.gmra.mxu0 %v714
        %v853 = vpop.f32.mrf.mxu0
        %v854 = vadd.f32 0.0, %v853
        %v855 = vpop.f32.mrf.mxu0
        %856 = vmatprep.mubr.f32.mxu0 0.0
        %857 = vmatmul.mubr.f32.gmra.mxu0 %v717
        %v858 = vpop.f32.mrf.mxu0
        %v859 = vadd.f32 0.0, %v858
        %v860 = vpop.f32.mrf.mxu0
        %861 = vmatprep.mubr.f32.mxu0 0.0
        %862 = vmatmul.mubr.f32.gmra.mxu0 %v720
        %v863 = vpop.f32.mrf.mxu0
        %v864 = vadd.f32 0.0, %v863
        %v865 = vpop.f32.mrf.mxu0
        %866 = vdwg.mxu0
        %v868 = vsel %vm576, %v633, 0
        %v871 = vsel %vm576, %v634, 0
        %v874 = vsel %vm576, %v635, 0
        %v877 = vsel %vm576, %v636, 0
        %v880 = vsel %vm576, %v637, 0
        %v883 = vsel %vm576, %v638, 0
        %v886 = vsel %vm576, %v639, 0
        %v889 = vsel %vm576, %v640, 0
        %v892 = vsel %vm576, %v641, 0
        %v895 = vsel %vm576, %v642, 0
        %v898 = vsel %vm576, %v643, 0
        %v901 = vsel %vm576, %v644, 0
        %v904 = vsel %vm576, %v645, 0
        %v907 = vsel %vm576, %v646, 0
        %v910 = vsel %vm576, %v647, 0
        %v913 = vsel %vm576, %v648, 0
        %915 = vmatprep.subr.mxu0 0.0
        %916 = vmatpush1.msra.mxu0 0.0
        %917 = vmatprep.subr.mxu0 0.0
        %918 = vmatpush1.msra.mxu0 0.0
        %919 = vmatprep.subr.mxu0 0.0
        %920 = vmatpush1.msra.mxu0 0.0
        %921 = vmatprep.subr.mxu0 0.0
        %922 = vmatpush1.msra.mxu0 0.0
        %923 = vmatprep.subr.mxu0 0.0
        %924 = vmatpush1.msra.mxu0 0.0
        %925 = vmatprep.subr.mxu0 0.0
        %926 = vmatpush1.msra.mxu0 0.0
        %927 = vmatprep.subr.mxu0 0.0
        %928 = vmatpush1.msra.mxu0 0.0
        %929 = vmatprep.subr.mxu0 0.0
        %930 = vmatpush1.msra.mxu0 0.0
        %931 = vmatprep.subr.mxu0 0.0
        %932 = vmatpush1.msra.mxu0 0.0
        %933 = vmatprep.subr.mxu0 0.0
        %934 = vmatpush1.msra.mxu0 0.0
        %935 = vmatprep.subr.mxu0 0.0
        %936 = vmatpush1.msra.mxu0 0.0
        %937 = vmatprep.subr.mxu0 0.0
        %938 = vmatpush1.msra.mxu0 0.0
        %939 = vmatprep.subr.mxu0 0.0
        %940 = vmatpush1.msra.mxu0 %v652
        %941 = vmatprep.subr.mxu0 0.0
        %942 = vmatpush1.msra.mxu0 %v651
        %943 = vmatprep.subr.mxu0 0.0
        %944 = vmatpush1.msra.mxu0 %v650
        %945 = vmatprep.subr.mxu0 0.0
        %946 = vmatpush1.msra.mxu0 %v649
        %947 = vmatprep.subr.mxu0 0.0
        %948 = vmatpush2.msra.mxu0 0.0
        %949 = vmatprep.subr.mxu0 0.0
        %950 = vmatpush2.msra.mxu0 0.0
        %951 = vmatprep.subr.mxu0 0.0
        %952 = vmatpush2.msra.mxu0 0.0
        %953 = vmatprep.subr.mxu0 0.0
        %954 = vmatpush2.msra.mxu0 0.0
        %955 = vmatprep.subr.mxu0 0.0
        %956 = vmatpush2.msra.mxu0 0.0
        %957 = vmatprep.subr.mxu0 0.0
        %958 = vmatpush2.msra.mxu0 0.0
        %959 = vmatprep.subr.mxu0 0.0
        %960 = vmatpush2.msra.mxu0 0.0
        %961 = vmatprep.subr.mxu0 0.0
        %962 = vmatpush2.msra.mxu0 0.0
        %963 = vmatprep.subr.mxu0 0.0
        %964 = vmatpush2.msra.mxu0 0.0
        %965 = vmatprep.subr.mxu0 0.0
        %966 = vmatpush2.msra.mxu0 0.0
        %967 = vmatprep.subr.mxu0 0.0
        %968 = vmatpush2.msra.mxu0 0.0
        %969 = vmatprep.subr.mxu0 0.0
        %970 = vmatpush2.msra.mxu0 0.0
        %971 = vmatprep.subr.mxu0 0.0
        %972 = vmatpush2.msra.mxu0 0.0
        %973 = vmatprep.subr.mxu0 0.0
        %974 = vmatpush2.msra.mxu0 0.0
        %975 = vmatprep.subr.mxu0 0.0
        %976 = vmatpush2.msra.mxu0 0.0
        %977 = vmatprep.subr.mxu0 0.0
        %978 = vmatpush2.msra.mxu0 0.0
        %979 = vmatprep.mubr.f32.mxu0 0.0
        %980 = vmatmul.mubr.f32.gmra.mxu0 %v868
        %v981 = vpop.f32.mrf.mxu0
        %v982 = vadd.f32 %v789, %v981
        %v983 = vpop.f32.mrf.mxu0
        %984 = vmatprep.mubr.f32.mxu0 0.0
        %985 = vmatmul.mubr.f32.gmra.mxu0 %v871
        %v986 = vpop.f32.mrf.mxu0
        %v987 = vadd.f32 %v794, %v986
        %v988 = vpop.f32.mrf.mxu0
        %989 = vmatprep.mubr.f32.mxu0 0.0
        %990 = vmatmul.mubr.f32.gmra.mxu0 %v874
        %v991 = vpop.f32.mrf.mxu0
        %v992 = vadd.f32 %v799, %v991
        %v993 = vpop.f32.mrf.mxu0
        %994 = vmatprep.mubr.f32.mxu0 0.0
        %995 = vmatmul.mubr.f32.gmra.mxu0 %v877
        %v996 = vpop.f32.mrf.mxu0
        %v997 = vadd.f32 %v804, %v996
        %v998 = vpop.f32.mrf.mxu0
        %999 = vmatprep.mubr.f32.mxu0 0.0
        %1000 = vmatmul.mubr.f32.gmra.mxu0 %v880
        %v1001 = vpop.f32.mrf.mxu0
        %v1002 = vadd.f32 %v809, %v1001
        %v1003 = vpop.f32.mrf.mxu0
        %1004 = vmatprep.mubr.f32.mxu0 0.0
        %1005 = vmatmul.mubr.f32.gmra.mxu0 %v883
        %v1006 = vpop.f32.mrf.mxu0
        %v1007 = vadd.f32 %v814, %v1006
        %v1008 = vpop.f32.mrf.mxu0
        %1009 = vmatprep.mubr.f32.mxu0 0.0
        %1010 = vmatmul.mubr.f32.gmra.mxu0 %v886
        %v1011 = vpop.f32.mrf.mxu0
        %v1012 = vadd.f32 %v819, %v1011
        %v1013 = vpop.f32.mrf.mxu0
        %1014 = vmatprep.mubr.f32.mxu0 0.0
        %1015 = vmatmul.mubr.f32.gmra.mxu0 %v889
        %v1016 = vpop.f32.mrf.mxu0
        %v1017 = vadd.f32 %v824, %v1016
        %v1018 = vpop.f32.mrf.mxu0
        %1019 = vmatprep.mubr.f32.mxu0 0.0
        %1020 = vmatmul.mubr.f32.gmra.mxu0 %v892
        %v1021 = vpop.f32.mrf.mxu0
        %v1022 = vadd.f32 %v829, %v1021
        %v1023 = vpop.f32.mrf.mxu0
        %1024 = vmatprep.mubr.f32.mxu0 0.0
        %1025 = vmatmul.mubr.f32.gmra.mxu0 %v895
        %v1026 = vpop.f32.mrf.mxu0
        %v1027 = vadd.f32 %v834, %v1026
        %v1028 = vpop.f32.mrf.mxu0
        %1029 = vmatprep.mubr.f32.mxu0 0.0
        %1030 = vmatmul.mubr.f32.gmra.mxu0 %v898
        %v1031 = vpop.f32.mrf.mxu0
        %v1032 = vadd.f32 %v839, %v1031
        %v1033 = vpop.f32.mrf.mxu0
        %1034 = vmatprep.mubr.f32.mxu0 0.0
        %1035 = vmatmul.mubr.f32.gmra.mxu0 %v901
        %v1036 = vpop.f32.mrf.mxu0
        %v1037 = vadd.f32 %v844, %v1036
        %v1038 = vpop.f32.mrf.mxu0
        %1039 = vmatprep.mubr.f32.mxu0 0.0
        %1040 = vmatmul.mubr.f32.gmra.mxu0 %v904
        %v1041 = vpop.f32.mrf.mxu0
        %v1042 = vadd.f32 %v849, %v1041
        %v1043 = vpop.f32.mrf.mxu0
        %1044 = vmatprep.mubr.f32.mxu0 0.0
        %1045 = vmatmul.mubr.f32.gmra.mxu0 %v907
        %v1046 = vpop.f32.mrf.mxu0
        %v1047 = vadd.f32 %v854, %v1046
        %v1048 = vpop.f32.mrf.mxu0
        %1049 = vmatprep.mubr.f32.mxu0 0.0
        %1050 = vmatmul.mubr.f32.gmra.mxu0 %v910
        %v1051 = vpop.f32.mrf.mxu0
        %v1052 = vadd.f32 %v859, %v1051
        %v1053 = vpop.f32.mrf.mxu0
        %1054 = vmatprep.mubr.f32.mxu0 0.0
        %1055 = vmatmul.mubr.f32.gmra.mxu0 %v913
        %v1056 = vpop.f32.mrf.mxu0
        %v1057 = vadd.f32 %v864, %v1056
        %v1058 = vpop.f32.mrf.mxu0
        %1059 = vdwg.mxu0
        %s1060 = scalar_lea.vmem [#allocation5], 64
        %v1061 = vld [vmem:[%s1060] sm:$0xff]
        %v1062 = vld [vmem:[%s1060 + $0x8] sm:$0xff]
        %v1063 = vld [vmem:[%s1060 + $0x10] sm:$0xff]
        %v1064 = vld [vmem:[%s1060 + $0x18] sm:$0xff]
        %v1066 = vsel %vm576, %v617, 0
        %v1069 = vsel %vm576, %v618, 0
        %v1072 = vsel %vm576, %v619, 0
        %v1075 = vsel %vm576, %v620, 0
        %v1078 = vsel %vm576, %v621, 0
        %v1081 = vsel %vm576, %v622, 0
        %v1084 = vsel %vm576, %v623, 0
        %v1087 = vsel %vm576, %v624, 0
        %v1090 = vsel %vm576, %v625, 0
        %v1093 = vsel %vm576, %v626, 0
        %v1096 = vsel %vm576, %v627, 0
        %v1099 = vsel %vm576, %v628, 0
        %v1102 = vsel %vm576, %v629, 0
        %v1105 = vsel %vm576, %v630, 0
        %v1108 = vsel %vm576, %v631, 0
        %v1111 = vsel %vm576, %v632, 0
        %1113 = vmatprep.subr.mxu0 0.0
        %1114 = vmatpush1.msra.mxu0 0.0
        %1115 = vmatprep.subr.mxu0 0.0
        %1116 = vmatpush1.msra.mxu0 0.0
        %1117 = vmatprep.subr.mxu0 0.0
        %1118 = vmatpush1.msra.mxu0 0.0
        %1119 = vmatprep.subr.mxu0 0.0
        %1120 = vmatpush1.msra.mxu0 0.0
        %1121 = vmatprep.subr.mxu0 0.0
        %1122 = vmatpush1.msra.mxu0 0.0
        %1123 = vmatprep.subr.mxu0 0.0
        %1124 = vmatpush1.msra.mxu0 0.0
        %1125 = vmatprep.subr.mxu0 0.0
        %1126 = vmatpush1.msra.mxu0 0.0
        %1127 = vmatprep.subr.mxu0 0.0
        %1128 = vmatpush1.msra.mxu0 0.0
        %1129 = vmatprep.subr.mxu0 0.0
        %1130 = vmatpush1.msra.mxu0 0.0
        %1131 = vmatprep.subr.mxu0 0.0
        %1132 = vmatpush1.msra.mxu0 0.0
        %1133 = vmatprep.subr.mxu0 0.0
        %1134 = vmatpush1.msra.mxu0 0.0
        %1135 = vmatprep.subr.mxu0 0.0
        %1136 = vmatpush1.msra.mxu0 0.0
        %1137 = vmatprep.subr.mxu0 0.0
        %1138 = vmatpush1.msra.mxu0 %v1064
        %1139 = vmatprep.subr.mxu0 0.0
        %1140 = vmatpush1.msra.mxu0 %v1063
        %1141 = vmatprep.subr.mxu0 0.0
        %1142 = vmatpush1.msra.mxu0 %v1062
        %1143 = vmatprep.subr.mxu0 0.0
        %1144 = vmatpush1.msra.mxu0 %v1061
        %1145 = vmatprep.subr.mxu0 0.0
        %1146 = vmatpush2.msra.mxu0 0.0
        %1147 = vmatprep.subr.mxu0 0.0
        %1148 = vmatpush2.msra.mxu0 0.0
        %1149 = vmatprep.subr.mxu0 0.0
        %1150 = vmatpush2.msra.mxu0 0.0
        %1151 = vmatprep.subr.mxu0 0.0
        %1152 = vmatpush2.msra.mxu0 0.0
        %1153 = vmatprep.subr.mxu0 0.0
        %1154 = vmatpush2.msra.mxu0 0.0
        %1155 = vmatprep.subr.mxu0 0.0
        %1156 = vmatpush2.msra.mxu0 0.0
        %1157 = vmatprep.subr.mxu0 0.0
        %1158 = vmatpush2.msra.mxu0 0.0
        %1159 = vmatprep.subr.mxu0 0.0
        %1160 = vmatpush2.msra.mxu0 0.0
        %1161 = vmatprep.subr.mxu0 0.0
        %1162 = vmatpush2.msra.mxu0 0.0
        %1163 = vmatprep.subr.mxu0 0.0
        %1164 = vmatpush2.msra.mxu0 0.0
        %1165 = vmatprep.subr.mxu0 0.0
        %1166 = vmatpush2.msra.mxu0 0.0
        %1167 = vmatprep.subr.mxu0 0.0
        %1168 = vmatpush2.msra.mxu0 0.0
        %1169 = vmatprep.subr.mxu0 0.0
        %1170 = vmatpush2.msra.mxu0 0.0
        %1171 = vmatprep.subr.mxu0 0.0
        %1172 = vmatpush2.msra.mxu0 0.0
        %1173 = vmatprep.subr.mxu0 0.0
        %1174 = vmatpush2.msra.mxu0 0.0
        %1175 = vmatprep.subr.mxu0 0.0
        %1176 = vmatpush2.msra.mxu0 0.0
        %1177 = vmatprep.mubr.f32.mxu0 0.0
        %1178 = vmatmul.mubr.f32.gmra.mxu0 %v1066
        %v1179 = vpop.f32.mrf.mxu0
        %v1180 = vadd.f32 0.0, %v1179
        %v1181 = vpop.f32.mrf.mxu0
        %1182 = vmatprep.mubr.f32.mxu0 0.0
        %1183 = vmatmul.mubr.f32.gmra.mxu0 %v1069
        %v1184 = vpop.f32.mrf.mxu0
        %v1185 = vadd.f32 0.0, %v1184
        %v1186 = vpop.f32.mrf.mxu0
        %1187 = vmatprep.mubr.f32.mxu0 0.0
        %1188 = vmatmul.mubr.f32.gmra.mxu0 %v1072
        %v1189 = vpop.f32.mrf.mxu0
        %v1190 = vadd.f32 0.0, %v1189
        %v1191 = vpop.f32.mrf.mxu0
        %1192 = vmatprep.mubr.f32.mxu0 0.0
        %1193 = vmatmul.mubr.f32.gmra.mxu0 %v1075
        %v1194 = vpop.f32.mrf.mxu0
        %v1195 = vadd.f32 0.0, %v1194
        %v1196 = vpop.f32.mrf.mxu0
        %1197 = vmatprep.mubr.f32.mxu0 0.0
        %1198 = vmatmul.mubr.f32.gmra.mxu0 %v1078
        %v1199 = vpop.f32.mrf.mxu0
        %v1200 = vadd.f32 0.0, %v1199
        %v1201 = vpop.f32.mrf.mxu0
        %1202 = vmatprep.mubr.f32.mxu0 0.0
        %1203 = vmatmul.mubr.f32.gmra.mxu0 %v1081
        %v1204 = vpop.f32.mrf.mxu0
        %v1205 = vadd.f32 0.0, %v1204
        %v1206 = vpop.f32.mrf.mxu0
        %1207 = vmatprep.mubr.f32.mxu0 0.0
        %1208 = vmatmul.mubr.f32.gmra.mxu0 %v1084
        %v1209 = vpop.f32.mrf.mxu0
        %v1210 = vadd.f32 0.0, %v1209
        %v1211 = vpop.f32.mrf.mxu0
        %1212 = vmatprep.mubr.f32.mxu0 0.0
        %1213 = vmatmul.mubr.f32.gmra.mxu0 %v1087
        %v1214 = vpop.f32.mrf.mxu0
        %v1215 = vadd.f32 0.0, %v1214
        %v1216 = vpop.f32.mrf.mxu0
        %1217 = vmatprep.mubr.f32.mxu0 0.0
        %1218 = vmatmul.mubr.f32.gmra.mxu0 %v1090
        %v1219 = vpop.f32.mrf.mxu0
        %v1220 = vadd.f32 0.0, %v1219
        %v1221 = vpop.f32.mrf.mxu0
        %1222 = vmatprep.mubr.f32.mxu0 0.0
        %1223 = vmatmul.mubr.f32.gmra.mxu0 %v1093
        %v1224 = vpop.f32.mrf.mxu0
        %v1225 = vadd.f32 0.0, %v1224
        %v1226 = vpop.f32.mrf.mxu0
        %1227 = vmatprep.mubr.f32.mxu0 0.0
        %1228 = vmatmul.mubr.f32.gmra.mxu0 %v1096
        %v1229 = vpop.f32.mrf.mxu0
        %v1230 = vadd.f32 0.0, %v1229
        %v1231 = vpop.f32.mrf.mxu0
        %1232 = vmatprep.mubr.f32.mxu0 0.0
        %1233 = vmatmul.mubr.f32.gmra.mxu0 %v1099
        %v1234 = vpop.f32.mrf.mxu0
        %v1235 = vadd.f32 0.0, %v1234
        %v1236 = vpop.f32.mrf.mxu0
        %1237 = vmatprep.mubr.f32.mxu0 0.0
        %1238 = vmatmul.mubr.f32.gmra.mxu0 %v1102
        %v1239 = vpop.f32.mrf.mxu0
        %v1240 = vadd.f32 0.0, %v1239
        %v1241 = vpop.f32.mrf.mxu0
        %1242 = vmatprep.mubr.f32.mxu0 0.0
        %1243 = vmatmul.mubr.f32.gmra.mxu0 %v1105
        %v1244 = vpop.f32.mrf.mxu0
        %v1245 = vadd.f32 0.0, %v1244
        %v1246 = vpop.f32.mrf.mxu0
        %1247 = vmatprep.mubr.f32.mxu0 0.0
        %1248 = vmatmul.mubr.f32.gmra.mxu0 %v1108
        %v1249 = vpop.f32.mrf.mxu0
        %v1250 = vadd.f32 0.0, %v1249
        %v1251 = vpop.f32.mrf.mxu0
        %1252 = vmatprep.mubr.f32.mxu0 0.0
        %1253 = vmatmul.mubr.f32.gmra.mxu0 %v1111
        %v1254 = vpop.f32.mrf.mxu0
        %v1255 = vadd.f32 0.0, %v1254
        %v1256 = vpop.f32.mrf.mxu0
        %1257 = vdwg.mxu0
        %v1258 = vadd.f32 %v982, %v1180
        %v1259 = vadd.f32 %v987, %v1185
        %v1260 = vadd.f32 %v992, %v1190
        %v1261 = vadd.f32 %v997, %v1195
        %v1262 = vadd.f32 %v1002, %v1200
        %v1263 = vadd.f32 %v1007, %v1205
        %v1264 = vadd.f32 %v1012, %v1210
        %v1265 = vadd.f32 %v1017, %v1215
        %v1266 = vadd.f32 %v1022, %v1220
        %v1267 = vadd.f32 %v1027, %v1225
        %v1268 = vadd.f32 %v1032, %v1230
        %v1269 = vadd.f32 %v1037, %v1235
        %v1270 = vadd.f32 %v1042, %v1240
        %v1271 = vadd.f32 %v1047, %v1245
        %v1272 = vadd.f32 %v1052, %v1250
        %v1273 = vadd.f32 %v1057, %v1255
        %v1274 = vld [vmem:[%s3] sm:$0x1]
        %v1276 = vlaneseq
        %v1277 = vshrl.u32 %v1276, 7
        %v1278 = vsub.s32 0, %v1277
        %v1279 = vrot.slane %v1274, %v1278
        %v1281 = vadd.f32 %v1258, %v1279
        %v1282 = vadd.f32 %v1259, %v1279
        %v1283 = vadd.f32 %v1260, %v1279
        %v1284 = vadd.f32 %v1261, %v1279
        %v1285 = vadd.f32 %v1262, %v1279
        %v1286 = vadd.f32 %v1263, %v1279
        %v1287 = vadd.f32 %v1264, %v1279
        %v1288 = vadd.f32 %v1265, %v1279
        %v1289 = vadd.f32 %v1266, %v1279
        %v1290 = vadd.f32 %v1267, %v1279
        %v1291 = vadd.f32 %v1268, %v1279
        %v1292 = vadd.f32 %v1269, %v1279
        %v1293 = vadd.f32 %v1270, %v1279
        %v1294 = vadd.f32 %v1271, %v1279
        %v1295 = vadd.f32 %v1272, %v1279
        %v1296 = vadd.f32 %v1273, %v1279
        %v1297 = vmax.f32 %v1281, 0.0
        %v1298 = vmax.f32 %v1282, 0.0
        %v1299 = vmax.f32 %v1283, 0.0
        %v1300 = vmax.f32 %v1284, 0.0
        %v1301 = vmax.f32 %v1285, 0.0
        %v1302 = vmax.f32 %v1286, 0.0
        %v1303 = vmax.f32 %v1287, 0.0
        %v1304 = vmax.f32 %v1288, 0.0
        %v1305 = vmax.f32 %v1289, 0.0
        %v1306 = vmax.f32 %v1290, 0.0
        %v1307 = vmax.f32 %v1291, 0.0
        %v1308 = vmax.f32 %v1292, 0.0
        %v1309 = vmax.f32 %v1293, 0.0
        %v1310 = vmax.f32 %v1294, 0.0
        %v1311 = vmax.f32 %v1295, 0.0
        %v1312 = vmax.f32 %v1296, 0.0
        %1313 = vst.msk [vmem:[#allocation2 + $0x8] sm:$0xff] %vm576, %v1297
        %1314 = vst.msk [vmem:[#allocation2 + $0x10] sm:$0xff] %vm576, %v1298
        %1315 = vst.msk [vmem:[#allocation2 + $0x20] sm:$0xff] %vm576, %v1299
        %1316 = vst.msk [vmem:[#allocation2 + $0x28] sm:$0xff] %vm576, %v1300
        %1317 = vst.msk [vmem:[#allocation2 + $0x38] sm:$0xff] %vm576, %v1301
        %1318 = vst.msk [vmem:[#allocation2 + $0x40] sm:$0xff] %vm576, %v1302
        %1319 = vst.msk [vmem:[#allocation2 + $0x50] sm:$0xff] %vm576, %v1303
        %1320 = vst.msk [vmem:[#allocation2 + $0x58] sm:$0xff] %vm576, %v1304
        %1321 = vst.msk [vmem:[#allocation2 + $0x68] sm:$0xff] %vm576, %v1305
        %1322 = vst.msk [vmem:[#allocation2 + $0x70] sm:$0xff] %vm576, %v1306
        %1323 = vst.msk [vmem:[#allocation2 + $0x80] sm:$0xff] %vm576, %v1307
        %1324 = vst.msk [vmem:[#allocation2 + $0x88] sm:$0xff] %vm576, %v1308
        %1325 = vst.msk [vmem:[#allocation2 + $0x98] sm:$0xff] %vm576, %v1309
        %1326 = vst.msk [vmem:[#allocation2 + $0xa0] sm:$0xff] %vm576, %v1310
        %1327 = vst.msk [vmem:[#allocation2 + $0xb0] sm:$0xff] %vm576, %v1311
        %1328 = vst.msk [vmem:[#allocation2 + $0xb8] sm:$0xff] %vm576, %v1312
        %v1329 = vld [vmem:[#allocation2 + $0x6] sm:$0xff]
        %v1330 = vld [vmem:[#allocation2 + $0xe] sm:$0xff]
        %v1331 = vld [vmem:[#allocation2 + $0x1e] sm:$0xff]
        %v1332 = vld [vmem:[#allocation2 + $0x26] sm:$0xff]
        %v1333 = vld [vmem:[#allocation2 + $0x36] sm:$0xff]
        %v1334 = vld [vmem:[#allocation2 + $0x3e] sm:$0xff]
        %v1335 = vld [vmem:[#allocation2 + $0x4e] sm:$0xff]
        %v1336 = vld [vmem:[#allocation2 + $0x56] sm:$0xff]
        %v1337 = vld [vmem:[#allocation2 + $0x66] sm:$0xff]
        %v1338 = vld [vmem:[#allocation2 + $0x6e] sm:$0xff]
        %v1339 = vld [vmem:[#allocation2 + $0x7e] sm:$0xff]
        %v1340 = vld [vmem:[#allocation2 + $0x86] sm:$0xff]
        %v1341 = vld [vmem:[#allocation2 + $0x96] sm:$0xff]
        %v1342 = vld [vmem:[#allocation2 + $0x9e] sm:$0xff]
        %v1343 = vld [vmem:[#allocation2 + $0xae] sm:$0xff]
        %v1344 = vld [vmem:[#allocation2 + $0xb6] sm:$0xff]
        %v1345 = vld [vmem:[#allocation7] sm:$0xff]
        %v1346 = vld [vmem:[#allocation7 + $0x8] sm:$0xff]
        %v1347 = vld [vmem:[#allocation7 + $0x10] sm:$0xff]
        %v1348 = vld [vmem:[#allocation7 + $0x18] sm:$0xff]
        %v1349 = vld [vmem:[#allocation2 + $0x7] sm:$0xff]
        %v1350 = vld [vmem:[#allocation2 + $0xf] sm:$0xff]
        %v1351 = vld [vmem:[#allocation2 + $0x1f] sm:$0xff]
        %v1352 = vld [vmem:[#allocation2 + $0x27] sm:$0xff]
        %v1353 = vld [vmem:[#allocation2 + $0x37] sm:$0xff]
        %v1354 = vld [vmem:[#allocation2 + $0x3f] sm:$0xff]
        %v1355 = vld [vmem:[#allocation2 + $0x4f] sm:$0xff]
        %v1356 = vld [vmem:[#allocation2 + $0x57] sm:$0xff]
        %v1357 = vld [vmem:[#allocation2 + $0x67] sm:$0xff]
        %v1358 = vld [vmem:[#allocation2 + $0x6f] sm:$0xff]
        %v1359 = vld [vmem:[#allocation2 + $0x7f] sm:$0xff]
        %v1360 = vld [vmem:[#allocation2 + $0x87] sm:$0xff]
        %v1361 = vld [vmem:[#allocation2 + $0x97] sm:$0xff]
        %v1362 = vld [vmem:[#allocation2 + $0x9f] sm:$0xff]
        %v1363 = vld [vmem:[#allocation2 + $0xaf] sm:$0xff]
        %v1364 = vld [vmem:[#allocation2 + $0xb7] sm:$0xff]
        %s1365 = scalar_lea.vmem [#allocation7], 32
        %v1366 = vld [vmem:[%s1365] sm:$0xff]
        %v1367 = vld [vmem:[%s1365 + $0x8] sm:$0xff]
        %v1368 = vld [vmem:[%s1365 + $0x10] sm:$0xff]
        %v1369 = vld [vmem:[%s1365 + $0x18] sm:$0xff]
        %v1371 = vsel %vm576, %v1349, 0
        %v1374 = vsel %vm576, %v1350, 0
        %v1377 = vsel %vm576, %v1351, 0
        %v1380 = vsel %vm576, %v1352, 0
        %v1383 = vsel %vm576, %v1353, 0
        %v1386 = vsel %vm576, %v1354, 0
        %v1389 = vsel %vm576, %v1355, 0
        %v1392 = vsel %vm576, %v1356, 0
        %v1395 = vsel %vm576, %v1357, 0
        %v1398 = vsel %vm576, %v1358, 0
        %v1401 = vsel %vm576, %v1359, 0
        %v1404 = vsel %vm576, %v1360, 0
        %v1407 = vsel %vm576, %v1361, 0
        %v1410 = vsel %vm576, %v1362, 0
        %v1413 = vsel %vm576, %v1363, 0
        %v1416 = vsel %vm576, %v1364, 0
        %1418 = vmatprep.subr.mxu0 0.0
        %1419 = vmatpush1.msra.mxu0 0.0
        %1420 = vmatprep.subr.mxu0 0.0
        %1421 = vmatpush1.msra.mxu0 0.0
        %1422 = vmatprep.subr.mxu0 0.0
        %1423 = vmatpush1.msra.mxu0 0.0
        %1424 = vmatprep.subr.mxu0 0.0
        %1425 = vmatpush1.msra.mxu0 0.0
        %1426 = vmatprep.subr.mxu0 0.0
        %1427 = vmatpush1.msra.mxu0 0.0
        %1428 = vmatprep.subr.mxu0 0.0
        %1429 = vmatpush1.msra.mxu0 0.0
        %1430 = vmatprep.subr.mxu0 0.0
        %1431 = vmatpush1.msra.mxu0 0.0
        %1432 = vmatprep.subr.mxu0 0.0
        %1433 = vmatpush1.msra.mxu0 0.0
        %1434 = vmatprep.subr.mxu0 0.0
        %1435 = vmatpush1.msra.mxu0 0.0
        %1436 = vmatprep.subr.mxu0 0.0
        %1437 = vmatpush1.msra.mxu0 0.0
        %1438 = vmatprep.subr.mxu0 0.0
        %1439 = vmatpush1.msra.mxu0 0.0
        %1440 = vmatprep.subr.mxu0 0.0
        %1441 = vmatpush1.msra.mxu0 0.0
        %1442 = vmatprep.subr.mxu0 0.0
        %1443 = vmatpush1.msra.mxu0 %v1369
        %1444 = vmatprep.subr.mxu0 0.0
        %1445 = vmatpush1.msra.mxu0 %v1368
        %1446 = vmatprep.subr.mxu0 0.0
        %1447 = vmatpush1.msra.mxu0 %v1367
        %1448 = vmatprep.subr.mxu0 0.0
        %1449 = vmatpush1.msra.mxu0 %v1366
        %1450 = vmatprep.subr.mxu0 0.0
        %1451 = vmatpush2.msra.mxu0 0.0
        %1452 = vmatprep.subr.mxu0 0.0
        %1453 = vmatpush2.msra.mxu0 0.0
        %1454 = vmatprep.subr.mxu0 0.0
        %1455 = vmatpush2.msra.mxu0 0.0
        %1456 = vmatprep.subr.mxu0 0.0
        %1457 = vmatpush2.msra.mxu0 0.0
        %1458 = vmatprep.subr.mxu0 0.0
        %1459 = vmatpush2.msra.mxu0 0.0
        %1460 = vmatprep.subr.mxu0 0.0
        %1461 = vmatpush2.msra.mxu0 0.0
        %1462 = vmatprep.subr.mxu0 0.0
        %1463 = vmatpush2.msra.mxu0 0.0
        %1464 = vmatprep.subr.mxu0 0.0
        %1465 = vmatpush2.msra.mxu0 0.0
        %1466 = vmatprep.subr.mxu0 0.0
        %1467 = vmatpush2.msra.mxu0 0.0
        %1468 = vmatprep.subr.mxu0 0.0
        %1469 = vmatpush2.msra.mxu0 0.0
        %1470 = vmatprep.subr.mxu0 0.0
        %1471 = vmatpush2.msra.mxu0 0.0
        %1472 = vmatprep.subr.mxu0 0.0
        %1473 = vmatpush2.msra.mxu0 0.0
        %1474 = vmatprep.subr.mxu0 0.0
        %1475 = vmatpush2.msra.mxu0 0.0
        %1476 = vmatprep.subr.mxu0 0.0
        %1477 = vmatpush2.msra.mxu0 0.0
        %1478 = vmatprep.subr.mxu0 0.0
        %1479 = vmatpush2.msra.mxu0 0.0
        %1480 = vmatprep.subr.mxu0 0.0
        %1481 = vmatpush2.msra.mxu0 0.0
        %1482 = vmatprep.mubr.f32.mxu0 0.0
        %1483 = vmatmul.mubr.f32.gmra.mxu0 %v1371
        %v1484 = vpop.f32.mrf.mxu0
        %v1485 = vadd.f32 0.0, %v1484
        %v1486 = vpop.f32.mrf.mxu0
        %1487 = vmatprep.mubr.f32.mxu0 0.0
        %1488 = vmatmul.mubr.f32.gmra.mxu0 %v1374
        %v1489 = vpop.f32.mrf.mxu0
        %v1490 = vadd.f32 0.0, %v1489
        %v1491 = vpop.f32.mrf.mxu0
        %1492 = vmatprep.mubr.f32.mxu0 0.0
        %1493 = vmatmul.mubr.f32.gmra.mxu0 %v1377
        %v1494 = vpop.f32.mrf.mxu0
        %v1495 = vadd.f32 0.0, %v1494
        %v1496 = vpop.f32.mrf.mxu0
        %1497 = vmatprep.mubr.f32.mxu0 0.0
        %1498 = vmatmul.mubr.f32.gmra.mxu0 %v1380
        %v1499 = vpop.f32.mrf.mxu0
        %v1500 = vadd.f32 0.0, %v1499
        %v1501 = vpop.f32.mrf.mxu0
        %1502 = vmatprep.mubr.f32.mxu0 0.0
        %1503 = vmatmul.mubr.f32.gmra.mxu0 %v1383
        %v1504 = vpop.f32.mrf.mxu0
        %v1505 = vadd.f32 0.0, %v1504
        %v1506 = vpop.f32.mrf.mxu0
        %1507 = vmatprep.mubr.f32.mxu0 0.0
        %1508 = vmatmul.mubr.f32.gmra.mxu0 %v1386
        %v1509 = vpop.f32.mrf.mxu0
        %v1510 = vadd.f32 0.0, %v1509
        %v1511 = vpop.f32.mrf.mxu0
        %1512 = vmatprep.mubr.f32.mxu0 0.0
        %1513 = vmatmul.mubr.f32.gmra.mxu0 %v1389
        %v1514 = vpop.f32.mrf.mxu0
        %v1515 = vadd.f32 0.0, %v1514
        %v1516 = vpop.f32.mrf.mxu0
        %1517 = vmatprep.mubr.f32.mxu0 0.0
        %1518 = vmatmul.mubr.f32.gmra.mxu0 %v1392
        %v1519 = vpop.f32.mrf.mxu0
        %v1520 = vadd.f32 0.0, %v1519
        %v1521 = vpop.f32.mrf.mxu0
        %1522 = vmatprep.mubr.f32.mxu0 0.0
        %1523 = vmatmul.mubr.f32.gmra.mxu0 %v1395
        %v1524 = vpop.f32.mrf.mxu0
        %v1525 = vadd.f32 0.0, %v1524
        %v1526 = vpop.f32.mrf.mxu0
        %1527 = vmatprep.mubr.f32.mxu0 0.0
        %1528 = vmatmul.mubr.f32.gmra.mxu0 %v1398
        %v1529 = vpop.f32.mrf.mxu0
        %v1530 = vadd.f32 0.0, %v1529
        %v1531 = vpop.f32.mrf.mxu0
        %1532 = vmatprep.mubr.f32.mxu0 0.0
        %1533 = vmatmul.mubr.f32.gmra.mxu0 %v1401
        %v1534 = vpop.f32.mrf.mxu0
        %v1535 = vadd.f32 0.0, %v1534
        %v1536 = vpop.f32.mrf.mxu0
        %1537 = vmatprep.mubr.f32.mxu0 0.0
        %1538 = vmatmul.mubr.f32.gmra.mxu0 %v1404
        %v1539 = vpop.f32.mrf.mxu0
        %v1540 = vadd.f32 0.0, %v1539
        %v1541 = vpop.f32.mrf.mxu0
        %1542 = vmatprep.mubr.f32.mxu0 0.0
        %1543 = vmatmul.mubr.f32.gmra.mxu0 %v1407
        %v1544 = vpop.f32.mrf.mxu0
        %v1545 = vadd.f32 0.0, %v1544
        %v1546 = vpop.f32.mrf.mxu0
        %1547 = vmatprep.mubr.f32.mxu0 0.0
        %1548 = vmatmul.mubr.f32.gmra.mxu0 %v1410
        %v1549 = vpop.f32.mrf.mxu0
        %v1550 = vadd.f32 0.0, %v1549
        %v1551 = vpop.f32.mrf.mxu0
        %1552 = vmatprep.mubr.f32.mxu0 0.0
        %1553 = vmatmul.mubr.f32.gmra.mxu0 %v1413
        %v1554 = vpop.f32.mrf.mxu0
        %v1555 = vadd.f32 0.0, %v1554
        %v1556 = vpop.f32.mrf.mxu0
        %1557 = vmatprep.mubr.f32.mxu0 0.0
        %1558 = vmatmul.mubr.f32.gmra.mxu0 %v1416
        %v1559 = vpop.f32.mrf.mxu0
        %v1560 = vadd.f32 0.0, %v1559
        %v1561 = vpop.f32.mrf.mxu0
        %1562 = vdwg.mxu0
        %v1564 = vsel %vm576, %v1329, 0
        %v1567 = vsel %vm576, %v1330, 0
        %v1570 = vsel %vm576, %v1331, 0
        %v1573 = vsel %vm576, %v1332, 0
        %v1576 = vsel %vm576, %v1333, 0
        %v1579 = vsel %vm576, %v1334, 0
        %v1582 = vsel %vm576, %v1335, 0
        %v1585 = vsel %vm576, %v1336, 0
        %v1588 = vsel %vm576, %v1337, 0
        %v1591 = vsel %vm576, %v1338, 0
        %v1594 = vsel %vm576, %v1339, 0
        %v1597 = vsel %vm576, %v1340, 0
        %v1600 = vsel %vm576, %v1341, 0
        %v1603 = vsel %vm576, %v1342, 0
        %v1606 = vsel %vm576, %v1343, 0
        %v1609 = vsel %vm576, %v1344, 0
        %1611 = vmatprep.subr.mxu0 0.0
        %1612 = vmatpush1.msra.mxu0 0.0
        %1613 = vmatprep.subr.mxu0 0.0
        %1614 = vmatpush1.msra.mxu0 0.0
        %1615 = vmatprep.subr.mxu0 0.0
        %1616 = vmatpush1.msra.mxu0 0.0
        %1617 = vmatprep.subr.mxu0 0.0
        %1618 = vmatpush1.msra.mxu0 0.0
        %1619 = vmatprep.subr.mxu0 0.0
        %1620 = vmatpush1.msra.mxu0 0.0
        %1621 = vmatprep.subr.mxu0 0.0
        %1622 = vmatpush1.msra.mxu0 0.0
        %1623 = vmatprep.subr.mxu0 0.0
        %1624 = vmatpush1.msra.mxu0 0.0
        %1625 = vmatprep.subr.mxu0 0.0
        %1626 = vmatpush1.msra.mxu0 0.0
        %1627 = vmatprep.subr.mxu0 0.0
        %1628 = vmatpush1.msra.mxu0 0.0
        %1629 = vmatprep.subr.mxu0 0.0
        %1630 = vmatpush1.msra.mxu0 0.0
        %1631 = vmatprep.subr.mxu0 0.0
        %1632 = vmatpush1.msra.mxu0 0.0
        %1633 = vmatprep.subr.mxu0 0.0
        %1634 = vmatpush1.msra.mxu0 0.0
        %1635 = vmatprep.subr.mxu0 0.0
        %1636 = vmatpush1.msra.mxu0 %v1348
        %1637 = vmatprep.subr.mxu0 0.0
        %1638 = vmatpush1.msra.mxu0 %v1347
        %1639 = vmatprep.subr.mxu0 0.0
        %1640 = vmatpush1.msra.mxu0 %v1346
        %1641 = vmatprep.subr.mxu0 0.0
        %1642 = vmatpush1.msra.mxu0 %v1345
        %1643 = vmatprep.subr.mxu0 0.0
        %1644 = vmatpush2.msra.mxu0 0.0
        %1645 = vmatprep.subr.mxu0 0.0
        %1646 = vmatpush2.msra.mxu0 0.0
        %1647 = vmatprep.subr.mxu0 0.0
        %1648 = vmatpush2.msra.mxu0 0.0
        %1649 = vmatprep.subr.mxu0 0.0
        %1650 = vmatpush2.msra.mxu0 0.0
        %1651 = vmatprep.subr.mxu0 0.0
        %1652 = vmatpush2.msra.mxu0 0.0
        %1653 = vmatprep.subr.mxu0 0.0
        %1654 = vmatpush2.msra.mxu0 0.0
        %1655 = vmatprep.subr.mxu0 0.0
        %1656 = vmatpush2.msra.mxu0 0.0
        %1657 = vmatprep.subr.mxu0 0.0
        %1658 = vmatpush2.msra.mxu0 0.0
        %1659 = vmatprep.subr.mxu0 0.0
        %1660 = vmatpush2.msra.mxu0 0.0
        %1661 = vmatprep.subr.mxu0 0.0
        %1662 = vmatpush2.msra.mxu0 0.0
        %1663 = vmatprep.subr.mxu0 0.0
        %1664 = vmatpush2.msra.mxu0 0.0
        %1665 = vmatprep.subr.mxu0 0.0
        %1666 = vmatpush2.msra.mxu0 0.0
        %1667 = vmatprep.subr.mxu0 0.0
        %1668 = vmatpush2.msra.mxu0 0.0
        %1669 = vmatprep.subr.mxu0 0.0
        %1670 = vmatpush2.msra.mxu0 0.0
        %1671 = vmatprep.subr.mxu0 0.0
        %1672 = vmatpush2.msra.mxu0 0.0
        %1673 = vmatprep.subr.mxu0 0.0
        %1674 = vmatpush2.msra.mxu0 0.0
        %1675 = vmatprep.mubr.f32.mxu0 0.0
        %1676 = vmatmul.mubr.f32.gmra.mxu0 %v1564
        %v1677 = vpop.f32.mrf.mxu0
        %v1678 = vadd.f32 %v1485, %v1677
        %v1679 = vpop.f32.mrf.mxu0
        %1680 = vmatprep.mubr.f32.mxu0 0.0
        %1681 = vmatmul.mubr.f32.gmra.mxu0 %v1567
        %v1682 = vpop.f32.mrf.mxu0
        %v1683 = vadd.f32 %v1490, %v1682
        %v1684 = vpop.f32.mrf.mxu0
        %1685 = vmatprep.mubr.f32.mxu0 0.0
        %1686 = vmatmul.mubr.f32.gmra.mxu0 %v1570
        %v1687 = vpop.f32.mrf.mxu0
        %v1688 = vadd.f32 %v1495, %v1687
        %v1689 = vpop.f32.mrf.mxu0
        %1690 = vmatprep.mubr.f32.mxu0 0.0
        %1691 = vmatmul.mubr.f32.gmra.mxu0 %v1573
        %v1692 = vpop.f32.mrf.mxu0
        %v1693 = vadd.f32 %v1500, %v1692
        %v1694 = vpop.f32.mrf.mxu0
        %1695 = vmatprep.mubr.f32.mxu0 0.0
        %1696 = vmatmul.mubr.f32.gmra.mxu0 %v1576
        %v1697 = vpop.f32.mrf.mxu0
        %v1698 = vadd.f32 %v1505, %v1697
        %v1699 = vpop.f32.mrf.mxu0
        %1700 = vmatprep.mubr.f32.mxu0 0.0
        %1701 = vmatmul.mubr.f32.gmra.mxu0 %v1579
        %v1702 = vpop.f32.mrf.mxu0
        %v1703 = vadd.f32 %v1510, %v1702
        %v1704 = vpop.f32.mrf.mxu0
        %1705 = vmatprep.mubr.f32.mxu0 0.0
        %1706 = vmatmul.mubr.f32.gmra.mxu0 %v1582
        %v1707 = vpop.f32.mrf.mxu0
        %v1708 = vadd.f32 %v1515, %v1707
        %v1709 = vpop.f32.mrf.mxu0
        %1710 = vmatprep.mubr.f32.mxu0 0.0
        %1711 = vmatmul.mubr.f32.gmra.mxu0 %v1585
        %v1712 = vpop.f32.mrf.mxu0
        %v1713 = vadd.f32 %v1520, %v1712
        %v1714 = vpop.f32.mrf.mxu0
        %1715 = vmatprep.mubr.f32.mxu0 0.0
        %1716 = vmatmul.mubr.f32.gmra.mxu0 %v1588
        %v1717 = vpop.f32.mrf.mxu0
        %v1718 = vadd.f32 %v1525, %v1717
        %v1719 = vpop.f32.mrf.mxu0
        %1720 = vmatprep.mubr.f32.mxu0 0.0
        %1721 = vmatmul.mubr.f32.gmra.mxu0 %v1591
        %v1722 = vpop.f32.mrf.mxu0
        %v1723 = vadd.f32 %v1530, %v1722
        %v1724 = vpop.f32.mrf.mxu0
        %1725 = vmatprep.mubr.f32.mxu0 0.0
        %1726 = vmatmul.mubr.f32.gmra.mxu0 %v1594
        %v1727 = vpop.f32.mrf.mxu0
        %v1728 = vadd.f32 %v1535, %v1727
        %v1729 = vpop.f32.mrf.mxu0
        %1730 = vmatprep.mubr.f32.mxu0 0.0
        %1731 = vmatmul.mubr.f32.gmra.mxu0 %v1597
        %v1732 = vpop.f32.mrf.mxu0
        %v1733 = vadd.f32 %v1540, %v1732
        %v1734 = vpop.f32.mrf.mxu0
        %1735 = vmatprep.mubr.f32.mxu0 0.0
        %1736 = vmatmul.mubr.f32.gmra.mxu0 %v1600
        %v1737 = vpop.f32.mrf.mxu0
        %v1738 = vadd.f32 %v1545, %v1737
        %v1739 = vpop.f32.mrf.mxu0
        %1740 = vmatprep.mubr.f32.mxu0 0.0
        %1741 = vmatmul.mubr.f32.gmra.mxu0 %v1603
        %v1742 = vpop.f32.mrf.mxu0
        %v1743 = vadd.f32 %v1550, %v1742
        %v1744 = vpop.f32.mrf.mxu0
        %1745 = vmatprep.mubr.f32.mxu0 0.0
        %1746 = vmatmul.mubr.f32.gmra.mxu0 %v1606
        %v1747 = vpop.f32.mrf.mxu0
        %v1748 = vadd.f32 %v1555, %v1747
        %v1749 = vpop.f32.mrf.mxu0
        %1750 = vmatprep.mubr.f32.mxu0 0.0
        %1751 = vmatmul.mubr.f32.gmra.mxu0 %v1609
        %v1752 = vpop.f32.mrf.mxu0
        %v1753 = vadd.f32 %v1560, %v1752
        %v1754 = vpop.f32.mrf.mxu0
        %1755 = vdwg.mxu0
        %v1756 = vld [vmem:[#allocation2 + $0x8] sm:$0xff]
        %v1757 = vld [vmem:[#allocation2 + $0x10] sm:$0xff]
        %v1758 = vld [vmem:[#allocation2 + $0x20] sm:$0xff]
        %v1759 = vld [vmem:[#allocation2 + $0x28] sm:$0xff]
        %v1760 = vld [vmem:[#allocation2 + $0x38] sm:$0xff]
        %v1761 = vld [vmem:[#allocation2 + $0x40] sm:$0xff]
        %v1762 = vld [vmem:[#allocation2 + $0x50] sm:$0xff]
        %v1763 = vld [vmem:[#allocation2 + $0x58] sm:$0xff]
        %v1764 = vld [vmem:[#allocation2 + $0x68] sm:$0xff]
        %v1765 = vld [vmem:[#allocation2 + $0x70] sm:$0xff]
        %v1766 = vld [vmem:[#allocation2 + $0x80] sm:$0xff]
        %v1767 = vld [vmem:[#allocation2 + $0x88] sm:$0xff]
        %v1768 = vld [vmem:[#allocation2 + $0x98] sm:$0xff]
        %v1769 = vld [vmem:[#allocation2 + $0xa0] sm:$0xff]
        %v1770 = vld [vmem:[#allocation2 + $0xb0] sm:$0xff]
        %v1771 = vld [vmem:[#allocation2 + $0xb8] sm:$0xff]
        %s1772 = scalar_lea.vmem [#allocation7], 64
        %v1773 = vld [vmem:[%s1772] sm:$0xff]
        %v1774 = vld [vmem:[%s1772 + $0x8] sm:$0xff]
        %v1775 = vld [vmem:[%s1772 + $0x10] sm:$0xff]
        %v1776 = vld [vmem:[%s1772 + $0x18] sm:$0xff]
        %v1778 = vsel %vm576, %v1756, 0
        %v1781 = vsel %vm576, %v1757, 0
        %v1784 = vsel %vm576, %v1758, 0
        %v1787 = vsel %vm576, %v1759, 0
        %v1790 = vsel %vm576, %v1760, 0
        %v1793 = vsel %vm576, %v1761, 0
        %v1796 = vsel %vm576, %v1762, 0
        %v1799 = vsel %vm576, %v1763, 0
        %v1802 = vsel %vm576, %v1764, 0
        %v1805 = vsel %vm576, %v1765, 0
        %v1808 = vsel %vm576, %v1766, 0
        %v1811 = vsel %vm576, %v1767, 0
        %v1814 = vsel %vm576, %v1768, 0
        %v1817 = vsel %vm576, %v1769, 0
        %v1820 = vsel %vm576, %v1770, 0
        %v1823 = vsel %vm576, %v1771, 0
        %1825 = vmatprep.subr.mxu0 0.0
        %1826 = vmatpush1.msra.mxu0 0.0
        %1827 = vmatprep.subr.mxu0 0.0
        %1828 = vmatpush1.msra.mxu0 0.0
        %1829 = vmatprep.subr.mxu0 0.0
        %1830 = vmatpush1.msra.mxu0 0.0
        %1831 = vmatprep.subr.mxu0 0.0
        %1832 = vmatpush1.msra.mxu0 0.0
        %1833 = vmatprep.subr.mxu0 0.0
        %1834 = vmatpush1.msra.mxu0 0.0
        %1835 = vmatprep.subr.mxu0 0.0
        %1836 = vmatpush1.msra.mxu0 0.0
        %1837 = vmatprep.subr.mxu0 0.0
        %1838 = vmatpush1.msra.mxu0 0.0
        %1839 = vmatprep.subr.mxu0 0.0
        %1840 = vmatpush1.msra.mxu0 0.0
        %1841 = vmatprep.subr.mxu0 0.0
        %1842 = vmatpush1.msra.mxu0 0.0
        %1843 = vmatprep.subr.mxu0 0.0
        %1844 = vmatpush1.msra.mxu0 0.0
        %1845 = vmatprep.subr.mxu0 0.0
        %1846 = vmatpush1.msra.mxu0 0.0
        %1847 = vmatprep.subr.mxu0 0.0
        %1848 = vmatpush1.msra.mxu0 0.0
        %1849 = vmatprep.subr.mxu0 0.0
        %1850 = vmatpush1.msra.mxu0 %v1776
        %1851 = vmatprep.subr.mxu0 0.0
        %1852 = vmatpush1.msra.mxu0 %v1775
        %1853 = vmatprep.subr.mxu0 0.0
        %1854 = vmatpush1.msra.mxu0 %v1774
        %1855 = vmatprep.subr.mxu0 0.0
        %1856 = vmatpush1.msra.mxu0 %v1773
        %1857 = vmatprep.subr.mxu0 0.0
        %1858 = vmatpush2.msra.mxu0 0.0
        %1859 = vmatprep.subr.mxu0 0.0
        %1860 = vmatpush2.msra.mxu0 0.0
        %1861 = vmatprep.subr.mxu0 0.0
        %1862 = vmatpush2.msra.mxu0 0.0
        %1863 = vmatprep.subr.mxu0 0.0
        %1864 = vmatpush2.msra.mxu0 0.0
        %1865 = vmatprep.subr.mxu0 0.0
        %1866 = vmatpush2.msra.mxu0 0.0
        %1867 = vmatprep.subr.mxu0 0.0
        %1868 = vmatpush2.msra.mxu0 0.0
        %1869 = vmatprep.subr.mxu0 0.0
        %1870 = vmatpush2.msra.mxu0 0.0
        %1871 = vmatprep.subr.mxu0 0.0
        %1872 = vmatpush2.msra.mxu0 0.0
        %1873 = vmatprep.subr.mxu0 0.0
        %1874 = vmatpush2.msra.mxu0 0.0
        %1875 = vmatprep.subr.mxu0 0.0
        %1876 = vmatpush2.msra.mxu0 0.0
        %1877 = vmatprep.subr.mxu0 0.0
        %1878 = vmatpush2.msra.mxu0 0.0
        %1879 = vmatprep.subr.mxu0 0.0
        %1880 = vmatpush2.msra.mxu0 0.0
        %1881 = vmatprep.subr.mxu0 0.0
        %1882 = vmatpush2.msra.mxu0 0.0
        %1883 = vmatprep.subr.mxu0 0.0
        %1884 = vmatpush2.msra.mxu0 0.0
        %1885 = vmatprep.subr.mxu0 0.0
        %1886 = vmatpush2.msra.mxu0 0.0
        %1887 = vmatprep.subr.mxu0 0.0
        %1888 = vmatpush2.msra.mxu0 0.0
        %1889 = vmatprep.mubr.f32.mxu0 0.0
        %1890 = vmatmul.mubr.f32.gmra.mxu0 %v1778
        %v1891 = vpop.f32.mrf.mxu0
        %v1892 = vadd.f32 0.0, %v1891
        %v1893 = vpop.f32.mrf.mxu0
        %1894 = vmatprep.mubr.f32.mxu0 0.0
        %1895 = vmatmul.mubr.f32.gmra.mxu0 %v1781
        %v1896 = vpop.f32.mrf.mxu0
        %v1897 = vadd.f32 0.0, %v1896
        %v1898 = vpop.f32.mrf.mxu0
        %1899 = vmatprep.mubr.f32.mxu0 0.0
        %1900 = vmatmul.mubr.f32.gmra.mxu0 %v1784
        %v1901 = vpop.f32.mrf.mxu0
        %v1902 = vadd.f32 0.0, %v1901
        %v1903 = vpop.f32.mrf.mxu0
        %1904 = vmatprep.mubr.f32.mxu0 0.0
        %1905 = vmatmul.mubr.f32.gmra.mxu0 %v1787
        %v1906 = vpop.f32.mrf.mxu0
        %v1907 = vadd.f32 0.0, %v1906
        %v1908 = vpop.f32.mrf.mxu0
        %1909 = vmatprep.mubr.f32.mxu0 0.0
        %1910 = vmatmul.mubr.f32.gmra.mxu0 %v1790
        %v1911 = vpop.f32.mrf.mxu0
        %v1912 = vadd.f32 0.0, %v1911
        %v1913 = vpop.f32.mrf.mxu0
        %1914 = vmatprep.mubr.f32.mxu0 0.0
        %1915 = vmatmul.mubr.f32.gmra.mxu0 %v1793
        %v1916 = vpop.f32.mrf.mxu0
        %v1917 = vadd.f32 0.0, %v1916
        %v1918 = vpop.f32.mrf.mxu0
        %1919 = vmatprep.mubr.f32.mxu0 0.0
        %1920 = vmatmul.mubr.f32.gmra.mxu0 %v1796
        %v1921 = vpop.f32.mrf.mxu0
        %v1922 = vadd.f32 0.0, %v1921
        %v1923 = vpop.f32.mrf.mxu0
        %1924 = vmatprep.mubr.f32.mxu0 0.0
        %1925 = vmatmul.mubr.f32.gmra.mxu0 %v1799
        %v1926 = vpop.f32.mrf.mxu0
        %v1927 = vadd.f32 0.0, %v1926
        %v1928 = vpop.f32.mrf.mxu0
        %1929 = vmatprep.mubr.f32.mxu0 0.0
        %1930 = vmatmul.mubr.f32.gmra.mxu0 %v1802
        %v1931 = vpop.f32.mrf.mxu0
        %v1932 = vadd.f32 0.0, %v1931
        %v1933 = vpop.f32.mrf.mxu0
        %1934 = vmatprep.mubr.f32.mxu0 0.0
        %1935 = vmatmul.mubr.f32.gmra.mxu0 %v1805
        %v1936 = vpop.f32.mrf.mxu0
        %v1937 = vadd.f32 0.0, %v1936
        %v1938 = vpop.f32.mrf.mxu0
        %1939 = vmatprep.mubr.f32.mxu0 0.0
        %1940 = vmatmul.mubr.f32.gmra.mxu0 %v1808
        %v1941 = vpop.f32.mrf.mxu0
        %v1942 = vadd.f32 0.0, %v1941
        %v1943 = vpop.f32.mrf.mxu0
        %1944 = vmatprep.mubr.f32.mxu0 0.0
        %1945 = vmatmul.mubr.f32.gmra.mxu0 %v1811
        %v1946 = vpop.f32.mrf.mxu0
        %v1947 = vadd.f32 0.0, %v1946
        %v1948 = vpop.f32.mrf.mxu0
        %1949 = vmatprep.mubr.f32.mxu0 0.0
        %1950 = vmatmul.mubr.f32.gmra.mxu0 %v1814
        %v1951 = vpop.f32.mrf.mxu0
        %v1952 = vadd.f32 0.0, %v1951
        %v1953 = vpop.f32.mrf.mxu0
        %1954 = vmatprep.mubr.f32.mxu0 0.0
        %1955 = vmatmul.mubr.f32.gmra.mxu0 %v1817
        %v1956 = vpop.f32.mrf.mxu0
        %v1957 = vadd.f32 0.0, %v1956
        %v1958 = vpop.f32.mrf.mxu0
        %1959 = vmatprep.mubr.f32.mxu0 0.0
        %1960 = vmatmul.mubr.f32.gmra.mxu0 %v1820
        %v1961 = vpop.f32.mrf.mxu0
        %v1962 = vadd.f32 0.0, %v1961
        %v1963 = vpop.f32.mrf.mxu0
        %1964 = vmatprep.mubr.f32.mxu0 0.0
        %1965 = vmatmul.mubr.f32.gmra.mxu0 %v1823
        %v1966 = vpop.f32.mrf.mxu0
        %v1967 = vadd.f32 0.0, %v1966
        %v1968 = vpop.f32.mrf.mxu0
        %1969 = vdwg.mxu0
        %v1970 = vadd.f32 %v1678, %v1892
        %v1971 = vadd.f32 %v1683, %v1897
        %v1972 = vadd.f32 %v1688, %v1902
        %v1973 = vadd.f32 %v1693, %v1907
        %v1974 = vadd.f32 %v1698, %v1912
        %v1975 = vadd.f32 %v1703, %v1917
        %v1976 = vadd.f32 %v1708, %v1922
        %v1977 = vadd.f32 %v1713, %v1927
        %v1978 = vadd.f32 %v1718, %v1932
        %v1979 = vadd.f32 %v1723, %v1937
        %v1980 = vadd.f32 %v1728, %v1942
        %v1981 = vadd.f32 %v1733, %v1947
        %v1982 = vadd.f32 %v1738, %v1952
        %v1983 = vadd.f32 %v1743, %v1957
        %v1984 = vadd.f32 %v1748, %v1962
        %v1985 = vadd.f32 %v1753, %v1967
        %v1986 = vld [vmem:[%s5] sm:$0x1]
        %v1988 = vlaneseq
        %v1989 = vshrl.u32 %v1988, 7
        %v1990 = vsub.s32 0, %v1989
        %v1991 = vrot.slane %v1986, %v1990
        %v1993 = vadd.f32 %v1970, %v1991
        %v1994 = vadd.f32 %v1971, %v1991
        %v1995 = vadd.f32 %v1972, %v1991
        %v1996 = vadd.f32 %v1973, %v1991
        %v1997 = vadd.f32 %v1974, %v1991
        %v1998 = vadd.f32 %v1975, %v1991
        %v1999 = vadd.f32 %v1976, %v1991
        %v2000 = vadd.f32 %v1977, %v1991
        %v2001 = vadd.f32 %v1978, %v1991
        %v2002 = vadd.f32 %v1979, %v1991
        %v2003 = vadd.f32 %v1980, %v1991
        %v2004 = vadd.f32 %v1981, %v1991
        %v2005 = vadd.f32 %v1982, %v1991
        %v2006 = vadd.f32 %v1983, %v1991
        %v2007 = vadd.f32 %v1984, %v1991
        %v2008 = vadd.f32 %v1985, %v1991
        %v2009 = vmax.f32 %v1993, 0.0
        %v2010 = vmax.f32 %v1994, 0.0
        %v2011 = vmax.f32 %v1995, 0.0
        %v2012 = vmax.f32 %v1996, 0.0
        %v2013 = vmax.f32 %v1997, 0.0
        %v2014 = vmax.f32 %v1998, 0.0
        %v2015 = vmax.f32 %v1999, 0.0
        %v2016 = vmax.f32 %v2000, 0.0
        %v2017 = vmax.f32 %v2001, 0.0
        %v2018 = vmax.f32 %v2002, 0.0
        %v2019 = vmax.f32 %v2003, 0.0
        %v2020 = vmax.f32 %v2004, 0.0
        %v2021 = vmax.f32 %v2005, 0.0
        %v2022 = vmax.f32 %v2006, 0.0
        %v2023 = vmax.f32 %v2007, 0.0
        %v2024 = vmax.f32 %v2008, 0.0
        %v2025 = vld [vmem:[#allocation8] sm:$0xff]
        %v2026 = vld [vmem:[#allocation8 + $0x8] sm:$0xff]
        %v2027 = vld [vmem:[#allocation8 + $0x10] sm:$0xff]
        %v2028 = vld [vmem:[#allocation8 + $0x18] sm:$0xff]
        %v2029 = vld [vmem:[%s7] sm:$0x1]
        %v2031 = vlaneseq
        %v2032 = vshrl.u32 %v2031, 7
        %v2033 = vsub.s32 0, %v2032
        %v2034 = vrot.slane %v2029, %v2033
        %2036 = vmatprep.subr.mxu0 0.0
        %2037 = vmatpush1.msra.mxu0 0.0
        %2038 = vmatprep.subr.mxu0 0.0
        %2039 = vmatpush1.msra.mxu0 0.0
        %2040 = vmatprep.subr.mxu0 0.0
        %2041 = vmatpush1.msra.mxu0 0.0
        %2042 = vmatprep.subr.mxu0 0.0
        %2043 = vmatpush1.msra.mxu0 0.0
        %2044 = vmatprep.subr.mxu0 0.0
        %2045 = vmatpush1.msra.mxu0 0.0
        %2046 = vmatprep.subr.mxu0 0.0
        %2047 = vmatpush1.msra.mxu0 0.0
        %2048 = vmatprep.subr.mxu0 0.0
        %2049 = vmatpush1.msra.mxu0 0.0
        %2050 = vmatprep.subr.mxu0 0.0
        %2051 = vmatpush1.msra.mxu0 0.0
        %2052 = vmatprep.subr.mxu0 0.0
        %2053 = vmatpush1.msra.mxu0 0.0
        %2054 = vmatprep.subr.mxu0 0.0
        %2055 = vmatpush1.msra.mxu0 0.0
        %2056 = vmatprep.subr.mxu0 0.0
        %2057 = vmatpush1.msra.mxu0 0.0
        %2058 = vmatprep.subr.mxu0 0.0
        %2059 = vmatpush1.msra.mxu0 0.0
        %2060 = vmatprep.subr.mxu0 0.0
        %2061 = vmatpush1.msra.mxu0 %v2028
        %2062 = vmatprep.subr.mxu0 0.0
        %2063 = vmatpush1.msra.mxu0 %v2027
        %2064 = vmatprep.subr.mxu0 0.0
        %2065 = vmatpush1.msra.mxu0 %v2026
        %2066 = vmatprep.subr.mxu0 0.0
        %2067 = vmatpush1.msra.mxu0 %v2025
        %2068 = vmatprep.subr.mxu0 0.0
        %2069 = vmatpush2.msra.mxu0 0.0
        %2070 = vmatprep.subr.mxu0 0.0
        %2071 = vmatpush2.msra.mxu0 0.0
        %2072 = vmatprep.subr.mxu0 0.0
        %2073 = vmatpush2.msra.mxu0 0.0
        %2074 = vmatprep.subr.mxu0 0.0
        %2075 = vmatpush2.msra.mxu0 0.0
        %2076 = vmatprep.subr.mxu0 0.0
        %2077 = vmatpush2.msra.mxu0 0.0
        %2078 = vmatprep.subr.mxu0 0.0
        %2079 = vmatpush2.msra.mxu0 0.0
        %2080 = vmatprep.subr.mxu0 0.0
        %2081 = vmatpush2.msra.mxu0 0.0
        %2082 = vmatprep.subr.mxu0 0.0
        %2083 = vmatpush2.msra.mxu0 0.0
        %2084 = vmatprep.subr.mxu0 0.0
        %2085 = vmatpush2.msra.mxu0 0.0
        %2086 = vmatprep.subr.mxu0 0.0
        %2087 = vmatpush2.msra.mxu0 0.0
        %2088 = vmatprep.subr.mxu0 0.0
        %2089 = vmatpush2.msra.mxu0 0.0
        %2090 = vmatprep.subr.mxu0 0.0
        %2091 = vmatpush2.msra.mxu0 0.0
        %2092 = vmatprep.subr.mxu0 0.0
        %2093 = vmatpush2.msra.mxu0 0.0
        %2094 = vmatprep.subr.mxu0 0.0
        %2095 = vmatpush2.msra.mxu0 0.0
        %2096 = vmatprep.subr.mxu0 0.0
        %2097 = vmatpush2.msra.mxu0 0.0
        %2098 = vmatprep.subr.mxu0 0.0
        %2099 = vmatpush2.msra.mxu0 0.0
        %2100 = vmatprep.mubr.f32.mxu0 0.0
        %2101 = vmatmul.mubr.f32.gmra.mxu0 %v1066
        %v2102 = vpop.f32.mrf.mxu0
        %v2103 = vadd.f32 %v2034, %v2102
        %v2104 = vpop.f32.mrf.mxu0
        %2105 = vmatprep.mubr.f32.mxu0 0.0
        %2106 = vmatmul.mubr.f32.gmra.mxu0 %v1069
        %v2107 = vpop.f32.mrf.mxu0
        %v2108 = vadd.f32 %v2034, %v2107
        %v2109 = vpop.f32.mrf.mxu0
        %2110 = vmatprep.mubr.f32.mxu0 0.0
        %2111 = vmatmul.mubr.f32.gmra.mxu0 %v1072
        %v2112 = vpop.f32.mrf.mxu0
        %v2113 = vadd.f32 %v2034, %v2112
        %v2114 = vpop.f32.mrf.mxu0
        %2115 = vmatprep.mubr.f32.mxu0 0.0
        %2116 = vmatmul.mubr.f32.gmra.mxu0 %v1075
        %v2117 = vpop.f32.mrf.mxu0
        %v2118 = vadd.f32 %v2034, %v2117
        %v2119 = vpop.f32.mrf.mxu0
        %2120 = vmatprep.mubr.f32.mxu0 0.0
        %2121 = vmatmul.mubr.f32.gmra.mxu0 %v1078
        %v2122 = vpop.f32.mrf.mxu0
        %v2123 = vadd.f32 %v2034, %v2122
        %v2124 = vpop.f32.mrf.mxu0
        %2125 = vmatprep.mubr.f32.mxu0 0.0
        %2126 = vmatmul.mubr.f32.gmra.mxu0 %v1081
        %v2127 = vpop.f32.mrf.mxu0
        %v2128 = vadd.f32 %v2034, %v2127
        %v2129 = vpop.f32.mrf.mxu0
        %2130 = vmatprep.mubr.f32.mxu0 0.0
        %2131 = vmatmul.mubr.f32.gmra.mxu0 %v1084
        %v2132 = vpop.f32.mrf.mxu0
        %v2133 = vadd.f32 %v2034, %v2132
        %v2134 = vpop.f32.mrf.mxu0
        %2135 = vmatprep.mubr.f32.mxu0 0.0
        %2136 = vmatmul.mubr.f32.gmra.mxu0 %v1087
        %v2137 = vpop.f32.mrf.mxu0
        %v2138 = vadd.f32 %v2034, %v2137
        %v2139 = vpop.f32.mrf.mxu0
        %2140 = vmatprep.mubr.f32.mxu0 0.0
        %2141 = vmatmul.mubr.f32.gmra.mxu0 %v1090
        %v2142 = vpop.f32.mrf.mxu0
        %v2143 = vadd.f32 %v2034, %v2142
        %v2144 = vpop.f32.mrf.mxu0
        %2145 = vmatprep.mubr.f32.mxu0 0.0
        %2146 = vmatmul.mubr.f32.gmra.mxu0 %v1093
        %v2147 = vpop.f32.mrf.mxu0
        %v2148 = vadd.f32 %v2034, %v2147
        %v2149 = vpop.f32.mrf.mxu0
        %2150 = vmatprep.mubr.f32.mxu0 0.0
        %2151 = vmatmul.mubr.f32.gmra.mxu0 %v1096
        %v2152 = vpop.f32.mrf.mxu0
        %v2153 = vadd.f32 %v2034, %v2152
        %v2154 = vpop.f32.mrf.mxu0
        %2155 = vmatprep.mubr.f32.mxu0 0.0
        %2156 = vmatmul.mubr.f32.gmra.mxu0 %v1099
        %v2157 = vpop.f32.mrf.mxu0
        %v2158 = vadd.f32 %v2034, %v2157
        %v2159 = vpop.f32.mrf.mxu0
        %2160 = vmatprep.mubr.f32.mxu0 0.0
        %2161 = vmatmul.mubr.f32.gmra.mxu0 %v1102
        %v2162 = vpop.f32.mrf.mxu0
        %v2163 = vadd.f32 %v2034, %v2162
        %v2164 = vpop.f32.mrf.mxu0
        %2165 = vmatprep.mubr.f32.mxu0 0.0
        %2166 = vmatmul.mubr.f32.gmra.mxu0 %v1105
        %v2167 = vpop.f32.mrf.mxu0
        %v2168 = vadd.f32 %v2034, %v2167
        %v2169 = vpop.f32.mrf.mxu0
        %2170 = vmatprep.mubr.f32.mxu0 0.0
        %2171 = vmatmul.mubr.f32.gmra.mxu0 %v1108
        %v2172 = vpop.f32.mrf.mxu0
        %v2173 = vadd.f32 %v2034, %v2172
        %v2174 = vpop.f32.mrf.mxu0
        %2175 = vmatprep.mubr.f32.mxu0 0.0
        %2176 = vmatmul.mubr.f32.gmra.mxu0 %v1111
        %v2177 = vpop.f32.mrf.mxu0
        %v2178 = vadd.f32 %v2034, %v2177
        %v2179 = vpop.f32.mrf.mxu0
        %2180 = vdwg.mxu0
        %v2181 = vadd.f32 %v2009, %v2103
        %v2182 = vadd.f32 %v2010, %v2108
        %v2183 = vadd.f32 %v2011, %v2113
        %v2184 = vadd.f32 %v2012, %v2118
        %v2185 = vadd.f32 %v2013, %v2123
        %v2186 = vadd.f32 %v2014, %v2128
        %v2187 = vadd.f32 %v2015, %v2133
        %v2188 = vadd.f32 %v2016, %v2138
        %v2189 = vadd.f32 %v2017, %v2143
        %v2190 = vadd.f32 %v2018, %v2148
        %v2191 = vadd.f32 %v2019, %v2153
        %v2192 = vadd.f32 %v2020, %v2158
        %v2193 = vadd.f32 %v2021, %v2163
        %v2194 = vadd.f32 %v2022, %v2168
        %v2195 = vadd.f32 %v2023, %v2173
        %v2196 = vadd.f32 %v2024, %v2178
        %v2197 = vmax.f32 %v2181, 0.0
        %v2198 = vmax.f32 %v2182, 0.0
        %v2199 = vmax.f32 %v2183, 0.0
        %v2200 = vmax.f32 %v2184, 0.0
        %v2201 = vmax.f32 %v2185, 0.0
        %v2202 = vmax.f32 %v2186, 0.0
        %v2203 = vmax.f32 %v2187, 0.0
        %v2204 = vmax.f32 %v2188, 0.0
        %v2205 = vmax.f32 %v2189, 0.0
        %v2206 = vmax.f32 %v2190, 0.0
        %v2207 = vmax.f32 %v2191, 0.0
        %v2208 = vmax.f32 %v2192, 0.0
        %v2209 = vmax.f32 %v2193, 0.0
        %v2210 = vmax.f32 %v2194, 0.0
        %v2211 = vmax.f32 %v2195, 0.0
        %v2212 = vmax.f32 %v2196, 0.0
        %2213 = vst.msk [vmem:[#allocation2 + $0x8] sm:$0xff] %vm576, %v2197
        %2214 = vst.msk [vmem:[#allocation2 + $0x10] sm:$0xff] %vm576, %v2198
        %2215 = vst.msk [vmem:[#allocation2 + $0x20] sm:$0xff] %vm576, %v2199
        %2216 = vst.msk [vmem:[#allocation2 + $0x28] sm:$0xff] %vm576, %v2200
        %2217 = vst.msk [vmem:[#allocation2 + $0x38] sm:$0xff] %vm576, %v2201
        %2218 = vst.msk [vmem:[#allocation2 + $0x40] sm:$0xff] %vm576, %v2202
        %2219 = vst.msk [vmem:[#allocation2 + $0x50] sm:$0xff] %vm576, %v2203
        %2220 = vst.msk [vmem:[#allocation2 + $0x58] sm:$0xff] %vm576, %v2204
        %2221 = vst.msk [vmem:[#allocation2 + $0x68] sm:$0xff] %vm576, %v2205
        %2222 = vst.msk [vmem:[#allocation2 + $0x70] sm:$0xff] %vm576, %v2206
        %2223 = vst.msk [vmem:[#allocation2 + $0x80] sm:$0xff] %vm576, %v2207
        %2224 = vst.msk [vmem:[#allocation2 + $0x88] sm:$0xff] %vm576, %v2208
        %2225 = vst.msk [vmem:[#allocation2 + $0x98] sm:$0xff] %vm576, %v2209
        %2226 = vst.msk [vmem:[#allocation2 + $0xa0] sm:$0xff] %vm576, %v2210
        %2227 = vst.msk [vmem:[#allocation2 + $0xb0] sm:$0xff] %vm576, %v2211
        %2228 = vst.msk [vmem:[#allocation2 + $0xb8] sm:$0xff] %vm576, %v2212
        %v2229 = vld [vmem:[#allocation2 + $0x8] sm:$0xff]
        %v2230 = vld [vmem:[#allocation2 + $0x10] sm:$0xff]
        %v2231 = vld [vmem:[#allocation2 + $0x20] sm:$0xff]
        %v2232 = vld [vmem:[#allocation2 + $0x28] sm:$0xff]
        %v2233 = vld [vmem:[#allocation2 + $0x38] sm:$0xff]
        %v2234 = vld [vmem:[#allocation2 + $0x40] sm:$0xff]
        %v2235 = vld [vmem:[#allocation2 + $0x50] sm:$0xff]
        %v2236 = vld [vmem:[#allocation2 + $0x58] sm:$0xff]
        %v2237 = vld [vmem:[#allocation2 + $0x68] sm:$0xff]
        %v2238 = vld [vmem:[#allocation2 + $0x70] sm:$0xff]
        %v2239 = vld [vmem:[#allocation2 + $0x80] sm:$0xff]
        %v2240 = vld [vmem:[#allocation2 + $0x88] sm:$0xff]
        %v2241 = vld [vmem:[#allocation2 + $0x98] sm:$0xff]
        %v2242 = vld [vmem:[#allocation2 + $0xa0] sm:$0xff]
        %v2243 = vld [vmem:[#allocation2 + $0xb0] sm:$0xff]
        %v2244 = vld [vmem:[#allocation2 + $0xb8] sm:$0xff]
        %v2245 = vld [vmem:[#allocation2 + $0x4] sm:$0xff]
        %v2246 = vld [vmem:[#allocation2 + $0xc] sm:$0xff]
        %v2247 = vld [vmem:[#allocation2 + $0x1c] sm:$0xff]
        %v2248 = vld [vmem:[#allocation2 + $0x24] sm:$0xff]
        %v2249 = vld [vmem:[#allocation2 + $0x34] sm:$0xff]
        %v2250 = vld [vmem:[#allocation2 + $0x3c] sm:$0xff]
        %v2251 = vld [vmem:[#allocation2 + $0x4c] sm:$0xff]
        %v2252 = vld [vmem:[#allocation2 + $0x54] sm:$0xff]
        %v2253 = vld [vmem:[#allocation2 + $0x64] sm:$0xff]
        %v2254 = vld [vmem:[#allocation2 + $0x6c] sm:$0xff]
        %v2255 = vld [vmem:[#allocation2 + $0x7c] sm:$0xff]
        %v2256 = vld [vmem:[#allocation2 + $0x84] sm:$0xff]
        %v2257 = vld [vmem:[#allocation2 + $0x94] sm:$0xff]
        %v2258 = vld [vmem:[#allocation2 + $0x9c] sm:$0xff]
        %v2259 = vld [vmem:[#allocation2 + $0xac] sm:$0xff]
        %v2260 = vld [vmem:[#allocation2 + $0xb4] sm:$0xff]
        %s2261 = scalar_lea.vmem [#allocation5], 96
        %v2262 = vld [vmem:[%s2261] sm:$0xff]
        %v2263 = vld [vmem:[%s2261 + $0x8] sm:$0xff]
        %v2264 = vld [vmem:[%s2261 + $0x10] sm:$0xff]
        %v2265 = vld [vmem:[%s2261 + $0x18] sm:$0xff]
        %v2266 = vld [vmem:[#allocation2 + $0x6] sm:$0xff]
        %v2267 = vld [vmem:[#allocation2 + $0xe] sm:$0xff]
        %v2268 = vld [vmem:[#allocation2 + $0x1e] sm:$0xff]
        %v2269 = vld [vmem:[#allocation2 + $0x26] sm:$0xff]
        %v2270 = vld [vmem:[#allocation2 + $0x36] sm:$0xff]
        %v2271 = vld [vmem:[#allocation2 + $0x3e] sm:$0xff]
        %v2272 = vld [vmem:[#allocation2 + $0x4e] sm:$0xff]
        %v2273 = vld [vmem:[#allocation2 + $0x56] sm:$0xff]
        %v2274 = vld [vmem:[#allocation2 + $0x66] sm:$0xff]
        %v2275 = vld [vmem:[#allocation2 + $0x6e] sm:$0xff]
        %v2276 = vld [vmem:[#allocation2 + $0x7e] sm:$0xff]
        %v2277 = vld [vmem:[#allocation2 + $0x86] sm:$0xff]
        %v2278 = vld [vmem:[#allocation2 + $0x96] sm:$0xff]
        %v2279 = vld [vmem:[#allocation2 + $0x9e] sm:$0xff]
        %v2280 = vld [vmem:[#allocation2 + $0xae] sm:$0xff]
        %v2281 = vld [vmem:[#allocation2 + $0xb6] sm:$0xff]
        %s2282 = scalar_lea.vmem [#allocation5], 128
        %v2283 = vld [vmem:[%s2282] sm:$0xff]
        %v2284 = vld [vmem:[%s2282 + $0x8] sm:$0xff]
        %v2285 = vld [vmem:[%s2282 + $0x10] sm:$0xff]
        %v2286 = vld [vmem:[%s2282 + $0x18] sm:$0xff]
        %v2288 = vsel %vm576, %v2266, 0
        %v2291 = vsel %vm576, %v2267, 0
        %v2294 = vsel %vm576, %v2268, 0
        %v2297 = vsel %vm576, %v2269, 0
        %v2300 = vsel %vm576, %v2270, 0
        %v2303 = vsel %vm576, %v2271, 0
        %v2306 = vsel %vm576, %v2272, 0
        %v2309 = vsel %vm576, %v2273, 0
        %v2312 = vsel %vm576, %v2274, 0
        %v2315 = vsel %vm576, %v2275, 0
        %v2318 = vsel %vm576, %v2276, 0
        %v2321 = vsel %vm576, %v2277, 0
        %v2324 = vsel %vm576, %v2278, 0
        %v2327 = vsel %vm576, %v2279, 0
        %v2330 = vsel %vm576, %v2280, 0
        %v2333 = vsel %vm576, %v2281, 0
        %2335 = vmatprep.subr.mxu0 0.0
        %2336 = vmatpush1.msra.mxu0 0.0
        %2337 = vmatprep.subr.mxu0 0.0
        %2338 = vmatpush1.msra.mxu0 0.0
        %2339 = vmatprep.subr.mxu0 0.0
        %2340 = vmatpush1.msra.mxu0 0.0
        %2341 = vmatprep.subr.mxu0 0.0
        %2342 = vmatpush1.msra.mxu0 0.0
        %2343 = vmatprep.subr.mxu0 0.0
        %2344 = vmatpush1.msra.mxu0 0.0
        %2345 = vmatprep.subr.mxu0 0.0
        %2346 = vmatpush1.msra.mxu0 0.0
        %2347 = vmatprep.subr.mxu0 0.0
        %2348 = vmatpush1.msra.mxu0 0.0
        %2349 = vmatprep.subr.mxu0 0.0
        %2350 = vmatpush1.msra.mxu0 0.0
        %2351 = vmatprep.subr.mxu0 0.0
        %2352 = vmatpush1.msra.mxu0 0.0
        %2353 = vmatprep.subr.mxu0 0.0
        %2354 = vmatpush1.msra.mxu0 0.0
        %2355 = vmatprep.subr.mxu0 0.0
        %2356 = vmatpush1.msra.mxu0 0.0
        %2357 = vmatprep.subr.mxu0 0.0
        %2358 = vmatpush1.msra.mxu0 0.0
        %2359 = vmatprep.subr.mxu0 0.0
        %2360 = vmatpush1.msra.mxu0 %v2286
        %2361 = vmatprep.subr.mxu0 0.0
        %2362 = vmatpush1.msra.mxu0 %v2285
        %2363 = vmatprep.subr.mxu0 0.0
        %2364 = vmatpush1.msra.mxu0 %v2284
        %2365 = vmatprep.subr.mxu0 0.0
        %2366 = vmatpush1.msra.mxu0 %v2283
        %2367 = vmatprep.subr.mxu0 0.0
        %2368 = vmatpush2.msra.mxu0 0.0
        %2369 = vmatprep.subr.mxu0 0.0
        %2370 = vmatpush2.msra.mxu0 0.0
        %2371 = vmatprep.subr.mxu0 0.0
        %2372 = vmatpush2.msra.mxu0 0.0
        %2373 = vmatprep.subr.mxu0 0.0
        %2374 = vmatpush2.msra.mxu0 0.0
        %2375 = vmatprep.subr.mxu0 0.0
        %2376 = vmatpush2.msra.mxu0 0.0
        %2377 = vmatprep.subr.mxu0 0.0
        %2378 = vmatpush2.msra.mxu0 0.0
        %2379 = vmatprep.subr.mxu0 0.0
        %2380 = vmatpush2.msra.mxu0 0.0
        %2381 = vmatprep.subr.mxu0 0.0
        %2382 = vmatpush2.msra.mxu0 0.0
        %2383 = vmatprep.subr.mxu0 0.0
        %2384 = vmatpush2.msra.mxu0 0.0
        %2385 = vmatprep.subr.mxu0 0.0
        %2386 = vmatpush2.msra.mxu0 0.0
        %2387 = vmatprep.subr.mxu0 0.0
        %2388 = vmatpush2.msra.mxu0 0.0
        %2389 = vmatprep.subr.mxu0 0.0
        %2390 = vmatpush2.msra.mxu0 0.0
        %2391 = vmatprep.subr.mxu0 0.0
        %2392 = vmatpush2.msra.mxu0 0.0
        %2393 = vmatprep.subr.mxu0 0.0
        %2394 = vmatpush2.msra.mxu0 0.0
        %2395 = vmatprep.subr.mxu0 0.0
        %2396 = vmatpush2.msra.mxu0 0.0
        %2397 = vmatprep.subr.mxu0 0.0
        %2398 = vmatpush2.msra.mxu0 0.0
        %2399 = vmatprep.mubr.f32.mxu0 0.0
        %2400 = vmatmul.mubr.f32.gmra.mxu0 %v2288
        %v2401 = vpop.f32.mrf.mxu0
        %v2402 = vadd.f32 0.0, %v2401
        %v2403 = vpop.f32.mrf.mxu0
        %2404 = vmatprep.mubr.f32.mxu0 0.0
        %2405 = vmatmul.mubr.f32.gmra.mxu0 %v2291
        %v2406 = vpop.f32.mrf.mxu0
        %v2407 = vadd.f32 0.0, %v2406
        %v2408 = vpop.f32.mrf.mxu0
        %2409 = vmatprep.mubr.f32.mxu0 0.0
        %2410 = vmatmul.mubr.f32.gmra.mxu0 %v2294
        %v2411 = vpop.f32.mrf.mxu0
        %v2412 = vadd.f32 0.0, %v2411
        %v2413 = vpop.f32.mrf.mxu0
        %2414 = vmatprep.mubr.f32.mxu0 0.0
        %2415 = vmatmul.mubr.f32.gmra.mxu0 %v2297
        %v2416 = vpop.f32.mrf.mxu0
        %v2417 = vadd.f32 0.0, %v2416
        %v2418 = vpop.f32.mrf.mxu0
        %2419 = vmatprep.mubr.f32.mxu0 0.0
        %2420 = vmatmul.mubr.f32.gmra.mxu0 %v2300
        %v2421 = vpop.f32.mrf.mxu0
        %v2422 = vadd.f32 0.0, %v2421
        %v2423 = vpop.f32.mrf.mxu0
        %2424 = vmatprep.mubr.f32.mxu0 0.0
        %2425 = vmatmul.mubr.f32.gmra.mxu0 %v2303
        %v2426 = vpop.f32.mrf.mxu0
        %v2427 = vadd.f32 0.0, %v2426
        %v2428 = vpop.f32.mrf.mxu0
        %2429 = vmatprep.mubr.f32.mxu0 0.0
        %2430 = vmatmul.mubr.f32.gmra.mxu0 %v2306
        %v2431 = vpop.f32.mrf.mxu0
        %v2432 = vadd.f32 0.0, %v2431
        %v2433 = vpop.f32.mrf.mxu0
        %2434 = vmatprep.mubr.f32.mxu0 0.0
        %2435 = vmatmul.mubr.f32.gmra.mxu0 %v2309
        %v2436 = vpop.f32.mrf.mxu0
        %v2437 = vadd.f32 0.0, %v2436
        %v2438 = vpop.f32.mrf.mxu0
        %2439 = vmatprep.mubr.f32.mxu0 0.0
        %2440 = vmatmul.mubr.f32.gmra.mxu0 %v2312
        %v2441 = vpop.f32.mrf.mxu0
        %v2442 = vadd.f32 0.0, %v2441
        %v2443 = vpop.f32.mrf.mxu0
        %2444 = vmatprep.mubr.f32.mxu0 0.0
        %2445 = vmatmul.mubr.f32.gmra.mxu0 %v2315
        %v2446 = vpop.f32.mrf.mxu0
        %v2447 = vadd.f32 0.0, %v2446
        %v2448 = vpop.f32.mrf.mxu0
        %2449 = vmatprep.mubr.f32.mxu0 0.0
        %2450 = vmatmul.mubr.f32.gmra.mxu0 %v2318
        %v2451 = vpop.f32.mrf.mxu0
        %v2452 = vadd.f32 0.0, %v2451
        %v2453 = vpop.f32.mrf.mxu0
        %2454 = vmatprep.mubr.f32.mxu0 0.0
        %2455 = vmatmul.mubr.f32.gmra.mxu0 %v2321
        %v2456 = vpop.f32.mrf.mxu0
        %v2457 = vadd.f32 0.0, %v2456
        %v2458 = vpop.f32.mrf.mxu0
        %2459 = vmatprep.mubr.f32.mxu0 0.0
        %2460 = vmatmul.mubr.f32.gmra.mxu0 %v2324
        %v2461 = vpop.f32.mrf.mxu0
        %v2462 = vadd.f32 0.0, %v2461
        %v2463 = vpop.f32.mrf.mxu0
        %2464 = vmatprep.mubr.f32.mxu0 0.0
        %2465 = vmatmul.mubr.f32.gmra.mxu0 %v2327
        %v2466 = vpop.f32.mrf.mxu0
        %v2467 = vadd.f32 0.0, %v2466
        %v2468 = vpop.f32.mrf.mxu0
        %2469 = vmatprep.mubr.f32.mxu0 0.0
        %2470 = vmatmul.mubr.f32.gmra.mxu0 %v2330
        %v2471 = vpop.f32.mrf.mxu0
        %v2472 = vadd.f32 0.0, %v2471
        %v2473 = vpop.f32.mrf.mxu0
        %2474 = vmatprep.mubr.f32.mxu0 0.0
        %2475 = vmatmul.mubr.f32.gmra.mxu0 %v2333
        %v2476 = vpop.f32.mrf.mxu0
        %v2477 = vadd.f32 0.0, %v2476
        %v2478 = vpop.f32.mrf.mxu0
        %2479 = vdwg.mxu0
        %v2481 = vsel %vm576, %v2245, 0
        %v2484 = vsel %vm576, %v2246, 0
        %v2487 = vsel %vm576, %v2247, 0
        %v2490 = vsel %vm576, %v2248, 0
        %v2493 = vsel %vm576, %v2249, 0
        %v2496 = vsel %vm576, %v2250, 0
        %v2499 = vsel %vm576, %v2251, 0
        %v2502 = vsel %vm576, %v2252, 0
        %v2505 = vsel %vm576, %v2253, 0
        %v2508 = vsel %vm576, %v2254, 0
        %v2511 = vsel %vm576, %v2255, 0
        %v2514 = vsel %vm576, %v2256, 0
        %v2517 = vsel %vm576, %v2257, 0
        %v2520 = vsel %vm576, %v2258, 0
        %v2523 = vsel %vm576, %v2259, 0
        %v2526 = vsel %vm576, %v2260, 0
        %2528 = vmatprep.subr.mxu0 0.0
        %2529 = vmatpush1.msra.mxu0 0.0
        %2530 = vmatprep.subr.mxu0 0.0
        %2531 = vmatpush1.msra.mxu0 0.0
        %2532 = vmatprep.subr.mxu0 0.0
        %2533 = vmatpush1.msra.mxu0 0.0
        %2534 = vmatprep.subr.mxu0 0.0
        %2535 = vmatpush1.msra.mxu0 0.0
        %2536 = vmatprep.subr.mxu0 0.0
        %2537 = vmatpush1.msra.mxu0 0.0
        %2538 = vmatprep.subr.mxu0 0.0
        %2539 = vmatpush1.msra.mxu0 0.0
        %2540 = vmatprep.subr.mxu0 0.0
        %2541 = vmatpush1.msra.mxu0 0.0
        %2542 = vmatprep.subr.mxu0 0.0
        %2543 = vmatpush1.msra.mxu0 0.0
        %2544 = vmatprep.subr.mxu0 0.0
        %2545 = vmatpush1.msra.mxu0 0.0
        %2546 = vmatprep.subr.mxu0 0.0
        %2547 = vmatpush1.msra.mxu0 0.0
        %2548 = vmatprep.subr.mxu0 0.0
        %2549 = vmatpush1.msra.mxu0 0.0
        %2550 = vmatprep.subr.mxu0 0.0
        %2551 = vmatpush1.msra.mxu0 0.0
        %2552 = vmatprep.subr.mxu0 0.0
        %2553 = vmatpush1.msra.mxu0 %v2265
        %2554 = vmatprep.subr.mxu0 0.0
        %2555 = vmatpush1.msra.mxu0 %v2264
        %2556 = vmatprep.subr.mxu0 0.0
        %2557 = vmatpush1.msra.mxu0 %v2263
        %2558 = vmatprep.subr.mxu0 0.0
        %2559 = vmatpush1.msra.mxu0 %v2262
        %2560 = vmatprep.subr.mxu0 0.0
        %2561 = vmatpush2.msra.mxu0 0.0
        %2562 = vmatprep.subr.mxu0 0.0
        %2563 = vmatpush2.msra.mxu0 0.0
        %2564 = vmatprep.subr.mxu0 0.0
        %2565 = vmatpush2.msra.mxu0 0.0
        %2566 = vmatprep.subr.mxu0 0.0
        %2567 = vmatpush2.msra.mxu0 0.0
        %2568 = vmatprep.subr.mxu0 0.0
        %2569 = vmatpush2.msra.mxu0 0.0
        %2570 = vmatprep.subr.mxu0 0.0
        %2571 = vmatpush2.msra.mxu0 0.0
        %2572 = vmatprep.subr.mxu0 0.0
        %2573 = vmatpush2.msra.mxu0 0.0
        %2574 = vmatprep.subr.mxu0 0.0
        %2575 = vmatpush2.msra.mxu0 0.0
        %2576 = vmatprep.subr.mxu0 0.0
        %2577 = vmatpush2.msra.mxu0 0.0
        %2578 = vmatprep.subr.mxu0 0.0
        %2579 = vmatpush2.msra.mxu0 0.0
        %2580 = vmatprep.subr.mxu0 0.0
        %2581 = vmatpush2.msra.mxu0 0.0
        %2582 = vmatprep.subr.mxu0 0.0
        %2583 = vmatpush2.msra.mxu0 0.0
        %2584 = vmatprep.subr.mxu0 0.0
        %2585 = vmatpush2.msra.mxu0 0.0
        %2586 = vmatprep.subr.mxu0 0.0
        %2587 = vmatpush2.msra.mxu0 0.0
        %2588 = vmatprep.subr.mxu0 0.0
        %2589 = vmatpush2.msra.mxu0 0.0
        %2590 = vmatprep.subr.mxu0 0.0
        %2591 = vmatpush2.msra.mxu0 0.0
        %2592 = vmatprep.mubr.f32.mxu0 0.0
        %2593 = vmatmul.mubr.f32.gmra.mxu0 %v2481
        %v2594 = vpop.f32.mrf.mxu0
        %v2595 = vadd.f32 %v2402, %v2594
        %v2596 = vpop.f32.mrf.mxu0
        %2597 = vmatprep.mubr.f32.mxu0 0.0
        %2598 = vmatmul.mubr.f32.gmra.mxu0 %v2484
        %v2599 = vpop.f32.mrf.mxu0
        %v2600 = vadd.f32 %v2407, %v2599
        %v2601 = vpop.f32.mrf.mxu0
        %2602 = vmatprep.mubr.f32.mxu0 0.0
        %2603 = vmatmul.mubr.f32.gmra.mxu0 %v2487
        %v2604 = vpop.f32.mrf.mxu0
        %v2605 = vadd.f32 %v2412, %v2604
        %v2606 = vpop.f32.mrf.mxu0
        %2607 = vmatprep.mubr.f32.mxu0 0.0
        %2608 = vmatmul.mubr.f32.gmra.mxu0 %v2490
        %v2609 = vpop.f32.mrf.mxu0
        %v2610 = vadd.f32 %v2417, %v2609
        %v2611 = vpop.f32.mrf.mxu0
        %2612 = vmatprep.mubr.f32.mxu0 0.0
        %2613 = vmatmul.mubr.f32.gmra.mxu0 %v2493
        %v2614 = vpop.f32.mrf.mxu0
        %v2615 = vadd.f32 %v2422, %v2614
        %v2616 = vpop.f32.mrf.mxu0
        %2617 = vmatprep.mubr.f32.mxu0 0.0
        %2618 = vmatmul.mubr.f32.gmra.mxu0 %v2496
        %v2619 = vpop.f32.mrf.mxu0
        %v2620 = vadd.f32 %v2427, %v2619
        %v2621 = vpop.f32.mrf.mxu0
        %2622 = vmatprep.mubr.f32.mxu0 0.0
        %2623 = vmatmul.mubr.f32.gmra.mxu0 %v2499
        %v2624 = vpop.f32.mrf.mxu0
        %v2625 = vadd.f32 %v2432, %v2624
        %v2626 = vpop.f32.mrf.mxu0
        %2627 = vmatprep.mubr.f32.mxu0 0.0
        %2628 = vmatmul.mubr.f32.gmra.mxu0 %v2502
        %v2629 = vpop.f32.mrf.mxu0
        %v2630 = vadd.f32 %v2437, %v2629
        %v2631 = vpop.f32.mrf.mxu0
        %2632 = vmatprep.mubr.f32.mxu0 0.0
        %2633 = vmatmul.mubr.f32.gmra.mxu0 %v2505
        %v2634 = vpop.f32.mrf.mxu0
        %v2635 = vadd.f32 %v2442, %v2634
        %v2636 = vpop.f32.mrf.mxu0
        %2637 = vmatprep.mubr.f32.mxu0 0.0
        %2638 = vmatmul.mubr.f32.gmra.mxu0 %v2508
        %v2639 = vpop.f32.mrf.mxu0
        %v2640 = vadd.f32 %v2447, %v2639
        %v2641 = vpop.f32.mrf.mxu0
        %2642 = vmatprep.mubr.f32.mxu0 0.0
        %2643 = vmatmul.mubr.f32.gmra.mxu0 %v2511
        %v2644 = vpop.f32.mrf.mxu0
        %v2645 = vadd.f32 %v2452, %v2644
        %v2646 = vpop.f32.mrf.mxu0
        %2647 = vmatprep.mubr.f32.mxu0 0.0
        %2648 = vmatmul.mubr.f32.gmra.mxu0 %v2514
        %v2649 = vpop.f32.mrf.mxu0
        %v2650 = vadd.f32 %v2457, %v2649
        %v2651 = vpop.f32.mrf.mxu0
        %2652 = vmatprep.mubr.f32.mxu0 0.0
        %2653 = vmatmul.mubr.f32.gmra.mxu0 %v2517
        %v2654 = vpop.f32.mrf.mxu0
        %v2655 = vadd.f32 %v2462, %v2654
        %v2656 = vpop.f32.mrf.mxu0
        %2657 = vmatprep.mubr.f32.mxu0 0.0
        %2658 = vmatmul.mubr.f32.gmra.mxu0 %v2520
        %v2659 = vpop.f32.mrf.mxu0
        %v2660 = vadd.f32 %v2467, %v2659
        %v2661 = vpop.f32.mrf.mxu0
        %2662 = vmatprep.mubr.f32.mxu0 0.0
        %2663 = vmatmul.mubr.f32.gmra.mxu0 %v2523
        %v2664 = vpop.f32.mrf.mxu0
        %v2665 = vadd.f32 %v2472, %v2664
        %v2666 = vpop.f32.mrf.mxu0
        %2667 = vmatprep.mubr.f32.mxu0 0.0
        %2668 = vmatmul.mubr.f32.gmra.mxu0 %v2526
        %v2669 = vpop.f32.mrf.mxu0
        %v2670 = vadd.f32 %v2477, %v2669
        %v2671 = vpop.f32.mrf.mxu0
        %2672 = vdwg.mxu0
        %s2673 = scalar_lea.vmem [#allocation5], 160
        %v2674 = vld [vmem:[%s2673] sm:$0xff]
        %v2675 = vld [vmem:[%s2673 + $0x8] sm:$0xff]
        %v2676 = vld [vmem:[%s2673 + $0x10] sm:$0xff]
        %v2677 = vld [vmem:[%s2673 + $0x18] sm:$0xff]
        %v2679 = vsel %vm576, %v2229, 0
        %v2682 = vsel %vm576, %v2230, 0
        %v2685 = vsel %vm576, %v2231, 0
        %v2688 = vsel %vm576, %v2232, 0
        %v2691 = vsel %vm576, %v2233, 0
        %v2694 = vsel %vm576, %v2234, 0
        %v2697 = vsel %vm576, %v2235, 0
        %v2700 = vsel %vm576, %v2236, 0
        %v2703 = vsel %vm576, %v2237, 0
        %v2706 = vsel %vm576, %v2238, 0
        %v2709 = vsel %vm576, %v2239, 0
        %v2712 = vsel %vm576, %v2240, 0
        %v2715 = vsel %vm576, %v2241, 0
        %v2718 = vsel %vm576, %v2242, 0
        %v2721 = vsel %vm576, %v2243, 0
        %v2724 = vsel %vm576, %v2244, 0
        %2726 = vmatprep.subr.mxu0 0.0
        %2727 = vmatpush1.msra.mxu0 0.0
        %2728 = vmatprep.subr.mxu0 0.0
        %2729 = vmatpush1.msra.mxu0 0.0
        %2730 = vmatprep.subr.mxu0 0.0
        %2731 = vmatpush1.msra.mxu0 0.0
        %2732 = vmatprep.subr.mxu0 0.0
        %2733 = vmatpush1.msra.mxu0 0.0
        %2734 = vmatprep.subr.mxu0 0.0
        %2735 = vmatpush1.msra.mxu0 0.0
        %2736 = vmatprep.subr.mxu0 0.0
        %2737 = vmatpush1.msra.mxu0 0.0
        %2738 = vmatprep.subr.mxu0 0.0
        %2739 = vmatpush1.msra.mxu0 0.0
        %2740 = vmatprep.subr.mxu0 0.0
        %2741 = vmatpush1.msra.mxu0 0.0
        %2742 = vmatprep.subr.mxu0 0.0
        %2743 = vmatpush1.msra.mxu0 0.0
        %2744 = vmatprep.subr.mxu0 0.0
        %2745 = vmatpush1.msra.mxu0 0.0
        %2746 = vmatprep.subr.mxu0 0.0
        %2747 = vmatpush1.msra.mxu0 0.0
        %2748 = vmatprep.subr.mxu0 0.0
        %2749 = vmatpush1.msra.mxu0 0.0
        %2750 = vmatprep.subr.mxu0 0.0
        %2751 = vmatpush1.msra.mxu0 %v2677
        %2752 = vmatprep.subr.mxu0 0.0
        %2753 = vmatpush1.msra.mxu0 %v2676
        %2754 = vmatprep.subr.mxu0 0.0
        %2755 = vmatpush1.msra.mxu0 %v2675
        %2756 = vmatprep.subr.mxu0 0.0
        %2757 = vmatpush1.msra.mxu0 %v2674
        %2758 = vmatprep.subr.mxu0 0.0
        %2759 = vmatpush2.msra.mxu0 0.0
        %2760 = vmatprep.subr.mxu0 0.0
        %2761 = vmatpush2.msra.mxu0 0.0
        %2762 = vmatprep.subr.mxu0 0.0
        %2763 = vmatpush2.msra.mxu0 0.0
        %2764 = vmatprep.subr.mxu0 0.0
        %2765 = vmatpush2.msra.mxu0 0.0
        %2766 = vmatprep.subr.mxu0 0.0
        %2767 = vmatpush2.msra.mxu0 0.0
        %2768 = vmatprep.subr.mxu0 0.0
        %2769 = vmatpush2.msra.mxu0 0.0
        %2770 = vmatprep.subr.mxu0 0.0
        %2771 = vmatpush2.msra.mxu0 0.0
        %2772 = vmatprep.subr.mxu0 0.0
        %2773 = vmatpush2.msra.mxu0 0.0
        %2774 = vmatprep.subr.mxu0 0.0
        %2775 = vmatpush2.msra.mxu0 0.0
        %2776 = vmatprep.subr.mxu0 0.0
        %2777 = vmatpush2.msra.mxu0 0.0
        %2778 = vmatprep.subr.mxu0 0.0
        %2779 = vmatpush2.msra.mxu0 0.0
        %2780 = vmatprep.subr.mxu0 0.0
        %2781 = vmatpush2.msra.mxu0 0.0
        %2782 = vmatprep.subr.mxu0 0.0
        %2783 = vmatpush2.msra.mxu0 0.0
        %2784 = vmatprep.subr.mxu0 0.0
        %2785 = vmatpush2.msra.mxu0 0.0
        %2786 = vmatprep.subr.mxu0 0.0
        %2787 = vmatpush2.msra.mxu0 0.0
        %2788 = vmatprep.subr.mxu0 0.0
        %2789 = vmatpush2.msra.mxu0 0.0
        %2790 = vmatprep.mubr.f32.mxu0 0.0
        %2791 = vmatmul.mubr.f32.gmra.mxu0 %v2679
        %v2792 = vpop.f32.mrf.mxu0
        %v2793 = vadd.f32 0.0, %v2792
        %v2794 = vpop.f32.mrf.mxu0
        %2795 = vmatprep.mubr.f32.mxu0 0.0
        %2796 = vmatmul.mubr.f32.gmra.mxu0 %v2682
        %v2797 = vpop.f32.mrf.mxu0
        %v2798 = vadd.f32 0.0, %v2797
        %v2799 = vpop.f32.mrf.mxu0
        %2800 = vmatprep.mubr.f32.mxu0 0.0
        %2801 = vmatmul.mubr.f32.gmra.mxu0 %v2685
        %v2802 = vpop.f32.mrf.mxu0
        %v2803 = vadd.f32 0.0, %v2802
        %v2804 = vpop.f32.mrf.mxu0
        %2805 = vmatprep.mubr.f32.mxu0 0.0
        %2806 = vmatmul.mubr.f32.gmra.mxu0 %v2688
        %v2807 = vpop.f32.mrf.mxu0
        %v2808 = vadd.f32 0.0, %v2807
        %v2809 = vpop.f32.mrf.mxu0
        %2810 = vmatprep.mubr.f32.mxu0 0.0
        %2811 = vmatmul.mubr.f32.gmra.mxu0 %v2691
        %v2812 = vpop.f32.mrf.mxu0
        %v2813 = vadd.f32 0.0, %v2812
        %v2814 = vpop.f32.mrf.mxu0
        %2815 = vmatprep.mubr.f32.mxu0 0.0
        %2816 = vmatmul.mubr.f32.gmra.mxu0 %v2694
        %v2817 = vpop.f32.mrf.mxu0
        %v2818 = vadd.f32 0.0, %v2817
        %v2819 = vpop.f32.mrf.mxu0
        %2820 = vmatprep.mubr.f32.mxu0 0.0
        %2821 = vmatmul.mubr.f32.gmra.mxu0 %v2697
        %v2822 = vpop.f32.mrf.mxu0
        %v2823 = vadd.f32 0.0, %v2822
        %v2824 = vpop.f32.mrf.mxu0
        %2825 = vmatprep.mubr.f32.mxu0 0.0
        %2826 = vmatmul.mubr.f32.gmra.mxu0 %v2700
        %v2827 = vpop.f32.mrf.mxu0
        %v2828 = vadd.f32 0.0, %v2827
        %v2829 = vpop.f32.mrf.mxu0
        %2830 = vmatprep.mubr.f32.mxu0 0.0
        %2831 = vmatmul.mubr.f32.gmra.mxu0 %v2703
        %v2832 = vpop.f32.mrf.mxu0
        %v2833 = vadd.f32 0.0, %v2832
        %v2834 = vpop.f32.mrf.mxu0
        %2835 = vmatprep.mubr.f32.mxu0 0.0
        %2836 = vmatmul.mubr.f32.gmra.mxu0 %v2706
        %v2837 = vpop.f32.mrf.mxu0
        %v2838 = vadd.f32 0.0, %v2837
        %v2839 = vpop.f32.mrf.mxu0
        %2840 = vmatprep.mubr.f32.mxu0 0.0
        %2841 = vmatmul.mubr.f32.gmra.mxu0 %v2709
        %v2842 = vpop.f32.mrf.mxu0
        %v2843 = vadd.f32 0.0, %v2842
        %v2844 = vpop.f32.mrf.mxu0
        %2845 = vmatprep.mubr.f32.mxu0 0.0
        %2846 = vmatmul.mubr.f32.gmra.mxu0 %v2712
        %v2847 = vpop.f32.mrf.mxu0
        %v2848 = vadd.f32 0.0, %v2847
        %v2849 = vpop.f32.mrf.mxu0
        %2850 = vmatprep.mubr.f32.mxu0 0.0
        %2851 = vmatmul.mubr.f32.gmra.mxu0 %v2715
        %v2852 = vpop.f32.mrf.mxu0
        %v2853 = vadd.f32 0.0, %v2852
        %v2854 = vpop.f32.mrf.mxu0
        %2855 = vmatprep.mubr.f32.mxu0 0.0
        %2856 = vmatmul.mubr.f32.gmra.mxu0 %v2718
        %v2857 = vpop.f32.mrf.mxu0
        %v2858 = vadd.f32 0.0, %v2857
        %v2859 = vpop.f32.mrf.mxu0
        %2860 = vmatprep.mubr.f32.mxu0 0.0
        %2861 = vmatmul.mubr.f32.gmra.mxu0 %v2721
        %v2862 = vpop.f32.mrf.mxu0
        %v2863 = vadd.f32 0.0, %v2862
        %v2864 = vpop.f32.mrf.mxu0
        %2865 = vmatprep.mubr.f32.mxu0 0.0
        %2866 = vmatmul.mubr.f32.gmra.mxu0 %v2724
        %v2867 = vpop.f32.mrf.mxu0
        %v2868 = vadd.f32 0.0, %v2867
        %v2869 = vpop.f32.mrf.mxu0
        %2870 = vdwg.mxu0
        %v2871 = vadd.f32 %v2595, %v2793
        %v2872 = vadd.f32 %v2600, %v2798
        %v2873 = vadd.f32 %v2605, %v2803
        %v2874 = vadd.f32 %v2610, %v2808
        %v2875 = vadd.f32 %v2615, %v2813
        %v2876 = vadd.f32 %v2620, %v2818
        %v2877 = vadd.f32 %v2625, %v2823
        %v2878 = vadd.f32 %v2630, %v2828
        %v2879 = vadd.f32 %v2635, %v2833
        %v2880 = vadd.f32 %v2640, %v2838
        %v2881 = vadd.f32 %v2645, %v2843
        %v2882 = vadd.f32 %v2650, %v2848
        %v2883 = vadd.f32 %v2655, %v2853
        %v2884 = vadd.f32 %v2660, %v2858
        %v2885 = vadd.f32 %v2665, %v2863
        %v2886 = vadd.f32 %v2670, %v2868
        %s2887 = scalar_lea.vmem %s3, 1
        %v2888 = vld [vmem:[%s2887] sm:$0x1]
        %v2890 = vlaneseq
        %v2891 = vshrl.u32 %v2890, 7
        %v2892 = vsub.s32 0, %v2891
        %v2893 = vrot.slane %v2888, %v2892
        %v2895 = vadd.f32 %v2871, %v2893
        %v2896 = vadd.f32 %v2872, %v2893
        %v2897 = vadd.f32 %v2873, %v2893
        %v2898 = vadd.f32 %v2874, %v2893
        %v2899 = vadd.f32 %v2875, %v2893
        %v2900 = vadd.f32 %v2876, %v2893
        %v2901 = vadd.f32 %v2877, %v2893
        %v2902 = vadd.f32 %v2878, %v2893
        %v2903 = vadd.f32 %v2879, %v2893
        %v2904 = vadd.f32 %v2880, %v2893
        %v2905 = vadd.f32 %v2881, %v2893
        %v2906 = vadd.f32 %v2882, %v2893
        %v2907 = vadd.f32 %v2883, %v2893
        %v2908 = vadd.f32 %v2884, %v2893
        %v2909 = vadd.f32 %v2885, %v2893
        %v2910 = vadd.f32 %v2886, %v2893
        %v2911 = vmax.f32 %v2895, 0.0
        %v2912 = vmax.f32 %v2896, 0.0
        %v2913 = vmax.f32 %v2897, 0.0
        %v2914 = vmax.f32 %v2898, 0.0
        %v2915 = vmax.f32 %v2899, 0.0
        %v2916 = vmax.f32 %v2900, 0.0
        %v2917 = vmax.f32 %v2901, 0.0
        %v2918 = vmax.f32 %v2902, 0.0
        %v2919 = vmax.f32 %v2903, 0.0
        %v2920 = vmax.f32 %v2904, 0.0
        %v2921 = vmax.f32 %v2905, 0.0
        %v2922 = vmax.f32 %v2906, 0.0
        %v2923 = vmax.f32 %v2907, 0.0
        %v2924 = vmax.f32 %v2908, 0.0
        %v2925 = vmax.f32 %v2909, 0.0
        %v2926 = vmax.f32 %v2910, 0.0
        %2927 = vst.msk [vmem:[#allocation2 + $0x8] sm:$0xff] %vm576, %v2911
        %2928 = vst.msk [vmem:[#allocation2 + $0x10] sm:$0xff] %vm576, %v2912
        %2929 = vst.msk [vmem:[#allocation2 + $0x20] sm:$0xff] %vm576, %v2913
        %2930 = vst.msk [vmem:[#allocation2 + $0x28] sm:$0xff] %vm576, %v2914
        %2931 = vst.msk [vmem:[#allocation2 + $0x38] sm:$0xff] %vm576, %v2915
        %2932 = vst.msk [vmem:[#allocation2 + $0x40] sm:$0xff] %vm576, %v2916
        %2933 = vst.msk [vmem:[#allocation2 + $0x50] sm:$0xff] %vm576, %v2917
        %2934 = vst.msk [vmem:[#allocation2 + $0x58] sm:$0xff] %vm576, %v2918
        %2935 = vst.msk [vmem:[#allocation2 + $0x68] sm:$0xff] %vm576, %v2919
        %2936 = vst.msk [vmem:[#allocation2 + $0x70] sm:$0xff] %vm576, %v2920
        %2937 = vst.msk [vmem:[#allocation2 + $0x80] sm:$0xff] %vm576, %v2921
        %2938 = vst.msk [vmem:[#allocation2 + $0x88] sm:$0xff] %vm576, %v2922
        %2939 = vst.msk [vmem:[#allocation2 + $0x98] sm:$0xff] %vm576, %v2923
        %2940 = vst.msk [vmem:[#allocation2 + $0xa0] sm:$0xff] %vm576, %v2924
        %2941 = vst.msk [vmem:[#allocation2 + $0xb0] sm:$0xff] %vm576, %v2925
        %2942 = vst.msk [vmem:[#allocation2 + $0xb8] sm:$0xff] %vm576, %v2926
        %v2943 = vld [vmem:[#allocation2 + $0x4] sm:$0xff]
        %v2944 = vld [vmem:[#allocation2 + $0xc] sm:$0xff]
        %v2945 = vld [vmem:[#allocation2 + $0x1c] sm:$0xff]
        %v2946 = vld [vmem:[#allocation2 + $0x24] sm:$0xff]
        %v2947 = vld [vmem:[#allocation2 + $0x34] sm:$0xff]
        %v2948 = vld [vmem:[#allocation2 + $0x3c] sm:$0xff]
        %v2949 = vld [vmem:[#allocation2 + $0x4c] sm:$0xff]
        %v2950 = vld [vmem:[#allocation2 + $0x54] sm:$0xff]
        %v2951 = vld [vmem:[#allocation2 + $0x64] sm:$0xff]
        %v2952 = vld [vmem:[#allocation2 + $0x6c] sm:$0xff]
        %v2953 = vld [vmem:[#allocation2 + $0x7c] sm:$0xff]
        %v2954 = vld [vmem:[#allocation2 + $0x84] sm:$0xff]
        %v2955 = vld [vmem:[#allocation2 + $0x94] sm:$0xff]
        %v2956 = vld [vmem:[#allocation2 + $0x9c] sm:$0xff]
        %v2957 = vld [vmem:[#allocation2 + $0xac] sm:$0xff]
        %v2958 = vld [vmem:[#allocation2 + $0xb4] sm:$0xff]
        %s2959 = scalar_lea.vmem [#allocation7], 96
        %v2960 = vld [vmem:[%s2959] sm:$0xff]
        %v2961 = vld [vmem:[%s2959 + $0x8] sm:$0xff]
        %v2962 = vld [vmem:[%s2959 + $0x10] sm:$0xff]
        %v2963 = vld [vmem:[%s2959 + $0x18] sm:$0xff]
        %v2964 = vld [vmem:[#allocation2 + $0x6] sm:$0xff]
        %v2965 = vld [vmem:[#allocation2 + $0xe] sm:$0xff]
        %v2966 = vld [vmem:[#allocation2 + $0x1e] sm:$0xff]
        %v2967 = vld [vmem:[#allocation2 + $0x26] sm:$0xff]
        %v2968 = vld [vmem:[#allocation2 + $0x36] sm:$0xff]
        %v2969 = vld [vmem:[#allocation2 + $0x3e] sm:$0xff]
        %v2970 = vld [vmem:[#allocation2 + $0x4e] sm:$0xff]
        %v2971 = vld [vmem:[#allocation2 + $0x56] sm:$0xff]
        %v2972 = vld [vmem:[#allocation2 + $0x66] sm:$0xff]
        %v2973 = vld [vmem:[#allocation2 + $0x6e] sm:$0xff]
        %v2974 = vld [vmem:[#allocation2 + $0x7e] sm:$0xff]
        %v2975 = vld [vmem:[#allocation2 + $0x86] sm:$0xff]
        %v2976 = vld [vmem:[#allocation2 + $0x96] sm:$0xff]
        %v2977 = vld [vmem:[#allocation2 + $0x9e] sm:$0xff]
        %v2978 = vld [vmem:[#allocation2 + $0xae] sm:$0xff]
        %v2979 = vld [vmem:[#allocation2 + $0xb6] sm:$0xff]
        %s2980 = scalar_lea.vmem [#allocation7], 128
        %v2981 = vld [vmem:[%s2980] sm:$0xff]
        %v2982 = vld [vmem:[%s2980 + $0x8] sm:$0xff]
        %v2983 = vld [vmem:[%s2980 + $0x10] sm:$0xff]
        %v2984 = vld [vmem:[%s2980 + $0x18] sm:$0xff]
        %v2986 = vsel %vm576, %v2964, 0
        %v2989 = vsel %vm576, %v2965, 0
        %v2992 = vsel %vm576, %v2966, 0
        %v2995 = vsel %vm576, %v2967, 0
        %v2998 = vsel %vm576, %v2968, 0
        %v3001 = vsel %vm576, %v2969, 0
        %v3004 = vsel %vm576, %v2970, 0
        %v3007 = vsel %vm576, %v2971, 0
        %v3010 = vsel %vm576, %v2972, 0
        %v3013 = vsel %vm576, %v2973, 0
        %v3016 = vsel %vm576, %v2974, 0
        %v3019 = vsel %vm576, %v2975, 0
        %v3022 = vsel %vm576, %v2976, 0
        %v3025 = vsel %vm576, %v2977, 0
        %v3028 = vsel %vm576, %v2978, 0
        %v3031 = vsel %vm576, %v2979, 0
        %3033 = vmatprep.subr.mxu0 0.0
        %3034 = vmatpush1.msra.mxu0 0.0
        %3035 = vmatprep.subr.mxu0 0.0
        %3036 = vmatpush1.msra.mxu0 0.0
        %3037 = vmatprep.subr.mxu0 0.0
        %3038 = vmatpush1.msra.mxu0 0.0
        %3039 = vmatprep.subr.mxu0 0.0
        %3040 = vmatpush1.msra.mxu0 0.0
        %3041 = vmatprep.subr.mxu0 0.0
        %3042 = vmatpush1.msra.mxu0 0.0
        %3043 = vmatprep.subr.mxu0 0.0
        %3044 = vmatpush1.msra.mxu0 0.0
        %3045 = vmatprep.subr.mxu0 0.0
        %3046 = vmatpush1.msra.mxu0 0.0
        %3047 = vmatprep.subr.mxu0 0.0
        %3048 = vmatpush1.msra.mxu0 0.0
        %3049 = vmatprep.subr.mxu0 0.0
        %3050 = vmatpush1.msra.mxu0 0.0
        %3051 = vmatprep.subr.mxu0 0.0
        %3052 = vmatpush1.msra.mxu0 0.0
        %3053 = vmatprep.subr.mxu0 0.0
        %3054 = vmatpush1.msra.mxu0 0.0
        %3055 = vmatprep.subr.mxu0 0.0
        %3056 = vmatpush1.msra.mxu0 0.0
        %3057 = vmatprep.subr.mxu0 0.0
        %3058 = vmatpush1.msra.mxu0 %v2984
        %3059 = vmatprep.subr.mxu0 0.0
        %3060 = vmatpush1.msra.mxu0 %v2983
        %3061 = vmatprep.subr.mxu0 0.0
        %3062 = vmatpush1.msra.mxu0 %v2982
        %3063 = vmatprep.subr.mxu0 0.0
        %3064 = vmatpush1.msra.mxu0 %v2981
        %3065 = vmatprep.subr.mxu0 0.0
        %3066 = vmatpush2.msra.mxu0 0.0
        %3067 = vmatprep.subr.mxu0 0.0
        %3068 = vmatpush2.msra.mxu0 0.0
        %3069 = vmatprep.subr.mxu0 0.0
        %3070 = vmatpush2.msra.mxu0 0.0
        %3071 = vmatprep.subr.mxu0 0.0
        %3072 = vmatpush2.msra.mxu0 0.0
        %3073 = vmatprep.subr.mxu0 0.0
        %3074 = vmatpush2.msra.mxu0 0.0
        %3075 = vmatprep.subr.mxu0 0.0
        %3076 = vmatpush2.msra.mxu0 0.0
        %3077 = vmatprep.subr.mxu0 0.0
        %3078 = vmatpush2.msra.mxu0 0.0
        %3079 = vmatprep.subr.mxu0 0.0
        %3080 = vmatpush2.msra.mxu0 0.0
        %3081 = vmatprep.subr.mxu0 0.0
        %3082 = vmatpush2.msra.mxu0 0.0
        %3083 = vmatprep.subr.mxu0 0.0
        %3084 = vmatpush2.msra.mxu0 0.0
        %3085 = vmatprep.subr.mxu0 0.0
        %3086 = vmatpush2.msra.mxu0 0.0
        %3087 = vmatprep.subr.mxu0 0.0
        %3088 = vmatpush2.msra.mxu0 0.0
        %3089 = vmatprep.subr.mxu0 0.0
        %3090 = vmatpush2.msra.mxu0 0.0
        %3091 = vmatprep.subr.mxu0 0.0
        %3092 = vmatpush2.msra.mxu0 0.0
        %3093 = vmatprep.subr.mxu0 0.0
        %3094 = vmatpush2.msra.mxu0 0.0
        %3095 = vmatprep.subr.mxu0 0.0
        %3096 = vmatpush2.msra.mxu0 0.0
        %3097 = vmatprep.mubr.f32.mxu0 0.0
        %3098 = vmatmul.mubr.f32.gmra.mxu0 %v2986
        %v3099 = vpop.f32.mrf.mxu0
        %v3100 = vadd.f32 0.0, %v3099
        %v3101 = vpop.f32.mrf.mxu0
        %3102 = vmatprep.mubr.f32.mxu0 0.0
        %3103 = vmatmul.mubr.f32.gmra.mxu0 %v2989
        %v3104 = vpop.f32.mrf.mxu0
        %v3105 = vadd.f32 0.0, %v3104
        %v3106 = vpop.f32.mrf.mxu0
        %3107 = vmatprep.mubr.f32.mxu0 0.0
        %3108 = vmatmul.mubr.f32.gmra.mxu0 %v2992
        %v3109 = vpop.f32.mrf.mxu0
        %v3110 = vadd.f32 0.0, %v3109
        %v3111 = vpop.f32.mrf.mxu0
        %3112 = vmatprep.mubr.f32.mxu0 0.0
        %3113 = vmatmul.mubr.f32.gmra.mxu0 %v2995
        %v3114 = vpop.f32.mrf.mxu0
        %v3115 = vadd.f32 0.0, %v3114
        %v3116 = vpop.f32.mrf.mxu0
        %3117 = vmatprep.mubr.f32.mxu0 0.0
        %3118 = vmatmul.mubr.f32.gmra.mxu0 %v2998
        %v3119 = vpop.f32.mrf.mxu0
        %v3120 = vadd.f32 0.0, %v3119
        %v3121 = vpop.f32.mrf.mxu0
        %3122 = vmatprep.mubr.f32.mxu0 0.0
        %3123 = vmatmul.mubr.f32.gmra.mxu0 %v3001
        %v3124 = vpop.f32.mrf.mxu0
        %v3125 = vadd.f32 0.0, %v3124
        %v3126 = vpop.f32.mrf.mxu0
        %3127 = vmatprep.mubr.f32.mxu0 0.0
        %3128 = vmatmul.mubr.f32.gmra.mxu0 %v3004
        %v3129 = vpop.f32.mrf.mxu0
        %v3130 = vadd.f32 0.0, %v3129
        %v3131 = vpop.f32.mrf.mxu0
        %3132 = vmatprep.mubr.f32.mxu0 0.0
        %3133 = vmatmul.mubr.f32.gmra.mxu0 %v3007
        %v3134 = vpop.f32.mrf.mxu0
        %v3135 = vadd.f32 0.0, %v3134
        %v3136 = vpop.f32.mrf.mxu0
        %3137 = vmatprep.mubr.f32.mxu0 0.0
        %3138 = vmatmul.mubr.f32.gmra.mxu0 %v3010
        %v3139 = vpop.f32.mrf.mxu0
        %v3140 = vadd.f32 0.0, %v3139
        %v3141 = vpop.f32.mrf.mxu0
        %3142 = vmatprep.mubr.f32.mxu0 0.0
        %3143 = vmatmul.mubr.f32.gmra.mxu0 %v3013
        %v3144 = vpop.f32.mrf.mxu0
        %v3145 = vadd.f32 0.0, %v3144
        %v3146 = vpop.f32.mrf.mxu0
        %3147 = vmatprep.mubr.f32.mxu0 0.0
        %3148 = vmatmul.mubr.f32.gmra.mxu0 %v3016
        %v3149 = vpop.f32.mrf.mxu0
        %v3150 = vadd.f32 0.0, %v3149
        %v3151 = vpop.f32.mrf.mxu0
        %3152 = vmatprep.mubr.f32.mxu0 0.0
        %3153 = vmatmul.mubr.f32.gmra.mxu0 %v3019
        %v3154 = vpop.f32.mrf.mxu0
        %v3155 = vadd.f32 0.0, %v3154
        %v3156 = vpop.f32.mrf.mxu0
        %3157 = vmatprep.mubr.f32.mxu0 0.0
        %3158 = vmatmul.mubr.f32.gmra.mxu0 %v3022
        %v3159 = vpop.f32.mrf.mxu0
        %v3160 = vadd.f32 0.0, %v3159
        %v3161 = vpop.f32.mrf.mxu0
        %3162 = vmatprep.mubr.f32.mxu0 0.0
        %3163 = vmatmul.mubr.f32.gmra.mxu0 %v3025
        %v3164 = vpop.f32.mrf.mxu0
        %v3165 = vadd.f32 0.0, %v3164
        %v3166 = vpop.f32.mrf.mxu0
        %3167 = vmatprep.mubr.f32.mxu0 0.0
        %3168 = vmatmul.mubr.f32.gmra.mxu0 %v3028
        %v3169 = vpop.f32.mrf.mxu0
        %v3170 = vadd.f32 0.0, %v3169
        %v3171 = vpop.f32.mrf.mxu0
        %3172 = vmatprep.mubr.f32.mxu0 0.0
        %3173 = vmatmul.mubr.f32.gmra.mxu0 %v3031
        %v3174 = vpop.f32.mrf.mxu0
        %v3175 = vadd.f32 0.0, %v3174
        %v3176 = vpop.f32.mrf.mxu0
        %3177 = vdwg.mxu0
        %v3179 = vsel %vm576, %v2943, 0
        %v3182 = vsel %vm576, %v2944, 0
        %v3185 = vsel %vm576, %v2945, 0
        %v3188 = vsel %vm576, %v2946, 0
        %v3191 = vsel %vm576, %v2947, 0
        %v3194 = vsel %vm576, %v2948, 0
        %v3197 = vsel %vm576, %v2949, 0
        %v3200 = vsel %vm576, %v2950, 0
        %v3203 = vsel %vm576, %v2951, 0
        %v3206 = vsel %vm576, %v2952, 0
        %v3209 = vsel %vm576, %v2953, 0
        %v3212 = vsel %vm576, %v2954, 0
        %v3215 = vsel %vm576, %v2955, 0
        %v3218 = vsel %vm576, %v2956, 0
        %v3221 = vsel %vm576, %v2957, 0
        %v3224 = vsel %vm576, %v2958, 0
        %3226 = vmatprep.subr.mxu0 0.0
        %3227 = vmatpush1.msra.mxu0 0.0
        %3228 = vmatprep.subr.mxu0 0.0
        %3229 = vmatpush1.msra.mxu0 0.0
        %3230 = vmatprep.subr.mxu0 0.0
        %3231 = vmatpush1.msra.mxu0 0.0
        %3232 = vmatprep.subr.mxu0 0.0
        %3233 = vmatpush1.msra.mxu0 0.0
        %3234 = vmatprep.subr.mxu0 0.0
        %3235 = vmatpush1.msra.mxu0 0.0
        %3236 = vmatprep.subr.mxu0 0.0
        %3237 = vmatpush1.msra.mxu0 0.0
        %3238 = vmatprep.subr.mxu0 0.0
        %3239 = vmatpush1.msra.mxu0 0.0
        %3240 = vmatprep.subr.mxu0 0.0
        %3241 = vmatpush1.msra.mxu0 0.0
        %3242 = vmatprep.subr.mxu0 0.0
        %3243 = vmatpush1.msra.mxu0 0.0
        %3244 = vmatprep.subr.mxu0 0.0
        %3245 = vmatpush1.msra.mxu0 0.0
        %3246 = vmatprep.subr.mxu0 0.0
        %3247 = vmatpush1.msra.mxu0 0.0
        %3248 = vmatprep.subr.mxu0 0.0
        %3249 = vmatpush1.msra.mxu0 0.0
        %3250 = vmatprep.subr.mxu0 0.0
        %3251 = vmatpush1.msra.mxu0 %v2963
        %3252 = vmatprep.subr.mxu0 0.0
        %3253 = vmatpush1.msra.mxu0 %v2962
        %3254 = vmatprep.subr.mxu0 0.0
        %3255 = vmatpush1.msra.mxu0 %v2961
        %3256 = vmatprep.subr.mxu0 0.0
        %3257 = vmatpush1.msra.mxu0 %v2960
        %3258 = vmatprep.subr.mxu0 0.0
        %3259 = vmatpush2.msra.mxu0 0.0
        %3260 = vmatprep.subr.mxu0 0.0
        %3261 = vmatpush2.msra.mxu0 0.0
        %3262 = vmatprep.subr.mxu0 0.0
        %3263 = vmatpush2.msra.mxu0 0.0
        %3264 = vmatprep.subr.mxu0 0.0
        %3265 = vmatpush2.msra.mxu0 0.0
        %3266 = vmatprep.subr.mxu0 0.0
        %3267 = vmatpush2.msra.mxu0 0.0
        %3268 = vmatprep.subr.mxu0 0.0
        %3269 = vmatpush2.msra.mxu0 0.0
        %3270 = vmatprep.subr.mxu0 0.0
        %3271 = vmatpush2.msra.mxu0 0.0
        %3272 = vmatprep.subr.mxu0 0.0
        %3273 = vmatpush2.msra.mxu0 0.0
        %3274 = vmatprep.subr.mxu0 0.0
        %3275 = vmatpush2.msra.mxu0 0.0
        %3276 = vmatprep.subr.mxu0 0.0
        %3277 = vmatpush2.msra.mxu0 0.0
        %3278 = vmatprep.subr.mxu0 0.0
        %3279 = vmatpush2.msra.mxu0 0.0
        %3280 = vmatprep.subr.mxu0 0.0
        %3281 = vmatpush2.msra.mxu0 0.0
        %3282 = vmatprep.subr.mxu0 0.0
        %3283 = vmatpush2.msra.mxu0 0.0
        %3284 = vmatprep.subr.mxu0 0.0
        %3285 = vmatpush2.msra.mxu0 0.0
        %3286 = vmatprep.subr.mxu0 0.0
        %3287 = vmatpush2.msra.mxu0 0.0
        %3288 = vmatprep.subr.mxu0 0.0
        %3289 = vmatpush2.msra.mxu0 0.0
        %3290 = vmatprep.mubr.f32.mxu0 0.0
        %3291 = vmatmul.mubr.f32.gmra.mxu0 %v3179
        %v3292 = vpop.f32.mrf.mxu0
        %v3293 = vadd.f32 %v3100, %v3292
        %v3294 = vpop.f32.mrf.mxu0
        %3295 = vmatprep.mubr.f32.mxu0 0.0
        %3296 = vmatmul.mubr.f32.gmra.mxu0 %v3182
        %v3297 = vpop.f32.mrf.mxu0
        %v3298 = vadd.f32 %v3105, %v3297
        %v3299 = vpop.f32.mrf.mxu0
        %3300 = vmatprep.mubr.f32.mxu0 0.0
        %3301 = vmatmul.mubr.f32.gmra.mxu0 %v3185
        %v3302 = vpop.f32.mrf.mxu0
        %v3303 = vadd.f32 %v3110, %v3302
        %v3304 = vpop.f32.mrf.mxu0
        %3305 = vmatprep.mubr.f32.mxu0 0.0
        %3306 = vmatmul.mubr.f32.gmra.mxu0 %v3188
        %v3307 = vpop.f32.mrf.mxu0
        %v3308 = vadd.f32 %v3115, %v3307
        %v3309 = vpop.f32.mrf.mxu0
        %3310 = vmatprep.mubr.f32.mxu0 0.0
        %3311 = vmatmul.mubr.f32.gmra.mxu0 %v3191
        %v3312 = vpop.f32.mrf.mxu0
        %v3313 = vadd.f32 %v3120, %v3312
        %v3314 = vpop.f32.mrf.mxu0
        %3315 = vmatprep.mubr.f32.mxu0 0.0
        %3316 = vmatmul.mubr.f32.gmra.mxu0 %v3194
        %v3317 = vpop.f32.mrf.mxu0
        %v3318 = vadd.f32 %v3125, %v3317
        %v3319 = vpop.f32.mrf.mxu0
        %3320 = vmatprep.mubr.f32.mxu0 0.0
        %3321 = vmatmul.mubr.f32.gmra.mxu0 %v3197
        %v3322 = vpop.f32.mrf.mxu0
        %v3323 = vadd.f32 %v3130, %v3322
        %v3324 = vpop.f32.mrf.mxu0
        %3325 = vmatprep.mubr.f32.mxu0 0.0
        %3326 = vmatmul.mubr.f32.gmra.mxu0 %v3200
        %v3327 = vpop.f32.mrf.mxu0
        %v3328 = vadd.f32 %v3135, %v3327
        %v3329 = vpop.f32.mrf.mxu0
        %3330 = vmatprep.mubr.f32.mxu0 0.0
        %3331 = vmatmul.mubr.f32.gmra.mxu0 %v3203
        %v3332 = vpop.f32.mrf.mxu0
        %v3333 = vadd.f32 %v3140, %v3332
        %v3334 = vpop.f32.mrf.mxu0
        %3335 = vmatprep.mubr.f32.mxu0 0.0
        %3336 = vmatmul.mubr.f32.gmra.mxu0 %v3206
        %v3337 = vpop.f32.mrf.mxu0
        %v3338 = vadd.f32 %v3145, %v3337
        %v3339 = vpop.f32.mrf.mxu0
        %3340 = vmatprep.mubr.f32.mxu0 0.0
        %3341 = vmatmul.mubr.f32.gmra.mxu0 %v3209
        %v3342 = vpop.f32.mrf.mxu0
        %v3343 = vadd.f32 %v3150, %v3342
        %v3344 = vpop.f32.mrf.mxu0
        %3345 = vmatprep.mubr.f32.mxu0 0.0
        %3346 = vmatmul.mubr.f32.gmra.mxu0 %v3212
        %v3347 = vpop.f32.mrf.mxu0
        %v3348 = vadd.f32 %v3155, %v3347
        %v3349 = vpop.f32.mrf.mxu0
        %3350 = vmatprep.mubr.f32.mxu0 0.0
        %3351 = vmatmul.mubr.f32.gmra.mxu0 %v3215
        %v3352 = vpop.f32.mrf.mxu0
        %v3353 = vadd.f32 %v3160, %v3352
        %v3354 = vpop.f32.mrf.mxu0
        %3355 = vmatprep.mubr.f32.mxu0 0.0
        %3356 = vmatmul.mubr.f32.gmra.mxu0 %v3218
        %v3357 = vpop.f32.mrf.mxu0
        %v3358 = vadd.f32 %v3165, %v3357
        %v3359 = vpop.f32.mrf.mxu0
        %3360 = vmatprep.mubr.f32.mxu0 0.0
        %3361 = vmatmul.mubr.f32.gmra.mxu0 %v3221
        %v3362 = vpop.f32.mrf.mxu0
        %v3363 = vadd.f32 %v3170, %v3362
        %v3364 = vpop.f32.mrf.mxu0
        %3365 = vmatprep.mubr.f32.mxu0 0.0
        %3366 = vmatmul.mubr.f32.gmra.mxu0 %v3224
        %v3367 = vpop.f32.mrf.mxu0
        %v3368 = vadd.f32 %v3175, %v3367
        %v3369 = vpop.f32.mrf.mxu0
        %3370 = vdwg.mxu0
        %v3371 = vld [vmem:[#allocation2 + $0x8] sm:$0xff]
        %v3372 = vld [vmem:[#allocation2 + $0x10] sm:$0xff]
        %v3373 = vld [vmem:[#allocation2 + $0x20] sm:$0xff]
        %v3374 = vld [vmem:[#allocation2 + $0x28] sm:$0xff]
        %v3375 = vld [vmem:[#allocation2 + $0x38] sm:$0xff]
        %v3376 = vld [vmem:[#allocation2 + $0x40] sm:$0xff]
        %v3377 = vld [vmem:[#allocation2 + $0x50] sm:$0xff]
        %v3378 = vld [vmem:[#allocation2 + $0x58] sm:$0xff]
        %v3379 = vld [vmem:[#allocation2 + $0x68] sm:$0xff]
        %v3380 = vld [vmem:[#allocation2 + $0x70] sm:$0xff]
        %v3381 = vld [vmem:[#allocation2 + $0x80] sm:$0xff]
        %v3382 = vld [vmem:[#allocation2 + $0x88] sm:$0xff]
        %v3383 = vld [vmem:[#allocation2 + $0x98] sm:$0xff]
        %v3384 = vld [vmem:[#allocation2 + $0xa0] sm:$0xff]
        %v3385 = vld [vmem:[#allocation2 + $0xb0] sm:$0xff]
        %v3386 = vld [vmem:[#allocation2 + $0xb8] sm:$0xff]
        %s3387 = scalar_lea.vmem [#allocation7], 160
        %v3388 = vld [vmem:[%s3387] sm:$0xff]
        %v3389 = vld [vmem:[%s3387 + $0x8] sm:$0xff]
        %v3390 = vld [vmem:[%s3387 + $0x10] sm:$0xff]
        %v3391 = vld [vmem:[%s3387 + $0x18] sm:$0xff]
        %v3393 = vsel %vm576, %v3371, 0
        %v3396 = vsel %vm576, %v3372, 0
        %v3399 = vsel %vm576, %v3373, 0
        %v3402 = vsel %vm576, %v3374, 0
        %v3405 = vsel %vm576, %v3375, 0
        %v3408 = vsel %vm576, %v3376, 0
        %v3411 = vsel %vm576, %v3377, 0
        %v3414 = vsel %vm576, %v3378, 0
        %v3417 = vsel %vm576, %v3379, 0
        %v3420 = vsel %vm576, %v3380, 0
        %v3423 = vsel %vm576, %v3381, 0
        %v3426 = vsel %vm576, %v3382, 0
        %v3429 = vsel %vm576, %v3383, 0
        %v3432 = vsel %vm576, %v3384, 0
        %v3435 = vsel %vm576, %v3385, 0
        %v3438 = vsel %vm576, %v3386, 0
        %3440 = vmatprep.subr.mxu0 0.0
        %3441 = vmatpush1.msra.mxu0 0.0
        %3442 = vmatprep.subr.mxu0 0.0
        %3443 = vmatpush1.msra.mxu0 0.0
        %3444 = vmatprep.subr.mxu0 0.0
        %3445 = vmatpush1.msra.mxu0 0.0
        %3446 = vmatprep.subr.mxu0 0.0
        %3447 = vmatpush1.msra.mxu0 0.0
        %3448 = vmatprep.subr.mxu0 0.0
        %3449 = vmatpush1.msra.mxu0 0.0
        %3450 = vmatprep.subr.mxu0 0.0
        %3451 = vmatpush1.msra.mxu0 0.0
        %3452 = vmatprep.subr.mxu0 0.0
        %3453 = vmatpush1.msra.mxu0 0.0
        %3454 = vmatprep.subr.mxu0 0.0
        %3455 = vmatpush1.msra.mxu0 0.0
        %3456 = vmatprep.subr.mxu0 0.0
        %3457 = vmatpush1.msra.mxu0 0.0
        %3458 = vmatprep.subr.mxu0 0.0
        %3459 = vmatpush1.msra.mxu0 0.0
        %3460 = vmatprep.subr.mxu0 0.0
        %3461 = vmatpush1.msra.mxu0 0.0
        %3462 = vmatprep.subr.mxu0 0.0
        %3463 = vmatpush1.msra.mxu0 0.0
        %3464 = vmatprep.subr.mxu0 0.0
        %3465 = vmatpush1.msra.mxu0 %v3391
        %3466 = vmatprep.subr.mxu0 0.0
        %3467 = vmatpush1.msra.mxu0 %v3390
        %3468 = vmatprep.subr.mxu0 0.0
        %3469 = vmatpush1.msra.mxu0 %v3389
        %3470 = vmatprep.subr.mxu0 0.0
        %3471 = vmatpush1.msra.mxu0 %v3388
        %3472 = vmatprep.subr.mxu0 0.0
        %3473 = vmatpush2.msra.mxu0 0.0
        %3474 = vmatprep.subr.mxu0 0.0
        %3475 = vmatpush2.msra.mxu0 0.0
        %3476 = vmatprep.subr.mxu0 0.0
        %3477 = vmatpush2.msra.mxu0 0.0
        %3478 = vmatprep.subr.mxu0 0.0
        %3479 = vmatpush2.msra.mxu0 0.0
        %3480 = vmatprep.subr.mxu0 0.0
        %3481 = vmatpush2.msra.mxu0 0.0
        %3482 = vmatprep.subr.mxu0 0.0
        %3483 = vmatpush2.msra.mxu0 0.0
        %3484 = vmatprep.subr.mxu0 0.0
        %3485 = vmatpush2.msra.mxu0 0.0
        %3486 = vmatprep.subr.mxu0 0.0
        %3487 = vmatpush2.msra.mxu0 0.0
        %3488 = vmatprep.subr.mxu0 0.0
        %3489 = vmatpush2.msra.mxu0 0.0
        %3490 = vmatprep.subr.mxu0 0.0
        %3491 = vmatpush2.msra.mxu0 0.0
        %3492 = vmatprep.subr.mxu0 0.0
        %3493 = vmatpush2.msra.mxu0 0.0
        %3494 = vmatprep.subr.mxu0 0.0
        %3495 = vmatpush2.msra.mxu0 0.0
        %3496 = vmatprep.subr.mxu0 0.0
        %3497 = vmatpush2.msra.mxu0 0.0
        %3498 = vmatprep.subr.mxu0 0.0
        %3499 = vmatpush2.msra.mxu0 0.0
        %3500 = vmatprep.subr.mxu0 0.0
        %3501 = vmatpush2.msra.mxu0 0.0
        %3502 = vmatprep.subr.mxu0 0.0
        %3503 = vmatpush2.msra.mxu0 0.0
        %3504 = vmatprep.mubr.f32.mxu0 0.0
        %3505 = vmatmul.mubr.f32.gmra.mxu0 %v3393
        %v3506 = vpop.f32.mrf.mxu0
        %v3507 = vadd.f32 0.0, %v3506
        %v3508 = vpop.f32.mrf.mxu0
        %3509 = vmatprep.mubr.f32.mxu0 0.0
        %3510 = vmatmul.mubr.f32.gmra.mxu0 %v3396
        %v3511 = vpop.f32.mrf.mxu0
        %v3512 = vadd.f32 0.0, %v3511
        %v3513 = vpop.f32.mrf.mxu0
        %3514 = vmatprep.mubr.f32.mxu0 0.0
        %3515 = vmatmul.mubr.f32.gmra.mxu0 %v3399
        %v3516 = vpop.f32.mrf.mxu0
        %v3517 = vadd.f32 0.0, %v3516
        %v3518 = vpop.f32.mrf.mxu0
        %3519 = vmatprep.mubr.f32.mxu0 0.0
        %3520 = vmatmul.mubr.f32.gmra.mxu0 %v3402
        %v3521 = vpop.f32.mrf.mxu0
        %v3522 = vadd.f32 0.0, %v3521
        %v3523 = vpop.f32.mrf.mxu0
        %3524 = vmatprep.mubr.f32.mxu0 0.0
        %3525 = vmatmul.mubr.f32.gmra.mxu0 %v3405
        %v3526 = vpop.f32.mrf.mxu0
        %v3527 = vadd.f32 0.0, %v3526
        %v3528 = vpop.f32.mrf.mxu0
        %3529 = vmatprep.mubr.f32.mxu0 0.0
        %3530 = vmatmul.mubr.f32.gmra.mxu0 %v3408
        %v3531 = vpop.f32.mrf.mxu0
        %v3532 = vadd.f32 0.0, %v3531
        %v3533 = vpop.f32.mrf.mxu0
        %3534 = vmatprep.mubr.f32.mxu0 0.0
        %3535 = vmatmul.mubr.f32.gmra.mxu0 %v3411
        %v3536 = vpop.f32.mrf.mxu0
        %v3537 = vadd.f32 0.0, %v3536
        %v3538 = vpop.f32.mrf.mxu0
        %3539 = vmatprep.mubr.f32.mxu0 0.0
        %3540 = vmatmul.mubr.f32.gmra.mxu0 %v3414
        %v3541 = vpop.f32.mrf.mxu0
        %v3542 = vadd.f32 0.0, %v3541
        %v3543 = vpop.f32.mrf.mxu0
        %3544 = vmatprep.mubr.f32.mxu0 0.0
        %3545 = vmatmul.mubr.f32.gmra.mxu0 %v3417
        %v3546 = vpop.f32.mrf.mxu0
        %v3547 = vadd.f32 0.0, %v3546
        %v3548 = vpop.f32.mrf.mxu0
        %3549 = vmatprep.mubr.f32.mxu0 0.0
        %3550 = vmatmul.mubr.f32.gmra.mxu0 %v3420
        %v3551 = vpop.f32.mrf.mxu0
        %v3552 = vadd.f32 0.0, %v3551
        %v3553 = vpop.f32.mrf.mxu0
        %3554 = vmatprep.mubr.f32.mxu0 0.0
        %3555 = vmatmul.mubr.f32.gmra.mxu0 %v3423
        %v3556 = vpop.f32.mrf.mxu0
        %v3557 = vadd.f32 0.0, %v3556
        %v3558 = vpop.f32.mrf.mxu0
        %3559 = vmatprep.mubr.f32.mxu0 0.0
        %3560 = vmatmul.mubr.f32.gmra.mxu0 %v3426
        %v3561 = vpop.f32.mrf.mxu0
        %v3562 = vadd.f32 0.0, %v3561
        %v3563 = vpop.f32.mrf.mxu0
        %3564 = vmatprep.mubr.f32.mxu0 0.0
        %3565 = vmatmul.mubr.f32.gmra.mxu0 %v3429
        %v3566 = vpop.f32.mrf.mxu0
        %v3567 = vadd.f32 0.0, %v3566
        %v3568 = vpop.f32.mrf.mxu0
        %3569 = vmatprep.mubr.f32.mxu0 0.0
        %3570 = vmatmul.mubr.f32.gmra.mxu0 %v3432
        %v3571 = vpop.f32.mrf.mxu0
        %v3572 = vadd.f32 0.0, %v3571
        %v3573 = vpop.f32.mrf.mxu0
        %3574 = vmatprep.mubr.f32.mxu0 0.0
        %3575 = vmatmul.mubr.f32.gmra.mxu0 %v3435
        %v3576 = vpop.f32.mrf.mxu0
        %v3577 = vadd.f32 0.0, %v3576
        %v3578 = vpop.f32.mrf.mxu0
        %3579 = vmatprep.mubr.f32.mxu0 0.0
        %3580 = vmatmul.mubr.f32.gmra.mxu0 %v3438
        %v3581 = vpop.f32.mrf.mxu0
        %v3582 = vadd.f32 0.0, %v3581
        %v3583 = vpop.f32.mrf.mxu0
        %3584 = vdwg.mxu0
        %v3585 = vadd.f32 %v3293, %v3507
        %v3586 = vadd.f32 %v3298, %v3512
        %v3587 = vadd.f32 %v3303, %v3517
        %v3588 = vadd.f32 %v3308, %v3522
        %v3589 = vadd.f32 %v3313, %v3527
        %v3590 = vadd.f32 %v3318, %v3532
        %v3591 = vadd.f32 %v3323, %v3537
        %v3592 = vadd.f32 %v3328, %v3542
        %v3593 = vadd.f32 %v3333, %v3547
        %v3594 = vadd.f32 %v3338, %v3552
        %v3595 = vadd.f32 %v3343, %v3557
        %v3596 = vadd.f32 %v3348, %v3562
        %v3597 = vadd.f32 %v3353, %v3567
        %v3598 = vadd.f32 %v3358, %v3572
        %v3599 = vadd.f32 %v3363, %v3577
        %v3600 = vadd.f32 %v3368, %v3582
        %s3601 = scalar_lea.vmem %s5, 1
        %v3602 = vld [vmem:[%s3601] sm:$0x1]
        %v3604 = vlaneseq
        %v3605 = vshrl.u32 %v3604, 7
        %v3606 = vsub.s32 0, %v3605
        %v3607 = vrot.slane %v3602, %v3606
        %v3609 = vadd.f32 %v3585, %v3607
        %v3610 = vadd.f32 %v3586, %v3607
        %v3611 = vadd.f32 %v3587, %v3607
        %v3612 = vadd.f32 %v3588, %v3607
        %v3613 = vadd.f32 %v3589, %v3607
        %v3614 = vadd.f32 %v3590, %v3607
        %v3615 = vadd.f32 %v3591, %v3607
        %v3616 = vadd.f32 %v3592, %v3607
        %v3617 = vadd.f32 %v3593, %v3607
        %v3618 = vadd.f32 %v3594, %v3607
        %v3619 = vadd.f32 %v3595, %v3607
        %v3620 = vadd.f32 %v3596, %v3607
        %v3621 = vadd.f32 %v3597, %v3607
        %v3622 = vadd.f32 %v3598, %v3607
        %v3623 = vadd.f32 %v3599, %v3607
        %v3624 = vadd.f32 %v3600, %v3607
        %v3625 = vmax.f32 %v3609, 0.0
        %v3626 = vmax.f32 %v3610, 0.0
        %v3627 = vmax.f32 %v3611, 0.0
        %v3628 = vmax.f32 %v3612, 0.0
        %v3629 = vmax.f32 %v3613, 0.0
        %v3630 = vmax.f32 %v3614, 0.0
        %v3631 = vmax.f32 %v3615, 0.0
        %v3632 = vmax.f32 %v3616, 0.0
        %v3633 = vmax.f32 %v3617, 0.0
        %v3634 = vmax.f32 %v3618, 0.0
        %v3635 = vmax.f32 %v3619, 0.0
        %v3636 = vmax.f32 %v3620, 0.0
        %v3637 = vmax.f32 %v3621, 0.0
        %v3638 = vmax.f32 %v3622, 0.0
        %v3639 = vmax.f32 %v3623, 0.0
        %v3640 = vmax.f32 %v3624, 0.0
        %v3641 = vadd.f32 %v3625, %v2229
        %v3642 = vadd.f32 %v3626, %v2230
        %v3643 = vadd.f32 %v3627, %v2231
        %v3644 = vadd.f32 %v3628, %v2232
        %v3645 = vadd.f32 %v3629, %v2233
        %v3646 = vadd.f32 %v3630, %v2234
        %v3647 = vadd.f32 %v3631, %v2235
        %v3648 = vadd.f32 %v3632, %v2236
        %v3649 = vadd.f32 %v3633, %v2237
        %v3650 = vadd.f32 %v3634, %v2238
        %v3651 = vadd.f32 %v3635, %v2239
        %v3652 = vadd.f32 %v3636, %v2240
        %v3653 = vadd.f32 %v3637, %v2241
        %v3654 = vadd.f32 %v3638, %v2242
        %v3655 = vadd.f32 %v3639, %v2243
        %v3656 = vadd.f32 %v3640, %v2244
        %v3657 = vmax.f32 %v3641, 0.0
        %v3658 = vmax.f32 %v3642, 0.0
        %v3659 = vmax.f32 %v3643, 0.0
        %v3660 = vmax.f32 %v3644, 0.0
        %v3661 = vmax.f32 %v3645, 0.0
        %v3662 = vmax.f32 %v3646, 0.0
        %v3663 = vmax.f32 %v3647, 0.0
        %v3664 = vmax.f32 %v3648, 0.0
        %v3665 = vmax.f32 %v3649, 0.0
        %v3666 = vmax.f32 %v3650, 0.0
        %v3667 = vmax.f32 %v3651, 0.0
        %v3668 = vmax.f32 %v3652, 0.0
        %v3669 = vmax.f32 %v3653, 0.0
        %v3670 = vmax.f32 %v3654, 0.0
        %v3671 = vmax.f32 %v3655, 0.0
        %v3672 = vmax.f32 %v3656, 0.0
        %3673 = vst.msk [vmem:[#allocation2 + $0x8] sm:$0xff] %vm576, %v3657
        %3674 = vst.msk [vmem:[#allocation2 + $0x10] sm:$0xff] %vm576, %v3658
        %3675 = vst.msk [vmem:[#allocation2 + $0x20] sm:$0xff] %vm576, %v3659
        %3676 = vst.msk [vmem:[#allocation2 + $0x28] sm:$0xff] %vm576, %v3660
        %3677 = vst.msk [vmem:[#allocation2 + $0x38] sm:$0xff] %vm576, %v3661
        %3678 = vst.msk [vmem:[#allocation2 + $0x40] sm:$0xff] %vm576, %v3662
        %3679 = vst.msk [vmem:[#allocation2 + $0x50] sm:$0xff] %vm576, %v3663
        %3680 = vst.msk [vmem:[#allocation2 + $0x58] sm:$0xff] %vm576, %v3664
        %3681 = vst.msk [vmem:[#allocation2 + $0x68] sm:$0xff] %vm576, %v3665
        %3682 = vst.msk [vmem:[#allocation2 + $0x70] sm:$0xff] %vm576, %v3666
        %3683 = vst.msk [vmem:[#allocation2 + $0x80] sm:$0xff] %vm576, %v3667
        %3684 = vst.msk [vmem:[#allocation2 + $0x88] sm:$0xff] %vm576, %v3668
        %3685 = vst.msk [vmem:[#allocation2 + $0x98] sm:$0xff] %vm576, %v3669
        %3686 = vst.msk [vmem:[#allocation2 + $0xa0] sm:$0xff] %vm576, %v3670
        %3687 = vst.msk [vmem:[#allocation2 + $0xb0] sm:$0xff] %vm576, %v3671
        %3688 = vst.msk [vmem:[#allocation2 + $0xb8] sm:$0xff] %vm576, %v3672
        %v3689 = vld [vmem:[#allocation2 + $0x8] sm:$0xff]
        %v3690 = vld [vmem:[#allocation2 + $0x10] sm:$0xff]
        %v3691 = vld [vmem:[#allocation2 + $0x20] sm:$0xff]
        %v3692 = vld [vmem:[#allocation2 + $0x28] sm:$0xff]
        %v3693 = vld [vmem:[#allocation2 + $0x38] sm:$0xff]
        %v3694 = vld [vmem:[#allocation2 + $0x40] sm:$0xff]
        %v3695 = vld [vmem:[#allocation2 + $0x50] sm:$0xff]
        %v3696 = vld [vmem:[#allocation2 + $0x58] sm:$0xff]
        %v3697 = vld [vmem:[#allocation2 + $0x68] sm:$0xff]
        %v3698 = vld [vmem:[#allocation2 + $0x70] sm:$0xff]
        %v3699 = vld [vmem:[#allocation2 + $0x80] sm:$0xff]
        %v3700 = vld [vmem:[#allocation2 + $0x88] sm:$0xff]
        %v3701 = vld [vmem:[#allocation2 + $0x98] sm:$0xff]
        %v3702 = vld [vmem:[#allocation2 + $0xa0] sm:$0xff]
        %v3703 = vld [vmem:[#allocation2 + $0xb0] sm:$0xff]
        %v3704 = vld [vmem:[#allocation2 + $0xb8] sm:$0xff]
        %v3705 = vld [vmem:[#allocation2] sm:$0xff]
        %v3706 = vld [vmem:[#allocation2 + $0x18] sm:$0xff]
        %v3707 = vld [vmem:[#allocation2 + $0x30] sm:$0xff]
        %v3708 = vld [vmem:[#allocation2 + $0x48] sm:$0xff]
        %v3709 = vld [vmem:[#allocation2 + $0x60] sm:$0xff]
        %v3710 = vld [vmem:[#allocation2 + $0x78] sm:$0xff]
        %v3711 = vld [vmem:[#allocation2 + $0x90] sm:$0xff]
        %v3712 = vld [vmem:[#allocation2 + $0xa8] sm:$0xff]
        %s3713 = scalar_lea.vmem [#allocation5], 192
        %v3714 = vld [vmem:[%s3713] sm:$0xff]
        %v3715 = vld [vmem:[%s3713 + $0x8] sm:$0xff]
        %v3716 = vld [vmem:[%s3713 + $0x10] sm:$0xff]
        %v3717 = vld [vmem:[%s3713 + $0x18] sm:$0xff]
        %v3718 = vld [vmem:[#allocation2 + $0x4] sm:$0xff]
        %v3719 = vld [vmem:[#allocation2 + $0xc] sm:$0xff]
        %v3720 = vld [vmem:[#allocation2 + $0x1c] sm:$0xff]
        %v3721 = vld [vmem:[#allocation2 + $0x24] sm:$0xff]
        %v3722 = vld [vmem:[#allocation2 + $0x34] sm:$0xff]
        %v3723 = vld [vmem:[#allocation2 + $0x3c] sm:$0xff]
        %v3724 = vld [vmem:[#allocation2 + $0x4c] sm:$0xff]
        %v3725 = vld [vmem:[#allocation2 + $0x54] sm:$0xff]
        %v3726 = vld [vmem:[#allocation2 + $0x64] sm:$0xff]
        %v3727 = vld [vmem:[#allocation2 + $0x6c] sm:$0xff]
        %v3728 = vld [vmem:[#allocation2 + $0x7c] sm:$0xff]
        %v3729 = vld [vmem:[#allocation2 + $0x84] sm:$0xff]
        %v3730 = vld [vmem:[#allocation2 + $0x94] sm:$0xff]
        %v3731 = vld [vmem:[#allocation2 + $0x9c] sm:$0xff]
        %v3732 = vld [vmem:[#allocation2 + $0xac] sm:$0xff]
        %v3733 = vld [vmem:[#allocation2 + $0xb4] sm:$0xff]
        %s3734 = scalar_lea.vmem [#allocation5], 224
        %v3735 = vld [vmem:[%s3734] sm:$0xff]
        %v3736 = vld [vmem:[%s3734 + $0x8] sm:$0xff]
        %v3737 = vld [vmem:[%s3734 + $0x10] sm:$0xff]
        %v3738 = vld [vmem:[%s3734 + $0x18] sm:$0xff]
        %v3740 = vsel %vm576, %v3718, 0
        %v3743 = vsel %vm576, %v3719, 0
        %v3746 = vsel %vm576, %v3720, 0
        %v3749 = vsel %vm576, %v3721, 0
        %v3752 = vsel %vm576, %v3722, 0
        %v3755 = vsel %vm576, %v3723, 0
        %v3758 = vsel %vm576, %v3724, 0
        %v3761 = vsel %vm576, %v3725, 0
        %v3764 = vsel %vm576, %v3726, 0
        %v3767 = vsel %vm576, %v3727, 0
        %v3770 = vsel %vm576, %v3728, 0
        %v3773 = vsel %vm576, %v3729, 0
        %v3776 = vsel %vm576, %v3730, 0
        %v3779 = vsel %vm576, %v3731, 0
        %v3782 = vsel %vm576, %v3732, 0
        %v3785 = vsel %vm576, %v3733, 0
        %3787 = vmatprep.subr.mxu0 0.0
        %3788 = vmatpush1.msra.mxu0 0.0
        %3789 = vmatprep.subr.mxu0 0.0
        %3790 = vmatpush1.msra.mxu0 0.0
        %3791 = vmatprep.subr.mxu0 0.0
        %3792 = vmatpush1.msra.mxu0 0.0
        %3793 = vmatprep.subr.mxu0 0.0
        %3794 = vmatpush1.msra.mxu0 0.0
        %3795 = vmatprep.subr.mxu0 0.0
        %3796 = vmatpush1.msra.mxu0 0.0
        %3797 = vmatprep.subr.mxu0 0.0
        %3798 = vmatpush1.msra.mxu0 0.0
        %3799 = vmatprep.subr.mxu0 0.0
        %3800 = vmatpush1.msra.mxu0 0.0
        %3801 = vmatprep.subr.mxu0 0.0
        %3802 = vmatpush1.msra.mxu0 0.0
        %3803 = vmatprep.subr.mxu0 0.0
        %3804 = vmatpush1.msra.mxu0 0.0
        %3805 = vmatprep.subr.mxu0 0.0
        %3806 = vmatpush1.msra.mxu0 0.0
        %3807 = vmatprep.subr.mxu0 0.0
        %3808 = vmatpush1.msra.mxu0 0.0
        %3809 = vmatprep.subr.mxu0 0.0
        %3810 = vmatpush1.msra.mxu0 0.0
        %3811 = vmatprep.subr.mxu0 0.0
        %3812 = vmatpush1.msra.mxu0 %v3738
        %3813 = vmatprep.subr.mxu0 0.0
        %3814 = vmatpush1.msra.mxu0 %v3737
        %3815 = vmatprep.subr.mxu0 0.0
        %3816 = vmatpush1.msra.mxu0 %v3736
        %3817 = vmatprep.subr.mxu0 0.0
        %3818 = vmatpush1.msra.mxu0 %v3735
        %3819 = vmatprep.subr.mxu0 0.0
        %3820 = vmatpush2.msra.mxu0 0.0
        %3821 = vmatprep.subr.mxu0 0.0
        %3822 = vmatpush2.msra.mxu0 0.0
        %3823 = vmatprep.subr.mxu0 0.0
        %3824 = vmatpush2.msra.mxu0 0.0
        %3825 = vmatprep.subr.mxu0 0.0
        %3826 = vmatpush2.msra.mxu0 0.0
        %3827 = vmatprep.subr.mxu0 0.0
        %3828 = vmatpush2.msra.mxu0 0.0
        %3829 = vmatprep.subr.mxu0 0.0
        %3830 = vmatpush2.msra.mxu0 0.0
        %3831 = vmatprep.subr.mxu0 0.0
        %3832 = vmatpush2.msra.mxu0 0.0
        %3833 = vmatprep.subr.mxu0 0.0
        %3834 = vmatpush2.msra.mxu0 0.0
        %3835 = vmatprep.subr.mxu0 0.0
        %3836 = vmatpush2.msra.mxu0 0.0
        %3837 = vmatprep.subr.mxu0 0.0
        %3838 = vmatpush2.msra.mxu0 0.0
        %3839 = vmatprep.subr.mxu0 0.0
        %3840 = vmatpush2.msra.mxu0 0.0
        %3841 = vmatprep.subr.mxu0 0.0
        %3842 = vmatpush2.msra.mxu0 0.0
        %3843 = vmatprep.subr.mxu0 0.0
        %3844 = vmatpush2.msra.mxu0 0.0
        %3845 = vmatprep.subr.mxu0 0.0
        %3846 = vmatpush2.msra.mxu0 0.0
        %3847 = vmatprep.subr.mxu0 0.0
        %3848 = vmatpush2.msra.mxu0 0.0
        %3849 = vmatprep.subr.mxu0 0.0
        %3850 = vmatpush2.msra.mxu0 0.0
        %3851 = vmatprep.mubr.f32.mxu0 0.0
        %3852 = vmatmul.mubr.f32.gmra.mxu0 %v3740
        %v3853 = vpop.f32.mrf.mxu0
        %v3854 = vadd.f32 0.0, %v3853
        %v3855 = vpop.f32.mrf.mxu0
        %3856 = vmatprep.mubr.f32.mxu0 0.0
        %3857 = vmatmul.mubr.f32.gmra.mxu0 %v3743
        %v3858 = vpop.f32.mrf.mxu0
        %v3859 = vadd.f32 0.0, %v3858
        %v3860 = vpop.f32.mrf.mxu0
        %3861 = vmatprep.mubr.f32.mxu0 0.0
        %3862 = vmatmul.mubr.f32.gmra.mxu0 %v3746
        %v3863 = vpop.f32.mrf.mxu0
        %v3864 = vadd.f32 0.0, %v3863
        %v3865 = vpop.f32.mrf.mxu0
        %3866 = vmatprep.mubr.f32.mxu0 0.0
        %3867 = vmatmul.mubr.f32.gmra.mxu0 %v3749
        %v3868 = vpop.f32.mrf.mxu0
        %v3869 = vadd.f32 0.0, %v3868
        %v3870 = vpop.f32.mrf.mxu0
        %3871 = vmatprep.mubr.f32.mxu0 0.0
        %3872 = vmatmul.mubr.f32.gmra.mxu0 %v3752
        %v3873 = vpop.f32.mrf.mxu0
        %v3874 = vadd.f32 0.0, %v3873
        %v3875 = vpop.f32.mrf.mxu0
        %3876 = vmatprep.mubr.f32.mxu0 0.0
        %3877 = vmatmul.mubr.f32.gmra.mxu0 %v3755
        %v3878 = vpop.f32.mrf.mxu0
        %v3879 = vadd.f32 0.0, %v3878
        %v3880 = vpop.f32.mrf.mxu0
        %3881 = vmatprep.mubr.f32.mxu0 0.0
        %3882 = vmatmul.mubr.f32.gmra.mxu0 %v3758
        %v3883 = vpop.f32.mrf.mxu0
        %v3884 = vadd.f32 0.0, %v3883
        %v3885 = vpop.f32.mrf.mxu0
        %3886 = vmatprep.mubr.f32.mxu0 0.0
        %3887 = vmatmul.mubr.f32.gmra.mxu0 %v3761
        %v3888 = vpop.f32.mrf.mxu0
        %v3889 = vadd.f32 0.0, %v3888
        %v3890 = vpop.f32.mrf.mxu0
        %3891 = vmatprep.mubr.f32.mxu0 0.0
        %3892 = vmatmul.mubr.f32.gmra.mxu0 %v3764
        %v3893 = vpop.f32.mrf.mxu0
        %v3894 = vadd.f32 0.0, %v3893
        %v3895 = vpop.f32.mrf.mxu0
        %3896 = vmatprep.mubr.f32.mxu0 0.0
        %3897 = vmatmul.mubr.f32.gmra.mxu0 %v3767
        %v3898 = vpop.f32.mrf.mxu0
        %v3899 = vadd.f32 0.0, %v3898
        %v3900 = vpop.f32.mrf.mxu0
        %3901 = vmatprep.mubr.f32.mxu0 0.0
        %3902 = vmatmul.mubr.f32.gmra.mxu0 %v3770
        %v3903 = vpop.f32.mrf.mxu0
        %v3904 = vadd.f32 0.0, %v3903
        %v3905 = vpop.f32.mrf.mxu0
        %3906 = vmatprep.mubr.f32.mxu0 0.0
        %3907 = vmatmul.mubr.f32.gmra.mxu0 %v3773
        %v3908 = vpop.f32.mrf.mxu0
        %v3909 = vadd.f32 0.0, %v3908
        %v3910 = vpop.f32.mrf.mxu0
        %3911 = vmatprep.mubr.f32.mxu0 0.0
        %3912 = vmatmul.mubr.f32.gmra.mxu0 %v3776
        %v3913 = vpop.f32.mrf.mxu0
        %v3914 = vadd.f32 0.0, %v3913
        %v3915 = vpop.f32.mrf.mxu0
        %3916 = vmatprep.mubr.f32.mxu0 0.0
        %3917 = vmatmul.mubr.f32.gmra.mxu0 %v3779
        %v3918 = vpop.f32.mrf.mxu0
        %v3919 = vadd.f32 0.0, %v3918
        %v3920 = vpop.f32.mrf.mxu0
        %3921 = vmatprep.mubr.f32.mxu0 0.0
        %3922 = vmatmul.mubr.f32.gmra.mxu0 %v3782
        %v3923 = vpop.f32.mrf.mxu0
        %v3924 = vadd.f32 0.0, %v3923
        %v3925 = vpop.f32.mrf.mxu0
        %3926 = vmatprep.mubr.f32.mxu0 0.0
        %3927 = vmatmul.mubr.f32.gmra.mxu0 %v3785
        %v3928 = vpop.f32.mrf.mxu0
        %v3929 = vadd.f32 0.0, %v3928
        %v3930 = vpop.f32.mrf.mxu0
        %3931 = vdwg.mxu0
        %v3933 = vsel %vm576, %v3705, 0
        %v3936 = vsel %vm576, %v3689, 0
        %v3939 = vsel %vm576, %v3706, 0
        %v3942 = vsel %vm576, %v3691, 0
        %v3945 = vsel %vm576, %v3707, 0
        %v3948 = vsel %vm576, %v3693, 0
        %v3951 = vsel %vm576, %v3708, 0
        %v3954 = vsel %vm576, %v3695, 0
        %v3957 = vsel %vm576, %v3709, 0
        %v3960 = vsel %vm576, %v3697, 0
        %v3963 = vsel %vm576, %v3710, 0
        %v3966 = vsel %vm576, %v3699, 0
        %v3969 = vsel %vm576, %v3711, 0
        %v3972 = vsel %vm576, %v3701, 0
        %v3975 = vsel %vm576, %v3712, 0
        %v3978 = vsel %vm576, %v3703, 0
        %3980 = vmatprep.subr.mxu0 0.0
        %3981 = vmatpush1.msra.mxu0 0.0
        %3982 = vmatprep.subr.mxu0 0.0
        %3983 = vmatpush1.msra.mxu0 0.0
        %3984 = vmatprep.subr.mxu0 0.0
        %3985 = vmatpush1.msra.mxu0 0.0
        %3986 = vmatprep.subr.mxu0 0.0
        %3987 = vmatpush1.msra.mxu0 0.0
        %3988 = vmatprep.subr.mxu0 0.0
        %3989 = vmatpush1.msra.mxu0 0.0
        %3990 = vmatprep.subr.mxu0 0.0
        %3991 = vmatpush1.msra.mxu0 0.0
        %3992 = vmatprep.subr.mxu0 0.0
        %3993 = vmatpush1.msra.mxu0 0.0
        %3994 = vmatprep.subr.mxu0 0.0
        %3995 = vmatpush1.msra.mxu0 0.0
        %3996 = vmatprep.subr.mxu0 0.0
        %3997 = vmatpush1.msra.mxu0 0.0
        %3998 = vmatprep.subr.mxu0 0.0
        %3999 = vmatpush1.msra.mxu0 0.0
        %4000 = vmatprep.subr.mxu0 0.0
        %4001 = vmatpush1.msra.mxu0 0.0
        %4002 = vmatprep.subr.mxu0 0.0
        %4003 = vmatpush1.msra.mxu0 0.0
        %4004 = vmatprep.subr.mxu0 0.0
        %4005 = vmatpush1.msra.mxu0 %v3717
        %4006 = vmatprep.subr.mxu0 0.0
        %4007 = vmatpush1.msra.mxu0 %v3716
        %4008 = vmatprep.subr.mxu0 0.0
        %4009 = vmatpush1.msra.mxu0 %v3715
        %4010 = vmatprep.subr.mxu0 0.0
        %4011 = vmatpush1.msra.mxu0 %v3714
        %4012 = vmatprep.subr.mxu0 0.0
        %4013 = vmatpush2.msra.mxu0 0.0
        %4014 = vmatprep.subr.mxu0 0.0
        %4015 = vmatpush2.msra.mxu0 0.0
        %4016 = vmatprep.subr.mxu0 0.0
        %4017 = vmatpush2.msra.mxu0 0.0
        %4018 = vmatprep.subr.mxu0 0.0
        %4019 = vmatpush2.msra.mxu0 0.0
        %4020 = vmatprep.subr.mxu0 0.0
        %4021 = vmatpush2.msra.mxu0 0.0
        %4022 = vmatprep.subr.mxu0 0.0
        %4023 = vmatpush2.msra.mxu0 0.0
        %4024 = vmatprep.subr.mxu0 0.0
        %4025 = vmatpush2.msra.mxu0 0.0
        %4026 = vmatprep.subr.mxu0 0.0
        %4027 = vmatpush2.msra.mxu0 0.0
        %4028 = vmatprep.subr.mxu0 0.0
        %4029 = vmatpush2.msra.mxu0 0.0
        %4030 = vmatprep.subr.mxu0 0.0
        %4031 = vmatpush2.msra.mxu0 0.0
        %4032 = vmatprep.subr.mxu0 0.0
        %4033 = vmatpush2.msra.mxu0 0.0
        %4034 = vmatprep.subr.mxu0 0.0
        %4035 = vmatpush2.msra.mxu0 0.0
        %4036 = vmatprep.subr.mxu0 0.0
        %4037 = vmatpush2.msra.mxu0 0.0
        %4038 = vmatprep.subr.mxu0 0.0
        %4039 = vmatpush2.msra.mxu0 0.0
        %4040 = vmatprep.subr.mxu0 0.0
        %4041 = vmatpush2.msra.mxu0 0.0
        %4042 = vmatprep.subr.mxu0 0.0
        %4043 = vmatpush2.msra.mxu0 0.0
        %4044 = vmatprep.mubr.f32.mxu0 0.0
        %4045 = vmatmul.mubr.f32.gmra.mxu0 %v3933
        %v4046 = vpop.f32.mrf.mxu0
        %v4047 = vadd.f32 %v3854, %v4046
        %v4048 = vpop.f32.mrf.mxu0
        %4049 = vmatprep.mubr.f32.mxu0 0.0
        %4050 = vmatmul.mubr.f32.gmra.mxu0 %v3936
        %v4051 = vpop.f32.mrf.mxu0
        %v4052 = vadd.f32 %v3859, %v4051
        %v4053 = vpop.f32.mrf.mxu0
        %4054 = vmatprep.mubr.f32.mxu0 0.0
        %4055 = vmatmul.mubr.f32.gmra.mxu0 %v3939
        %v4056 = vpop.f32.mrf.mxu0
        %v4057 = vadd.f32 %v3864, %v4056
        %v4058 = vpop.f32.mrf.mxu0
        %4059 = vmatprep.mubr.f32.mxu0 0.0
        %4060 = vmatmul.mubr.f32.gmra.mxu0 %v3942
        %v4061 = vpop.f32.mrf.mxu0
        %v4062 = vadd.f32 %v3869, %v4061
        %v4063 = vpop.f32.mrf.mxu0
        %4064 = vmatprep.mubr.f32.mxu0 0.0
        %4065 = vmatmul.mubr.f32.gmra.mxu0 %v3945
        %v4066 = vpop.f32.mrf.mxu0
        %v4067 = vadd.f32 %v3874, %v4066
        %v4068 = vpop.f32.mrf.mxu0
        %4069 = vmatprep.mubr.f32.mxu0 0.0
        %4070 = vmatmul.mubr.f32.gmra.mxu0 %v3948
        %v4071 = vpop.f32.mrf.mxu0
        %v4072 = vadd.f32 %v3879, %v4071
        %v4073 = vpop.f32.mrf.mxu0
        %4074 = vmatprep.mubr.f32.mxu0 0.0
        %4075 = vmatmul.mubr.f32.gmra.mxu0 %v3951
        %v4076 = vpop.f32.mrf.mxu0
        %v4077 = vadd.f32 %v3884, %v4076
        %v4078 = vpop.f32.mrf.mxu0
        %4079 = vmatprep.mubr.f32.mxu0 0.0
        %4080 = vmatmul.mubr.f32.gmra.mxu0 %v3954
        %v4081 = vpop.f32.mrf.mxu0
        %v4082 = vadd.f32 %v3889, %v4081
        %v4083 = vpop.f32.mrf.mxu0
        %4084 = vmatprep.mubr.f32.mxu0 0.0
        %4085 = vmatmul.mubr.f32.gmra.mxu0 %v3957
        %v4086 = vpop.f32.mrf.mxu0
        %v4087 = vadd.f32 %v3894, %v4086
        %v4088 = vpop.f32.mrf.mxu0
        %4089 = vmatprep.mubr.f32.mxu0 0.0
        %4090 = vmatmul.mubr.f32.gmra.mxu0 %v3960
        %v4091 = vpop.f32.mrf.mxu0
        %v4092 = vadd.f32 %v3899, %v4091
        %v4093 = vpop.f32.mrf.mxu0
        %4094 = vmatprep.mubr.f32.mxu0 0.0
        %4095 = vmatmul.mubr.f32.gmra.mxu0 %v3963
        %v4096 = vpop.f32.mrf.mxu0
        %v4097 = vadd.f32 %v3904, %v4096
        %v4098 = vpop.f32.mrf.mxu0
        %4099 = vmatprep.mubr.f32.mxu0 0.0
        %4100 = vmatmul.mubr.f32.gmra.mxu0 %v3966
        %v4101 = vpop.f32.mrf.mxu0
        %v4102 = vadd.f32 %v3909, %v4101
        %v4103 = vpop.f32.mrf.mxu0
        %4104 = vmatprep.mubr.f32.mxu0 0.0
        %4105 = vmatmul.mubr.f32.gmra.mxu0 %v3969
        %v4106 = vpop.f32.mrf.mxu0
        %v4107 = vadd.f32 %v3914, %v4106
        %v4108 = vpop.f32.mrf.mxu0
        %4109 = vmatprep.mubr.f32.mxu0 0.0
        %4110 = vmatmul.mubr.f32.gmra.mxu0 %v3972
        %v4111 = vpop.f32.mrf.mxu0
        %v4112 = vadd.f32 %v3919, %v4111
        %v4113 = vpop.f32.mrf.mxu0
        %4114 = vmatprep.mubr.f32.mxu0 0.0
        %4115 = vmatmul.mubr.f32.gmra.mxu0 %v3975
        %v4116 = vpop.f32.mrf.mxu0
        %v4117 = vadd.f32 %v3924, %v4116
        %v4118 = vpop.f32.mrf.mxu0
        %4119 = vmatprep.mubr.f32.mxu0 0.0
        %4120 = vmatmul.mubr.f32.gmra.mxu0 %v3978
        %v4121 = vpop.f32.mrf.mxu0
        %v4122 = vadd.f32 %v3929, %v4121
        %v4123 = vpop.f32.mrf.mxu0
        %4124 = vdwg.mxu0
        %s4125 = scalar_lea.vmem [#allocation5], 256
        %v4126 = vld [vmem:[%s4125] sm:$0xff]
        %v4127 = vld [vmem:[%s4125 + $0x8] sm:$0xff]
        %v4128 = vld [vmem:[%s4125 + $0x10] sm:$0xff]
        %v4129 = vld [vmem:[%s4125 + $0x18] sm:$0xff]
        %v4131 = vsel %vm576, %v3690, 0
        %v4134 = vsel %vm576, %v3692, 0
        %v4137 = vsel %vm576, %v3694, 0
        %v4140 = vsel %vm576, %v3696, 0
        %v4143 = vsel %vm576, %v3698, 0
        %v4146 = vsel %vm576, %v3700, 0
        %v4149 = vsel %vm576, %v3702, 0
        %v4152 = vsel %vm576, %v3704, 0
        %4154 = vmatprep.subr.mxu0 0.0
        %4155 = vmatpush1.msra.mxu0 0.0
        %4156 = vmatprep.subr.mxu0 0.0
        %4157 = vmatpush1.msra.mxu0 0.0
        %4158 = vmatprep.subr.mxu0 0.0
        %4159 = vmatpush1.msra.mxu0 0.0
        %4160 = vmatprep.subr.mxu0 0.0
        %4161 = vmatpush1.msra.mxu0 0.0
        %4162 = vmatprep.subr.mxu0 0.0
        %4163 = vmatpush1.msra.mxu0 0.0
        %4164 = vmatprep.subr.mxu0 0.0
        %4165 = vmatpush1.msra.mxu0 0.0
        %4166 = vmatprep.subr.mxu0 0.0
        %4167 = vmatpush1.msra.mxu0 0.0
        %4168 = vmatprep.subr.mxu0 0.0
        %4169 = vmatpush1.msra.mxu0 0.0
        %4170 = vmatprep.subr.mxu0 0.0
        %4171 = vmatpush1.msra.mxu0 0.0
        %4172 = vmatprep.subr.mxu0 0.0
        %4173 = vmatpush1.msra.mxu0 0.0
        %4174 = vmatprep.subr.mxu0 0.0
        %4175 = vmatpush1.msra.mxu0 0.0
        %4176 = vmatprep.subr.mxu0 0.0
        %4177 = vmatpush1.msra.mxu0 0.0
        %4178 = vmatprep.subr.mxu0 0.0
        %4179 = vmatpush1.msra.mxu0 %v4129
        %4180 = vmatprep.subr.mxu0 0.0
        %4181 = vmatpush1.msra.mxu0 %v4128
        %4182 = vmatprep.subr.mxu0 0.0
        %4183 = vmatpush1.msra.mxu0 %v4127
        %4184 = vmatprep.subr.mxu0 0.0
        %4185 = vmatpush1.msra.mxu0 %v4126
        %4186 = vmatprep.subr.mxu0 0.0
        %4187 = vmatpush2.msra.mxu0 0.0
        %4188 = vmatprep.subr.mxu0 0.0
        %4189 = vmatpush2.msra.mxu0 0.0
        %4190 = vmatprep.subr.mxu0 0.0
        %4191 = vmatpush2.msra.mxu0 0.0
        %4192 = vmatprep.subr.mxu0 0.0
        %4193 = vmatpush2.msra.mxu0 0.0
        %4194 = vmatprep.subr.mxu0 0.0
        %4195 = vmatpush2.msra.mxu0 0.0
        %4196 = vmatprep.subr.mxu0 0.0
        %4197 = vmatpush2.msra.mxu0 0.0
        %4198 = vmatprep.subr.mxu0 0.0
        %4199 = vmatpush2.msra.mxu0 0.0
        %4200 = vmatprep.subr.mxu0 0.0
        %4201 = vmatpush2.msra.mxu0 0.0
        %4202 = vmatprep.subr.mxu0 0.0
        %4203 = vmatpush2.msra.mxu0 0.0
        %4204 = vmatprep.subr.mxu0 0.0
        %4205 = vmatpush2.msra.mxu0 0.0
        %4206 = vmatprep.subr.mxu0 0.0
        %4207 = vmatpush2.msra.mxu0 0.0
        %4208 = vmatprep.subr.mxu0 0.0
        %4209 = vmatpush2.msra.mxu0 0.0
        %4210 = vmatprep.subr.mxu0 0.0
        %4211 = vmatpush2.msra.mxu0 0.0
        %4212 = vmatprep.subr.mxu0 0.0
        %4213 = vmatpush2.msra.mxu0 0.0
        %4214 = vmatprep.subr.mxu0 0.0
        %4215 = vmatpush2.msra.mxu0 0.0
        %4216 = vmatprep.subr.mxu0 0.0
        %4217 = vmatpush2.msra.mxu0 0.0
        %4218 = vmatprep.mubr.f32.mxu0 0.0
        %4219 = vmatmul.mubr.f32.gmra.mxu0 %v3936
        %v4220 = vpop.f32.mrf.mxu0
        %v4221 = vadd.f32 0.0, %v4220
        %v4222 = vpop.f32.mrf.mxu0
        %4223 = vmatprep.mubr.f32.mxu0 0.0
        %4224 = vmatmul.mubr.f32.gmra.mxu0 %v4131
        %v4225 = vpop.f32.mrf.mxu0
        %v4226 = vadd.f32 0.0, %v4225
        %v4227 = vpop.f32.mrf.mxu0
        %4228 = vmatprep.mubr.f32.mxu0 0.0
        %4229 = vmatmul.mubr.f32.gmra.mxu0 %v3942
        %v4230 = vpop.f32.mrf.mxu0
        %v4231 = vadd.f32 0.0, %v4230
        %v4232 = vpop.f32.mrf.mxu0
        %4233 = vmatprep.mubr.f32.mxu0 0.0
        %4234 = vmatmul.mubr.f32.gmra.mxu0 %v4134
        %v4235 = vpop.f32.mrf.mxu0
        %v4236 = vadd.f32 0.0, %v4235
        %v4237 = vpop.f32.mrf.mxu0
        %4238 = vmatprep.mubr.f32.mxu0 0.0
        %4239 = vmatmul.mubr.f32.gmra.mxu0 %v3948
        %v4240 = vpop.f32.mrf.mxu0
        %v4241 = vadd.f32 0.0, %v4240
        %v4242 = vpop.f32.mrf.mxu0
        %4243 = vmatprep.mubr.f32.mxu0 0.0
        %4244 = vmatmul.mubr.f32.gmra.mxu0 %v4137
        %v4245 = vpop.f32.mrf.mxu0
        %v4246 = vadd.f32 0.0, %v4245
        %v4247 = vpop.f32.mrf.mxu0
        %4248 = vmatprep.mubr.f32.mxu0 0.0
        %4249 = vmatmul.mubr.f32.gmra.mxu0 %v3954
        %v4250 = vpop.f32.mrf.mxu0
        %v4251 = vadd.f32 0.0, %v4250
        %v4252 = vpop.f32.mrf.mxu0
        %4253 = vmatprep.mubr.f32.mxu0 0.0
        %4254 = vmatmul.mubr.f32.gmra.mxu0 %v4140
        %v4255 = vpop.f32.mrf.mxu0
        %v4256 = vadd.f32 0.0, %v4255
        %v4257 = vpop.f32.mrf.mxu0
        %4258 = vmatprep.mubr.f32.mxu0 0.0
        %4259 = vmatmul.mubr.f32.gmra.mxu0 %v3960
        %v4260 = vpop.f32.mrf.mxu0
        %v4261 = vadd.f32 0.0, %v4260
        %v4262 = vpop.f32.mrf.mxu0
        %4263 = vmatprep.mubr.f32.mxu0 0.0
        %4264 = vmatmul.mubr.f32.gmra.mxu0 %v4143
        %v4265 = vpop.f32.mrf.mxu0
        %v4266 = vadd.f32 0.0, %v4265
        %v4267 = vpop.f32.mrf.mxu0
        %4268 = vmatprep.mubr.f32.mxu0 0.0
        %4269 = vmatmul.mubr.f32.gmra.mxu0 %v3966
        %v4270 = vpop.f32.mrf.mxu0
        %v4271 = vadd.f32 0.0, %v4270
        %v4272 = vpop.f32.mrf.mxu0
        %4273 = vmatprep.mubr.f32.mxu0 0.0
        %4274 = vmatmul.mubr.f32.gmra.mxu0 %v4146
        %v4275 = vpop.f32.mrf.mxu0
        %v4276 = vadd.f32 0.0, %v4275
        %v4277 = vpop.f32.mrf.mxu0
        %4278 = vmatprep.mubr.f32.mxu0 0.0
        %4279 = vmatmul.mubr.f32.gmra.mxu0 %v3972
        %v4280 = vpop.f32.mrf.mxu0
        %v4281 = vadd.f32 0.0, %v4280
        %v4282 = vpop.f32.mrf.mxu0
        %4283 = vmatprep.mubr.f32.mxu0 0.0
        %4284 = vmatmul.mubr.f32.gmra.mxu0 %v4149
        %v4285 = vpop.f32.mrf.mxu0
        %v4286 = vadd.f32 0.0, %v4285
        %v4287 = vpop.f32.mrf.mxu0
        %4288 = vmatprep.mubr.f32.mxu0 0.0
        %4289 = vmatmul.mubr.f32.gmra.mxu0 %v3978
        %v4290 = vpop.f32.mrf.mxu0
        %v4291 = vadd.f32 0.0, %v4290
        %v4292 = vpop.f32.mrf.mxu0
        %4293 = vmatprep.mubr.f32.mxu0 0.0
        %4294 = vmatmul.mubr.f32.gmra.mxu0 %v4152
        %v4295 = vpop.f32.mrf.mxu0
        %v4296 = vadd.f32 0.0, %v4295
        %v4297 = vpop.f32.mrf.mxu0
        %4298 = vdwg.mxu0
        %v4299 = vadd.f32 %v4047, %v4221
        %v4300 = vadd.f32 %v4052, %v4226
        %v4301 = vadd.f32 %v4057, %v4231
        %v4302 = vadd.f32 %v4062, %v4236
        %v4303 = vadd.f32 %v4067, %v4241
        %v4304 = vadd.f32 %v4072, %v4246
        %v4305 = vadd.f32 %v4077, %v4251
        %v4306 = vadd.f32 %v4082, %v4256
        %v4307 = vadd.f32 %v4087, %v4261
        %v4308 = vadd.f32 %v4092, %v4266
        %v4309 = vadd.f32 %v4097, %v4271
        %v4310 = vadd.f32 %v4102, %v4276
        %v4311 = vadd.f32 %v4107, %v4281
        %v4312 = vadd.f32 %v4112, %v4286
        %v4313 = vadd.f32 %v4117, %v4291
        %v4314 = vadd.f32 %v4122, %v4296
        %s4315 = scalar_lea.vmem %s3, 2
        %v4316 = vld [vmem:[%s4315] sm:$0x1]
        %v4318 = vlaneseq
        %v4319 = vshrl.u32 %v4318, 7
        %v4320 = vsub.s32 0, %v4319
        %v4321 = vrot.slane %v4316, %v4320
        %v4323 = vadd.f32 %v4299, %v4321
        %v4324 = vadd.f32 %v4300, %v4321
        %v4325 = vadd.f32 %v4301, %v4321
        %v4326 = vadd.f32 %v4302, %v4321
        %v4327 = vadd.f32 %v4303, %v4321
        %v4328 = vadd.f32 %v4304, %v4321
        %v4329 = vadd.f32 %v4305, %v4321
        %v4330 = vadd.f32 %v4306, %v4321
        %v4331 = vadd.f32 %v4307, %v4321
        %v4332 = vadd.f32 %v4308, %v4321
        %v4333 = vadd.f32 %v4309, %v4321
        %v4334 = vadd.f32 %v4310, %v4321
        %v4335 = vadd.f32 %v4311, %v4321
        %v4336 = vadd.f32 %v4312, %v4321
        %v4337 = vadd.f32 %v4313, %v4321
        %v4338 = vadd.f32 %v4314, %v4321
        %v4339 = vmax.f32 %v4323, 0.0
        %v4340 = vmax.f32 %v4324, 0.0
        %v4341 = vmax.f32 %v4325, 0.0
        %v4342 = vmax.f32 %v4326, 0.0
        %v4343 = vmax.f32 %v4327, 0.0
        %v4344 = vmax.f32 %v4328, 0.0
        %v4345 = vmax.f32 %v4329, 0.0
        %v4346 = vmax.f32 %v4330, 0.0
        %v4347 = vmax.f32 %v4331, 0.0
        %v4348 = vmax.f32 %v4332, 0.0
        %v4349 = vmax.f32 %v4333, 0.0
        %v4350 = vmax.f32 %v4334, 0.0
        %v4351 = vmax.f32 %v4335, 0.0
        %v4352 = vmax.f32 %v4336, 0.0
        %v4353 = vmax.f32 %v4337, 0.0
        %v4354 = vmax.f32 %v4338, 0.0
        %4355 = vst.msk [vmem:[#allocation2 + $0x8] sm:$0xff] %vm576, %v4339
        %4356 = vst.msk [vmem:[#allocation2 + $0x10] sm:$0xff] %vm576, %v4340
        %4357 = vst.msk [vmem:[#allocation2 + $0x20] sm:$0xff] %vm576, %v4341
        %4358 = vst.msk [vmem:[#allocation2 + $0x28] sm:$0xff] %vm576, %v4342
        %4359 = vst.msk [vmem:[#allocation2 + $0x38] sm:$0xff] %vm576, %v4343
        %4360 = vst.msk [vmem:[#allocation2 + $0x40] sm:$0xff] %vm576, %v4344
        %4361 = vst.msk [vmem:[#allocation2 + $0x50] sm:$0xff] %vm576, %v4345
        %4362 = vst.msk [vmem:[#allocation2 + $0x58] sm:$0xff] %vm576, %v4346
        %4363 = vst.msk [vmem:[#allocation2 + $0x68] sm:$0xff] %vm576, %v4347
        %4364 = vst.msk [vmem:[#allocation2 + $0x70] sm:$0xff] %vm576, %v4348
        %4365 = vst.msk [vmem:[#allocation2 + $0x80] sm:$0xff] %vm576, %v4349
        %4366 = vst.msk [vmem:[#allocation2 + $0x88] sm:$0xff] %vm576, %v4350
        %4367 = vst.msk [vmem:[#allocation2 + $0x98] sm:$0xff] %vm576, %v4351
        %4368 = vst.msk [vmem:[#allocation2 + $0xa0] sm:$0xff] %vm576, %v4352
        %4369 = vst.msk [vmem:[#allocation2 + $0xb0] sm:$0xff] %vm576, %v4353
        %4370 = vst.msk [vmem:[#allocation2 + $0xb8] sm:$0xff] %vm576, %v4354
        %v4371 = vld [vmem:[#allocation2] sm:$0xff]
        %v4372 = vld [vmem:[#allocation2 + $0x8] sm:$0xff]
        %v4373 = vld [vmem:[#allocation2 + $0x18] sm:$0xff]
        %v4374 = vld [vmem:[#allocation2 + $0x20] sm:$0xff]
        %v4375 = vld [vmem:[#allocation2 + $0x30] sm:$0xff]
        %v4376 = vld [vmem:[#allocation2 + $0x38] sm:$0xff]
        %v4377 = vld [vmem:[#allocation2 + $0x48] sm:$0xff]
        %v4378 = vld [vmem:[#allocation2 + $0x50] sm:$0xff]
        %v4379 = vld [vmem:[#allocation2 + $0x60] sm:$0xff]
        %v4380 = vld [vmem:[#allocation2 + $0x68] sm:$0xff]
        %v4381 = vld [vmem:[#allocation2 + $0x78] sm:$0xff]
        %v4382 = vld [vmem:[#allocation2 + $0x80] sm:$0xff]
        %v4383 = vld [vmem:[#allocation2 + $0x90] sm:$0xff]
        %v4384 = vld [vmem:[#allocation2 + $0x98] sm:$0xff]
        %v4385 = vld [vmem:[#allocation2 + $0xa8] sm:$0xff]
        %v4386 = vld [vmem:[#allocation2 + $0xb0] sm:$0xff]
        %s4387 = scalar_lea.vmem [#allocation7], 192
        %v4388 = vld [vmem:[%s4387] sm:$0xff]
        %v4389 = vld [vmem:[%s4387 + $0x8] sm:$0xff]
        %v4390 = vld [vmem:[%s4387 + $0x10] sm:$0xff]
        %v4391 = vld [vmem:[%s4387 + $0x18] sm:$0xff]
        %v4392 = vld [vmem:[#allocation2 + $0x4] sm:$0xff]
        %v4393 = vld [vmem:[#allocation2 + $0xc] sm:$0xff]
        %v4394 = vld [vmem:[#allocation2 + $0x1c] sm:$0xff]
        %v4395 = vld [vmem:[#allocation2 + $0x24] sm:$0xff]
        %v4396 = vld [vmem:[#allocation2 + $0x34] sm:$0xff]
        %v4397 = vld [vmem:[#allocation2 + $0x3c] sm:$0xff]
        %v4398 = vld [vmem:[#allocation2 + $0x4c] sm:$0xff]
        %v4399 = vld [vmem:[#allocation2 + $0x54] sm:$0xff]
        %v4400 = vld [vmem:[#allocation2 + $0x64] sm:$0xff]
        %v4401 = vld [vmem:[#allocation2 + $0x6c] sm:$0xff]
        %v4402 = vld [vmem:[#allocation2 + $0x7c] sm:$0xff]
        %v4403 = vld [vmem:[#allocation2 + $0x84] sm:$0xff]
        %v4404 = vld [vmem:[#allocation2 + $0x94] sm:$0xff]
        %v4405 = vld [vmem:[#allocation2 + $0x9c] sm:$0xff]
        %v4406 = vld [vmem:[#allocation2 + $0xac] sm:$0xff]
        %v4407 = vld [vmem:[#allocation2 + $0xb4] sm:$0xff]
        %s4408 = scalar_lea.vmem [#allocation7], 224
        %v4409 = vld [vmem:[%s4408] sm:$0xff]
        %v4410 = vld [vmem:[%s4408 + $0x8] sm:$0xff]
        %v4411 = vld [vmem:[%s4408 + $0x10] sm:$0xff]
        %v4412 = vld [vmem:[%s4408 + $0x18] sm:$0xff]
        %v4414 = vsel %vm576, %v4392, 0
        %v4417 = vsel %vm576, %v4393, 0
        %v4420 = vsel %vm576, %v4394, 0
        %v4423 = vsel %vm576, %v4395, 0
        %v4426 = vsel %vm576, %v4396, 0
        %v4429 = vsel %vm576, %v4397, 0
        %v4432 = vsel %vm576, %v4398, 0
        %v4435 = vsel %vm576, %v4399, 0
        %v4438 = vsel %vm576, %v4400, 0
        %v4441 = vsel %vm576, %v4401, 0
        %v4444 = vsel %vm576, %v4402, 0
        %v4447 = vsel %vm576, %v4403, 0
        %v4450 = vsel %vm576, %v4404, 0
        %v4453 = vsel %vm576, %v4405, 0
        %v4456 = vsel %vm576, %v4406, 0
        %v4459 = vsel %vm576, %v4407, 0
        %4461 = vmatprep.subr.mxu0 0.0
        %4462 = vmatpush1.msra.mxu0 0.0
        %4463 = vmatprep.subr.mxu0 0.0
        %4464 = vmatpush1.msra.mxu0 0.0
        %4465 = vmatprep.subr.mxu0 0.0
        %4466 = vmatpush1.msra.mxu0 0.0
        %4467 = vmatprep.subr.mxu0 0.0
        %4468 = vmatpush1.msra.mxu0 0.0
        %4469 = vmatprep.subr.mxu0 0.0
        %4470 = vmatpush1.msra.mxu0 0.0
        %4471 = vmatprep.subr.mxu0 0.0
        %4472 = vmatpush1.msra.mxu0 0.0
        %4473 = vmatprep.subr.mxu0 0.0
        %4474 = vmatpush1.msra.mxu0 0.0
        %4475 = vmatprep.subr.mxu0 0.0
        %4476 = vmatpush1.msra.mxu0 0.0
        %4477 = vmatprep.subr.mxu0 0.0
        %4478 = vmatpush1.msra.mxu0 0.0
        %4479 = vmatprep.subr.mxu0 0.0
        %4480 = vmatpush1.msra.mxu0 0.0
        %4481 = vmatprep.subr.mxu0 0.0
        %4482 = vmatpush1.msra.mxu0 0.0
        %4483 = vmatprep.subr.mxu0 0.0
        %4484 = vmatpush1.msra.mxu0 0.0
        %4485 = vmatprep.subr.mxu0 0.0
        %4486 = vmatpush1.msra.mxu0 %v4412
        %4487 = vmatprep.subr.mxu0 0.0
        %4488 = vmatpush1.msra.mxu0 %v4411
        %4489 = vmatprep.subr.mxu0 0.0
        %4490 = vmatpush1.msra.mxu0 %v4410
        %4491 = vmatprep.subr.mxu0 0.0
        %4492 = vmatpush1.msra.mxu0 %v4409
        %4493 = vmatprep.subr.mxu0 0.0
        %4494 = vmatpush2.msra.mxu0 0.0
        %4495 = vmatprep.subr.mxu0 0.0
        %4496 = vmatpush2.msra.mxu0 0.0
        %4497 = vmatprep.subr.mxu0 0.0
        %4498 = vmatpush2.msra.mxu0 0.0
        %4499 = vmatprep.subr.mxu0 0.0
        %4500 = vmatpush2.msra.mxu0 0.0
        %4501 = vmatprep.subr.mxu0 0.0
        %4502 = vmatpush2.msra.mxu0 0.0
        %4503 = vmatprep.subr.mxu0 0.0
        %4504 = vmatpush2.msra.mxu0 0.0
        %4505 = vmatprep.subr.mxu0 0.0
        %4506 = vmatpush2.msra.mxu0 0.0
        %4507 = vmatprep.subr.mxu0 0.0
        %4508 = vmatpush2.msra.mxu0 0.0
        %4509 = vmatprep.subr.mxu0 0.0
        %4510 = vmatpush2.msra.mxu0 0.0
        %4511 = vmatprep.subr.mxu0 0.0
        %4512 = vmatpush2.msra.mxu0 0.0
        %4513 = vmatprep.subr.mxu0 0.0
        %4514 = vmatpush2.msra.mxu0 0.0
        %4515 = vmatprep.subr.mxu0 0.0
        %4516 = vmatpush2.msra.mxu0 0.0
        %4517 = vmatprep.subr.mxu0 0.0
        %4518 = vmatpush2.msra.mxu0 0.0
        %4519 = vmatprep.subr.mxu0 0.0
        %4520 = vmatpush2.msra.mxu0 0.0
        %4521 = vmatprep.subr.mxu0 0.0
        %4522 = vmatpush2.msra.mxu0 0.0
        %4523 = vmatprep.subr.mxu0 0.0
        %4524 = vmatpush2.msra.mxu0 0.0
        %4525 = vmatprep.mubr.f32.mxu0 0.0
        %4526 = vmatmul.mubr.f32.gmra.mxu0 %v4414
        %v4527 = vpop.f32.mrf.mxu0
        %v4528 = vadd.f32 0.0, %v4527
        %v4529 = vpop.f32.mrf.mxu0
        %4530 = vmatprep.mubr.f32.mxu0 0.0
        %4531 = vmatmul.mubr.f32.gmra.mxu0 %v4417
        %v4532 = vpop.f32.mrf.mxu0
        %v4533 = vadd.f32 0.0, %v4532
        %v4534 = vpop.f32.mrf.mxu0
        %4535 = vmatprep.mubr.f32.mxu0 0.0
        %4536 = vmatmul.mubr.f32.gmra.mxu0 %v4420
        %v4537 = vpop.f32.mrf.mxu0
        %v4538 = vadd.f32 0.0, %v4537
        %v4539 = vpop.f32.mrf.mxu0
        %4540 = vmatprep.mubr.f32.mxu0 0.0
        %4541 = vmatmul.mubr.f32.gmra.mxu0 %v4423
        %v4542 = vpop.f32.mrf.mxu0
        %v4543 = vadd.f32 0.0, %v4542
        %v4544 = vpop.f32.mrf.mxu0
        %4545 = vmatprep.mubr.f32.mxu0 0.0
        %4546 = vmatmul.mubr.f32.gmra.mxu0 %v4426
        %v4547 = vpop.f32.mrf.mxu0
        %v4548 = vadd.f32 0.0, %v4547
        %v4549 = vpop.f32.mrf.mxu0
        %4550 = vmatprep.mubr.f32.mxu0 0.0
        %4551 = vmatmul.mubr.f32.gmra.mxu0 %v4429
        %v4552 = vpop.f32.mrf.mxu0
        %v4553 = vadd.f32 0.0, %v4552
        %v4554 = vpop.f32.mrf.mxu0
        %4555 = vmatprep.mubr.f32.mxu0 0.0
        %4556 = vmatmul.mubr.f32.gmra.mxu0 %v4432
        %v4557 = vpop.f32.mrf.mxu0
        %v4558 = vadd.f32 0.0, %v4557
        %v4559 = vpop.f32.mrf.mxu0
        %4560 = vmatprep.mubr.f32.mxu0 0.0
        %4561 = vmatmul.mubr.f32.gmra.mxu0 %v4435
        %v4562 = vpop.f32.mrf.mxu0
        %v4563 = vadd.f32 0.0, %v4562
        %v4564 = vpop.f32.mrf.mxu0
        %4565 = vmatprep.mubr.f32.mxu0 0.0
        %4566 = vmatmul.mubr.f32.gmra.mxu0 %v4438
        %v4567 = vpop.f32.mrf.mxu0
        %v4568 = vadd.f32 0.0, %v4567
        %v4569 = vpop.f32.mrf.mxu0
        %4570 = vmatprep.mubr.f32.mxu0 0.0
        %4571 = vmatmul.mubr.f32.gmra.mxu0 %v4441
        %v4572 = vpop.f32.mrf.mxu0
        %v4573 = vadd.f32 0.0, %v4572
        %v4574 = vpop.f32.mrf.mxu0
        %4575 = vmatprep.mubr.f32.mxu0 0.0
        %4576 = vmatmul.mubr.f32.gmra.mxu0 %v4444
        %v4577 = vpop.f32.mrf.mxu0
        %v4578 = vadd.f32 0.0, %v4577
        %v4579 = vpop.f32.mrf.mxu0
        %4580 = vmatprep.mubr.f32.mxu0 0.0
        %4581 = vmatmul.mubr.f32.gmra.mxu0 %v4447
        %v4582 = vpop.f32.mrf.mxu0
        %v4583 = vadd.f32 0.0, %v4582
        %v4584 = vpop.f32.mrf.mxu0
        %4585 = vmatprep.mubr.f32.mxu0 0.0
        %4586 = vmatmul.mubr.f32.gmra.mxu0 %v4450
        %v4587 = vpop.f32.mrf.mxu0
        %v4588 = vadd.f32 0.0, %v4587
        %v4589 = vpop.f32.mrf.mxu0
        %4590 = vmatprep.mubr.f32.mxu0 0.0
        %4591 = vmatmul.mubr.f32.gmra.mxu0 %v4453
        %v4592 = vpop.f32.mrf.mxu0
        %v4593 = vadd.f32 0.0, %v4592
        %v4594 = vpop.f32.mrf.mxu0
        %4595 = vmatprep.mubr.f32.mxu0 0.0
        %4596 = vmatmul.mubr.f32.gmra.mxu0 %v4456
        %v4597 = vpop.f32.mrf.mxu0
        %v4598 = vadd.f32 0.0, %v4597
        %v4599 = vpop.f32.mrf.mxu0
        %4600 = vmatprep.mubr.f32.mxu0 0.0
        %4601 = vmatmul.mubr.f32.gmra.mxu0 %v4459
        %v4602 = vpop.f32.mrf.mxu0
        %v4603 = vadd.f32 0.0, %v4602
        %v4604 = vpop.f32.mrf.mxu0
        %4605 = vdwg.mxu0
        %v4607 = vsel %vm576, %v4371, 0
        %v4610 = vsel %vm576, %v4372, 0
        %v4613 = vsel %vm576, %v4373, 0
        %v4616 = vsel %vm576, %v4374, 0
        %v4619 = vsel %vm576, %v4375, 0
        %v4622 = vsel %vm576, %v4376, 0
        %v4625 = vsel %vm576, %v4377, 0
        %v4628 = vsel %vm576, %v4378, 0
        %v4631 = vsel %vm576, %v4379, 0
        %v4634 = vsel %vm576, %v4380, 0
        %v4637 = vsel %vm576, %v4381, 0
        %v4640 = vsel %vm576, %v4382, 0
        %v4643 = vsel %vm576, %v4383, 0
        %v4646 = vsel %vm576, %v4384, 0
        %v4649 = vsel %vm576, %v4385, 0
        %v4652 = vsel %vm576, %v4386, 0
        %4654 = vmatprep.subr.mxu0 0.0
        %4655 = vmatpush1.msra.mxu0 0.0
        %4656 = vmatprep.subr.mxu0 0.0
        %4657 = vmatpush1.msra.mxu0 0.0
        %4658 = vmatprep.subr.mxu0 0.0
        %4659 = vmatpush1.msra.mxu0 0.0
        %4660 = vmatprep.subr.mxu0 0.0
        %4661 = vmatpush1.msra.mxu0 0.0
        %4662 = vmatprep.subr.mxu0 0.0
        %4663 = vmatpush1.msra.mxu0 0.0
        %4664 = vmatprep.subr.mxu0 0.0
        %4665 = vmatpush1.msra.mxu0 0.0
        %4666 = vmatprep.subr.mxu0 0.0
        %4667 = vmatpush1.msra.mxu0 0.0
        %4668 = vmatprep.subr.mxu0 0.0
        %4669 = vmatpush1.msra.mxu0 0.0
        %4670 = vmatprep.subr.mxu0 0.0
        %4671 = vmatpush1.msra.mxu0 0.0
        %4672 = vmatprep.subr.mxu0 0.0
        %4673 = vmatpush1.msra.mxu0 0.0
        %4674 = vmatprep.subr.mxu0 0.0
        %4675 = vmatpush1.msra.mxu0 0.0
        %4676 = vmatprep.subr.mxu0 0.0
        %4677 = vmatpush1.msra.mxu0 0.0
        %4678 = vmatprep.subr.mxu0 0.0
        %4679 = vmatpush1.msra.mxu0 %v4391
        %4680 = vmatprep.subr.mxu0 0.0
        %4681 = vmatpush1.msra.mxu0 %v4390
        %4682 = vmatprep.subr.mxu0 0.0
        %4683 = vmatpush1.msra.mxu0 %v4389
        %4684 = vmatprep.subr.mxu0 0.0
        %4685 = vmatpush1.msra.mxu0 %v4388
        %4686 = vmatprep.subr.mxu0 0.0
        %4687 = vmatpush2.msra.mxu0 0.0
        %4688 = vmatprep.subr.mxu0 0.0
        %4689 = vmatpush2.msra.mxu0 0.0
        %4690 = vmatprep.subr.mxu0 0.0
        %4691 = vmatpush2.msra.mxu0 0.0
        %4692 = vmatprep.subr.mxu0 0.0
        %4693 = vmatpush2.msra.mxu0 0.0
        %4694 = vmatprep.subr.mxu0 0.0
        %4695 = vmatpush2.msra.mxu0 0.0
        %4696 = vmatprep.subr.mxu0 0.0
        %4697 = vmatpush2.msra.mxu0 0.0
        %4698 = vmatprep.subr.mxu0 0.0
        %4699 = vmatpush2.msra.mxu0 0.0
        %4700 = vmatprep.subr.mxu0 0.0
        %4701 = vmatpush2.msra.mxu0 0.0
        %4702 = vmatprep.subr.mxu0 0.0
        %4703 = vmatpush2.msra.mxu0 0.0
        %4704 = vmatprep.subr.mxu0 0.0
        %4705 = vmatpush2.msra.mxu0 0.0
        %4706 = vmatprep.subr.mxu0 0.0
        %4707 = vmatpush2.msra.mxu0 0.0
        %4708 = vmatprep.subr.mxu0 0.0
        %4709 = vmatpush2.msra.mxu0 0.0
        %4710 = vmatprep.subr.mxu0 0.0
        %4711 = vmatpush2.msra.mxu0 0.0
        %4712 = vmatprep.subr.mxu0 0.0
        %4713 = vmatpush2.msra.mxu0 0.0
        %4714 = vmatprep.subr.mxu0 0.0
        %4715 = vmatpush2.msra.mxu0 0.0
        %4716 = vmatprep.subr.mxu0 0.0
        %4717 = vmatpush2.msra.mxu0 0.0
        %4718 = vmatprep.mubr.f32.mxu0 0.0
        %4719 = vmatmul.mubr.f32.gmra.mxu0 %v4607
        %v4720 = vpop.f32.mrf.mxu0
        %v4721 = vadd.f32 %v4528, %v4720
        %v4722 = vpop.f32.mrf.mxu0
        %4723 = vmatprep.mubr.f32.mxu0 0.0
        %4724 = vmatmul.mubr.f32.gmra.mxu0 %v4610
        %v4725 = vpop.f32.mrf.mxu0
        %v4726 = vadd.f32 %v4533, %v4725
        %v4727 = vpop.f32.mrf.mxu0
        %4728 = vmatprep.mubr.f32.mxu0 0.0
        %4729 = vmatmul.mubr.f32.gmra.mxu0 %v4613
        %v4730 = vpop.f32.mrf.mxu0
        %v4731 = vadd.f32 %v4538, %v4730
        %v4732 = vpop.f32.mrf.mxu0
        %4733 = vmatprep.mubr.f32.mxu0 0.0
        %4734 = vmatmul.mubr.f32.gmra.mxu0 %v4616
        %v4735 = vpop.f32.mrf.mxu0
        %v4736 = vadd.f32 %v4543, %v4735
        %v4737 = vpop.f32.mrf.mxu0
        %4738 = vmatprep.mubr.f32.mxu0 0.0
        %4739 = vmatmul.mubr.f32.gmra.mxu0 %v4619
        %v4740 = vpop.f32.mrf.mxu0
        %v4741 = vadd.f32 %v4548, %v4740
        %v4742 = vpop.f32.mrf.mxu0
        %4743 = vmatprep.mubr.f32.mxu0 0.0
        %4744 = vmatmul.mubr.f32.gmra.mxu0 %v4622
        %v4745 = vpop.f32.mrf.mxu0
        %v4746 = vadd.f32 %v4553, %v4745
        %v4747 = vpop.f32.mrf.mxu0
        %4748 = vmatprep.mubr.f32.mxu0 0.0
        %4749 = vmatmul.mubr.f32.gmra.mxu0 %v4625
        %v4750 = vpop.f32.mrf.mxu0
        %v4751 = vadd.f32 %v4558, %v4750
        %v4752 = vpop.f32.mrf.mxu0
        %4753 = vmatprep.mubr.f32.mxu0 0.0
        %4754 = vmatmul.mubr.f32.gmra.mxu0 %v4628
        %v4755 = vpop.f32.mrf.mxu0
        %v4756 = vadd.f32 %v4563, %v4755
        %v4757 = vpop.f32.mrf.mxu0
        %4758 = vmatprep.mubr.f32.mxu0 0.0
        %4759 = vmatmul.mubr.f32.gmra.mxu0 %v4631
        %v4760 = vpop.f32.mrf.mxu0
        %v4761 = vadd.f32 %v4568, %v4760
        %v4762 = vpop.f32.mrf.mxu0
        %4763 = vmatprep.mubr.f32.mxu0 0.0
        %4764 = vmatmul.mubr.f32.gmra.mxu0 %v4634
        %v4765 = vpop.f32.mrf.mxu0
        %v4766 = vadd.f32 %v4573, %v4765
        %v4767 = vpop.f32.mrf.mxu0
        %4768 = vmatprep.mubr.f32.mxu0 0.0
        %4769 = vmatmul.mubr.f32.gmra.mxu0 %v4637
        %v4770 = vpop.f32.mrf.mxu0
        %v4771 = vadd.f32 %v4578, %v4770
        %v4772 = vpop.f32.mrf.mxu0
        %4773 = vmatprep.mubr.f32.mxu0 0.0
        %4774 = vmatmul.mubr.f32.gmra.mxu0 %v4640
        %v4775 = vpop.f32.mrf.mxu0
        %v4776 = vadd.f32 %v4583, %v4775
        %v4777 = vpop.f32.mrf.mxu0
        %4778 = vmatprep.mubr.f32.mxu0 0.0
        %4779 = vmatmul.mubr.f32.gmra.mxu0 %v4643
        %v4780 = vpop.f32.mrf.mxu0
        %v4781 = vadd.f32 %v4588, %v4780
        %v4782 = vpop.f32.mrf.mxu0
        %4783 = vmatprep.mubr.f32.mxu0 0.0
        %4784 = vmatmul.mubr.f32.gmra.mxu0 %v4646
        %v4785 = vpop.f32.mrf.mxu0
        %v4786 = vadd.f32 %v4593, %v4785
        %v4787 = vpop.f32.mrf.mxu0
        %4788 = vmatprep.mubr.f32.mxu0 0.0
        %4789 = vmatmul.mubr.f32.gmra.mxu0 %v4649
        %v4790 = vpop.f32.mrf.mxu0
        %v4791 = vadd.f32 %v4598, %v4790
        %v4792 = vpop.f32.mrf.mxu0
        %4793 = vmatprep.mubr.f32.mxu0 0.0
        %4794 = vmatmul.mubr.f32.gmra.mxu0 %v4652
        %v4795 = vpop.f32.mrf.mxu0
        %v4796 = vadd.f32 %v4603, %v4795
        %v4797 = vpop.f32.mrf.mxu0
        %4798 = vdwg.mxu0
        %v4799 = vld [vmem:[#allocation2 + $0x8] sm:$0xff]
        %v4800 = vld [vmem:[#allocation2 + $0x10] sm:$0xff]
        %v4801 = vld [vmem:[#allocation2 + $0x20] sm:$0xff]
        %v4802 = vld [vmem:[#allocation2 + $0x28] sm:$0xff]
        %v4803 = vld [vmem:[#allocation2 + $0x38] sm:$0xff]
        %v4804 = vld [vmem:[#allocation2 + $0x40] sm:$0xff]
        %v4805 = vld [vmem:[#allocation2 + $0x50] sm:$0xff]
        %v4806 = vld [vmem:[#allocation2 + $0x58] sm:$0xff]
        %v4807 = vld [vmem:[#allocation2 + $0x68] sm:$0xff]
        %v4808 = vld [vmem:[#allocation2 + $0x70] sm:$0xff]
        %v4809 = vld [vmem:[#allocation2 + $0x80] sm:$0xff]
        %v4810 = vld [vmem:[#allocation2 + $0x88] sm:$0xff]
        %v4811 = vld [vmem:[#allocation2 + $0x98] sm:$0xff]
        %v4812 = vld [vmem:[#allocation2 + $0xa0] sm:$0xff]
        %v4813 = vld [vmem:[#allocation2 + $0xb0] sm:$0xff]
        %v4814 = vld [vmem:[#allocation2 + $0xb8] sm:$0xff]
        %s4815 = scalar_lea.vmem [#allocation7], 256
        %v4816 = vld [vmem:[%s4815] sm:$0xff]
        %v4817 = vld [vmem:[%s4815 + $0x8] sm:$0xff]
        %v4818 = vld [vmem:[%s4815 + $0x10] sm:$0xff]
        %v4819 = vld [vmem:[%s4815 + $0x18] sm:$0xff]
        %v4821 = vsel %vm576, %v4799, 0
        %v4824 = vsel %vm576, %v4800, 0
        %v4827 = vsel %vm576, %v4801, 0
        %v4830 = vsel %vm576, %v4802, 0
        %v4833 = vsel %vm576, %v4803, 0
        %v4836 = vsel %vm576, %v4804, 0
        %v4839 = vsel %vm576, %v4805, 0
        %v4842 = vsel %vm576, %v4806, 0
        %v4845 = vsel %vm576, %v4807, 0
        %v4848 = vsel %vm576, %v4808, 0
        %v4851 = vsel %vm576, %v4809, 0
        %v4854 = vsel %vm576, %v4810, 0
        %v4857 = vsel %vm576, %v4811, 0
        %v4860 = vsel %vm576, %v4812, 0
        %v4863 = vsel %vm576, %v4813, 0
        %v4866 = vsel %vm576, %v4814, 0
        %4868 = vmatprep.subr.mxu0 0.0
        %4869 = vmatpush1.msra.mxu0 0.0
        %4870 = vmatprep.subr.mxu0 0.0
        %4871 = vmatpush1.msra.mxu0 0.0
        %4872 = vmatprep.subr.mxu0 0.0
        %4873 = vmatpush1.msra.mxu0 0.0
        %4874 = vmatprep.subr.mxu0 0.0
        %4875 = vmatpush1.msra.mxu0 0.0
        %4876 = vmatprep.subr.mxu0 0.0
        %4877 = vmatpush1.msra.mxu0 0.0
        %4878 = vmatprep.subr.mxu0 0.0
        %4879 = vmatpush1.msra.mxu0 0.0
        %4880 = vmatprep.subr.mxu0 0.0
        %4881 = vmatpush1.msra.mxu0 0.0
        %4882 = vmatprep.subr.mxu0 0.0
        %4883 = vmatpush1.msra.mxu0 0.0
        %4884 = vmatprep.subr.mxu0 0.0
        %4885 = vmatpush1.msra.mxu0 0.0
        %4886 = vmatprep.subr.mxu0 0.0
        %4887 = vmatpush1.msra.mxu0 0.0
        %4888 = vmatprep.subr.mxu0 0.0
        %4889 = vmatpush1.msra.mxu0 0.0
        %4890 = vmatprep.subr.mxu0 0.0
        %4891 = vmatpush1.msra.mxu0 0.0
        %4892 = vmatprep.subr.mxu0 0.0
        %4893 = vmatpush1.msra.mxu0 %v4819
        %4894 = vmatprep.subr.mxu0 0.0
        %4895 = vmatpush1.msra.mxu0 %v4818
        %4896 = vmatprep.subr.mxu0 0.0
        %4897 = vmatpush1.msra.mxu0 %v4817
        %4898 = vmatprep.subr.mxu0 0.0
        %4899 = vmatpush1.msra.mxu0 %v4816
        %4900 = vmatprep.subr.mxu0 0.0
        %4901 = vmatpush2.msra.mxu0 0.0
        %4902 = vmatprep.subr.mxu0 0.0
        %4903 = vmatpush2.msra.mxu0 0.0
        %4904 = vmatprep.subr.mxu0 0.0
        %4905 = vmatpush2.msra.mxu0 0.0
        %4906 = vmatprep.subr.mxu0 0.0
        %4907 = vmatpush2.msra.mxu0 0.0
        %4908 = vmatprep.subr.mxu0 0.0
        %4909 = vmatpush2.msra.mxu0 0.0
        %4910 = vmatprep.subr.mxu0 0.0
        %4911 = vmatpush2.msra.mxu0 0.0
        %4912 = vmatprep.subr.mxu0 0.0
        %4913 = vmatpush2.msra.mxu0 0.0
        %4914 = vmatprep.subr.mxu0 0.0
        %4915 = vmatpush2.msra.mxu0 0.0
        %4916 = vmatprep.subr.mxu0 0.0
        %4917 = vmatpush2.msra.mxu0 0.0
        %4918 = vmatprep.subr.mxu0 0.0
        %4919 = vmatpush2.msra.mxu0 0.0
        %4920 = vmatprep.subr.mxu0 0.0
        %4921 = vmatpush2.msra.mxu0 0.0
        %4922 = vmatprep.subr.mxu0 0.0
        %4923 = vmatpush2.msra.mxu0 0.0
        %4924 = vmatprep.subr.mxu0 0.0
        %4925 = vmatpush2.msra.mxu0 0.0
        %4926 = vmatprep.subr.mxu0 0.0
        %4927 = vmatpush2.msra.mxu0 0.0
        %4928 = vmatprep.subr.mxu0 0.0
        %4929 = vmatpush2.msra.mxu0 0.0
        %4930 = vmatprep.subr.mxu0 0.0
        %4931 = vmatpush2.msra.mxu0 0.0
        %4932 = vmatprep.mubr.f32.mxu0 0.0
        %4933 = vmatmul.mubr.f32.gmra.mxu0 %v4821
        %v4934 = vpop.f32.mrf.mxu0
        %v4935 = vadd.f32 0.0, %v4934
        %v4936 = vpop.f32.mrf.mxu0
        %4937 = vmatprep.mubr.f32.mxu0 0.0
        %4938 = vmatmul.mubr.f32.gmra.mxu0 %v4824
        %v4939 = vpop.f32.mrf.mxu0
        %v4940 = vadd.f32 0.0, %v4939
        %v4941 = vpop.f32.mrf.mxu0
        %4942 = vmatprep.mubr.f32.mxu0 0.0
        %4943 = vmatmul.mubr.f32.gmra.mxu0 %v4827
        %v4944 = vpop.f32.mrf.mxu0
        %v4945 = vadd.f32 0.0, %v4944
        %v4946 = vpop.f32.mrf.mxu0
        %4947 = vmatprep.mubr.f32.mxu0 0.0
        %4948 = vmatmul.mubr.f32.gmra.mxu0 %v4830
        %v4949 = vpop.f32.mrf.mxu0
        %v4950 = vadd.f32 0.0, %v4949
        %v4951 = vpop.f32.mrf.mxu0
        %4952 = vmatprep.mubr.f32.mxu0 0.0
        %4953 = vmatmul.mubr.f32.gmra.mxu0 %v4833
        %v4954 = vpop.f32.mrf.mxu0
        %v4955 = vadd.f32 0.0, %v4954
        %v4956 = vpop.f32.mrf.mxu0
        %4957 = vmatprep.mubr.f32.mxu0 0.0
        %4958 = vmatmul.mubr.f32.gmra.mxu0 %v4836
        %v4959 = vpop.f32.mrf.mxu0
        %v4960 = vadd.f32 0.0, %v4959
        %v4961 = vpop.f32.mrf.mxu0
        %4962 = vmatprep.mubr.f32.mxu0 0.0
        %4963 = vmatmul.mubr.f32.gmra.mxu0 %v4839
        %v4964 = vpop.f32.mrf.mxu0
        %v4965 = vadd.f32 0.0, %v4964
        %v4966 = vpop.f32.mrf.mxu0
        %4967 = vmatprep.mubr.f32.mxu0 0.0
        %4968 = vmatmul.mubr.f32.gmra.mxu0 %v4842
        %v4969 = vpop.f32.mrf.mxu0
        %v4970 = vadd.f32 0.0, %v4969
        %v4971 = vpop.f32.mrf.mxu0
        %4972 = vmatprep.mubr.f32.mxu0 0.0
        %4973 = vmatmul.mubr.f32.gmra.mxu0 %v4845
        %v4974 = vpop.f32.mrf.mxu0
        %v4975 = vadd.f32 0.0, %v4974
        %v4976 = vpop.f32.mrf.mxu0
        %4977 = vmatprep.mubr.f32.mxu0 0.0
        %4978 = vmatmul.mubr.f32.gmra.mxu0 %v4848
        %v4979 = vpop.f32.mrf.mxu0
        %v4980 = vadd.f32 0.0, %v4979
        %v4981 = vpop.f32.mrf.mxu0
        %4982 = vmatprep.mubr.f32.mxu0 0.0
        %4983 = vmatmul.mubr.f32.gmra.mxu0 %v4851
        %v4984 = vpop.f32.mrf.mxu0
        %v4985 = vadd.f32 0.0, %v4984
        %v4986 = vpop.f32.mrf.mxu0
        %4987 = vmatprep.mubr.f32.mxu0 0.0
        %4988 = vmatmul.mubr.f32.gmra.mxu0 %v4854
        %v4989 = vpop.f32.mrf.mxu0
        %v4990 = vadd.f32 0.0, %v4989
        %v4991 = vpop.f32.mrf.mxu0
        %4992 = vmatprep.mubr.f32.mxu0 0.0
        %4993 = vmatmul.mubr.f32.gmra.mxu0 %v4857
        %v4994 = vpop.f32.mrf.mxu0
        %v4995 = vadd.f32 0.0, %v4994
        %v4996 = vpop.f32.mrf.mxu0
        %4997 = vmatprep.mubr.f32.mxu0 0.0
        %4998 = vmatmul.mubr.f32.gmra.mxu0 %v4860
        %v4999 = vpop.f32.mrf.mxu0
        %v5000 = vadd.f32 0.0, %v4999
        %v5001 = vpop.f32.mrf.mxu0
        %5002 = vmatprep.mubr.f32.mxu0 0.0
        %5003 = vmatmul.mubr.f32.gmra.mxu0 %v4863
        %v5004 = vpop.f32.mrf.mxu0
        %v5005 = vadd.f32 0.0, %v5004
        %v5006 = vpop.f32.mrf.mxu0
        %5007 = vmatprep.mubr.f32.mxu0 0.0
        %5008 = vmatmul.mubr.f32.gmra.mxu0 %v4866
        %v5009 = vpop.f32.mrf.mxu0
        %v5010 = vadd.f32 0.0, %v5009
        %v5011 = vpop.f32.mrf.mxu0
        %5012 = vdwg.mxu0
        %v5013 = vadd.f32 %v4721, %v4935
        %v5014 = vadd.f32 %v4726, %v4940
        %v5015 = vadd.f32 %v4731, %v4945
        %v5016 = vadd.f32 %v4736, %v4950
        %v5017 = vadd.f32 %v4741, %v4955
        %v5018 = vadd.f32 %v4746, %v4960
        %v5019 = vadd.f32 %v4751, %v4965
        %v5020 = vadd.f32 %v4756, %v4970
        %v5021 = vadd.f32 %v4761, %v4975
        %v5022 = vadd.f32 %v4766, %v4980
        %v5023 = vadd.f32 %v4771, %v4985
        %v5024 = vadd.f32 %v4776, %v4990
        %v5025 = vadd.f32 %v4781, %v4995
        %v5026 = vadd.f32 %v4786, %v5000
        %v5027 = vadd.f32 %v4791, %v5005
        %v5028 = vadd.f32 %v4796, %v5010
        %s5029 = scalar_lea.vmem %s5, 2
        %v5030 = vld [vmem:[%s5029] sm:$0x1]
        %v5032 = vlaneseq
        %v5033 = vshrl.u32 %v5032, 7
        %v5034 = vsub.s32 0, %v5033
        %v5035 = vrot.slane %v5030, %v5034
        %v5037 = vadd.f32 %v5013, %v5035
        %v5038 = vadd.f32 %v5014, %v5035
        %v5039 = vadd.f32 %v5015, %v5035
        %v5040 = vadd.f32 %v5016, %v5035
        %v5041 = vadd.f32 %v5017, %v5035
        %v5042 = vadd.f32 %v5018, %v5035
        %v5043 = vadd.f32 %v5019, %v5035
        %v5044 = vadd.f32 %v5020, %v5035
        %v5045 = vadd.f32 %v5021, %v5035
        %v5046 = vadd.f32 %v5022, %v5035
        %v5047 = vadd.f32 %v5023, %v5035
        %v5048 = vadd.f32 %v5024, %v5035
        %v5049 = vadd.f32 %v5025, %v5035
        %v5050 = vadd.f32 %v5026, %v5035
        %v5051 = vadd.f32 %v5027, %v5035
        %v5052 = vadd.f32 %v5028, %v5035
        %v5053 = vmax.f32 %v5037, 0.0
        %v5054 = vmax.f32 %v5038, 0.0
        %v5055 = vmax.f32 %v5039, 0.0
        %v5056 = vmax.f32 %v5040, 0.0
        %v5057 = vmax.f32 %v5041, 0.0
        %v5058 = vmax.f32 %v5042, 0.0
        %v5059 = vmax.f32 %v5043, 0.0
        %v5060 = vmax.f32 %v5044, 0.0
        %v5061 = vmax.f32 %v5045, 0.0
        %v5062 = vmax.f32 %v5046, 0.0
        %v5063 = vmax.f32 %v5047, 0.0
        %v5064 = vmax.f32 %v5048, 0.0
        %v5065 = vmax.f32 %v5049, 0.0
        %v5066 = vmax.f32 %v5050, 0.0
        %v5067 = vmax.f32 %v5051, 0.0
        %v5068 = vmax.f32 %v5052, 0.0
        %v5069 = vadd.f32 %v5053, %v3689
        %v5070 = vadd.f32 %v5054, %v3690
        %v5071 = vadd.f32 %v5055, %v3691
        %v5072 = vadd.f32 %v5056, %v3692
        %v5073 = vadd.f32 %v5057, %v3693
        %v5074 = vadd.f32 %v5058, %v3694
        %v5075 = vadd.f32 %v5059, %v3695
        %v5076 = vadd.f32 %v5060, %v3696
        %v5077 = vadd.f32 %v5061, %v3697
        %v5078 = vadd.f32 %v5062, %v3698
        %v5079 = vadd.f32 %v5063, %v3699
        %v5080 = vadd.f32 %v5064, %v3700
        %v5081 = vadd.f32 %v5065, %v3701
        %v5082 = vadd.f32 %v5066, %v3702
        %v5083 = vadd.f32 %v5067, %v3703
        %v5084 = vadd.f32 %v5068, %v3704
        %v5085 = vmax.f32 %v5069, 0.0
        %v5086 = vmax.f32 %v5070, 0.0
        %v5087 = vmax.f32 %v5071, 0.0
        %v5088 = vmax.f32 %v5072, 0.0
        %v5089 = vmax.f32 %v5073, 0.0
        %v5090 = vmax.f32 %v5074, 0.0
        %v5091 = vmax.f32 %v5075, 0.0
        %v5092 = vmax.f32 %v5076, 0.0
        %v5093 = vmax.f32 %v5077, 0.0
        %v5094 = vmax.f32 %v5078, 0.0
        %v5095 = vmax.f32 %v5079, 0.0
        %v5096 = vmax.f32 %v5080, 0.0
        %v5097 = vmax.f32 %v5081, 0.0
        %v5098 = vmax.f32 %v5082, 0.0
        %v5099 = vmax.f32 %v5083, 0.0
        %v5100 = vmax.f32 %v5084, 0.0
        %5101 = vst.msk [vmem:[#allocation2 + $0x8] sm:$0xff] %vm576, %v5085
        %5102 = vst.msk [vmem:[#allocation2 + $0x10] sm:$0xff] %vm576, %v5086
        %5103 = vst.msk [vmem:[#allocation2 + $0x20] sm:$0xff] %vm576, %v5087
        %5104 = vst.msk [vmem:[#allocation2 + $0x28] sm:$0xff] %vm576, %v5088
        %5105 = vst.msk [vmem:[#allocation2 + $0x38] sm:$0xff] %vm576, %v5089
        %5106 = vst.msk [vmem:[#allocation2 + $0x40] sm:$0xff] %vm576, %v5090
        %5107 = vst.msk [vmem:[#allocation2 + $0x50] sm:$0xff] %vm576, %v5091
        %5108 = vst.msk [vmem:[#allocation2 + $0x58] sm:$0xff] %vm576, %v5092
        %5109 = vst.msk [vmem:[#allocation2 + $0x68] sm:$0xff] %vm576, %v5093
        %5110 = vst.msk [vmem:[#allocation2 + $0x70] sm:$0xff] %vm576, %v5094
        %5111 = vst.msk [vmem:[#allocation2 + $0x80] sm:$0xff] %vm576, %v5095
        %5112 = vst.msk [vmem:[#allocation2 + $0x88] sm:$0xff] %vm576, %v5096
        %5113 = vst.msk [vmem:[#allocation2 + $0x98] sm:$0xff] %vm576, %v5097
        %5114 = vst.msk [vmem:[#allocation2 + $0xa0] sm:$0xff] %vm576, %v5098
        %5115 = vst.msk [vmem:[#allocation2 + $0xb0] sm:$0xff] %vm576, %v5099
        %5116 = vst.msk [vmem:[#allocation2 + $0xb8] sm:$0xff] %vm576, %v5100
        %v5117 = vld [vmem:[#allocation2 + $0x8] sm:$0xff]
        %v5118 = vld [vmem:[#allocation2 + $0x10] sm:$0xff]
        %v5119 = vld [vmem:[#allocation2 + $0x20] sm:$0xff]
        %v5120 = vld [vmem:[#allocation2 + $0x28] sm:$0xff]
        %v5121 = vld [vmem:[#allocation2 + $0x38] sm:$0xff]
        %v5122 = vld [vmem:[#allocation2 + $0x40] sm:$0xff]
        %v5123 = vld [vmem:[#allocation2 + $0x50] sm:$0xff]
        %v5124 = vld [vmem:[#allocation2 + $0x58] sm:$0xff]
        %v5125 = vld [vmem:[#allocation2 + $0x68] sm:$0xff]
        %v5126 = vld [vmem:[#allocation2 + $0x70] sm:$0xff]
        %v5127 = vld [vmem:[#allocation2 + $0x80] sm:$0xff]
        %v5128 = vld [vmem:[#allocation2 + $0x88] sm:$0xff]
        %v5129 = vld [vmem:[#allocation2 + $0x98] sm:$0xff]
        %v5130 = vld [vmem:[#allocation2 + $0xa0] sm:$0xff]
        %v5131 = vld [vmem:[#allocation2 + $0xb0] sm:$0xff]
        %v5132 = vld [vmem:[#allocation2 + $0xb8] sm:$0xff]
        %v5133 = vsel %vm576, %v5117, 0.0
        %v5134 = vsel %vm576, %v5118, 0.0
        %v5135 = vadd.f32 %v5133, %v5134
        %v5136 = vrot.slane %v5135, 4
        %v5137 = vadd.f32 %v5135, %v5136
        %v5138 = vrot.slane %v5137, 2
        %v5139 = vadd.f32 %v5137, %v5138
        %v5140 = vrot.slane %v5139, 1
        %v5141 = vadd.f32 %v5139, %v5140
        %v5142 = vsel %vm576, %v5119, 0.0
        %v5143 = vsel %vm576, %v5120, 0.0
        %v5144 = vadd.f32 %v5142, %v5143
        %v5145 = vrot.slane %v5144, 4
        %v5146 = vadd.f32 %v5144, %v5145
        %v5147 = vrot.slane %v5146, 2
        %v5148 = vadd.f32 %v5146, %v5147
        %v5149 = vrot.slane %v5148, 1
        %v5150 = vadd.f32 %v5148, %v5149
        %v5151 = vsel %vm576, %v5121, 0.0
        %v5152 = vsel %vm576, %v5122, 0.0
        %v5153 = vadd.f32 %v5151, %v5152
        %v5154 = vrot.slane %v5153, 4
        %v5155 = vadd.f32 %v5153, %v5154
        %v5156 = vrot.slane %v5155, 2
        %v5157 = vadd.f32 %v5155, %v5156
        %v5158 = vrot.slane %v5157, 1
        %v5159 = vadd.f32 %v5157, %v5158
        %v5160 = vsel %vm576, %v5123, 0.0
        %v5161 = vsel %vm576, %v5124, 0.0
        %v5162 = vadd.f32 %v5160, %v5161
        %v5163 = vrot.slane %v5162, 4
        %v5164 = vadd.f32 %v5162, %v5163
        %v5165 = vrot.slane %v5164, 2
        %v5166 = vadd.f32 %v5164, %v5165
        %v5167 = vrot.slane %v5166, 1
        %v5168 = vadd.f32 %v5166, %v5167
        %v5169 = vsel %vm576, %v5125, 0.0
        %v5170 = vsel %vm576, %v5126, 0.0
        %v5171 = vadd.f32 %v5169, %v5170
        %v5172 = vrot.slane %v5171, 4
        %v5173 = vadd.f32 %v5171, %v5172
        %v5174 = vrot.slane %v5173, 2
        %v5175 = vadd.f32 %v5173, %v5174
        %v5176 = vrot.slane %v5175, 1
        %v5177 = vadd.f32 %v5175, %v5176
        %v5178 = vsel %vm576, %v5127, 0.0
        %v5179 = vsel %vm576, %v5128, 0.0
        %v5180 = vadd.f32 %v5178, %v5179
        %v5181 = vrot.slane %v5180, 4
        %v5182 = vadd.f32 %v5180, %v5181
        %v5183 = vrot.slane %v5182, 2
        %v5184 = vadd.f32 %v5182, %v5183
        %v5185 = vrot.slane %v5184, 1
        %v5186 = vadd.f32 %v5184, %v5185
        %v5187 = vsel %vm576, %v5129, 0.0
        %v5188 = vsel %vm576, %v5130, 0.0
        %v5189 = vadd.f32 %v5187, %v5188
        %v5190 = vrot.slane %v5189, 4
        %v5191 = vadd.f32 %v5189, %v5190
        %v5192 = vrot.slane %v5191, 2
        %v5193 = vadd.f32 %v5191, %v5192
        %v5194 = vrot.slane %v5193, 1
        %v5195 = vadd.f32 %v5193, %v5194
        %v5196 = vsel %vm576, %v5131, 0.0
        %v5197 = vsel %vm576, %v5132, 0.0
        %v5198 = vadd.f32 %v5196, %v5197
        %v5199 = vrot.slane %v5198, 4
        %v5200 = vadd.f32 %v5198, %v5199
        %v5201 = vrot.slane %v5200, 2
        %v5202 = vadd.f32 %v5200, %v5201
        %v5203 = vrot.slane %v5202, 1
        %v5204 = vadd.f32 %v5202, %v5203
        %v5205 = vmul.f32 %v5141, 0.0625
        %v5206 = vmul.f32 %v5150, 0.0625
        %v5207 = vmul.f32 %v5159, 0.0625
        %v5208 = vmul.f32 %v5168, 0.0625
        %v5209 = vmul.f32 %v5177, 0.0625
        %v5210 = vmul.f32 %v5186, 0.0625
        %v5211 = vmul.f32 %v5195, 0.0625
        %v5212 = vmul.f32 %v5204, 0.0625
        %v5213 = vld [vmem:[%s571] sm:$0xff]
        %v5214 = vld [vmem:[%s8] sm:$0xf]
        %v5215 = vld [vmem:[%s9] sm:$0x1]
        %v5217 = vlaneseq
        %v5218 = vshrl.u32 %v5217, 7
        %v5219 = vsub.s32 0, %v5218
        %v5220 = vrot.slane %v5215, %v5219
        %vm5222 = vcmask 31744
        %v5224 = vsel %vm5222, %v5213, 0
        %vm5226 = vcmask 1043456
        %v5228 = vsel %vm5226, %v5214, 0
        %5230 = vmatprep.subr.mxu0 0.0
        %5231 = vmatpush1.msra.mxu0 0.0
        %5232 = vmatprep.subr.mxu0 0.0
        %5233 = vmatpush1.msra.mxu0 0.0
        %5234 = vmatprep.subr.mxu0 0.0
        %5235 = vmatpush1.msra.mxu0 0.0
        %5236 = vmatprep.subr.mxu0 0.0
        %5237 = vmatpush1.msra.mxu0 0.0
        %5238 = vmatprep.subr.mxu0 0.0
        %5239 = vmatpush1.msra.mxu0 0.0
        %5240 = vmatprep.subr.mxu0 0.0
        %5241 = vmatpush1.msra.mxu0 0.0
        %5242 = vmatprep.subr.mxu0 0.0
        %5243 = vmatpush1.msra.mxu0 0.0
        %5244 = vmatprep.subr.mxu0 0.0
        %5245 = vmatpush1.msra.mxu0 0.0
        %5246 = vmatprep.subr.mxu0 0.0
        %5247 = vmatpush1.msra.mxu0 0.0
        %5248 = vmatprep.subr.mxu0 0.0
        %5249 = vmatpush1.msra.mxu0 0.0
        %5250 = vmatprep.subr.mxu0 0.0
        %5251 = vmatpush1.msra.mxu0 0.0
        %5252 = vmatprep.subr.mxu0 0.0
        %5253 = vmatpush1.msra.mxu0 0.0
        %5254 = vmatprep.subr.mxu0 0.0
        %5255 = vmatpush1.msra.mxu0 0.0
        %5256 = vmatprep.subr.mxu0 0.0
        %5257 = vmatpush1.msra.mxu0 0.0
        %5258 = vmatprep.subr.mxu0 0.0
        %5259 = vmatpush1.msra.mxu0 0.0
        %5260 = vmatprep.subr.mxu0 0.0
        %5261 = vmatpush1.msra.mxu0 %v5228
        %5262 = vmatprep.subr.mxu0 0.0
        %5263 = vmatpush2.msra.mxu0 0.0
        %5264 = vmatprep.subr.mxu0 0.0
        %5265 = vmatpush2.msra.mxu0 0.0
        %5266 = vmatprep.subr.mxu0 0.0
        %5267 = vmatpush2.msra.mxu0 0.0
        %5268 = vmatprep.subr.mxu0 0.0
        %5269 = vmatpush2.msra.mxu0 0.0
        %5270 = vmatprep.subr.mxu0 0.0
        %5271 = vmatpush2.msra.mxu0 0.0
        %5272 = vmatprep.subr.mxu0 0.0
        %5273 = vmatpush2.msra.mxu0 0.0
        %5274 = vmatprep.subr.mxu0 0.0
        %5275 = vmatpush2.msra.mxu0 0.0
        %5276 = vmatprep.subr.mxu0 0.0
        %5277 = vmatpush2.msra.mxu0 0.0
        %5278 = vmatprep.subr.mxu0 0.0
        %5279 = vmatpush2.msra.mxu0 0.0
        %5280 = vmatprep.subr.mxu0 0.0
        %5281 = vmatpush2.msra.mxu0 0.0
        %5282 = vmatprep.subr.mxu0 0.0
        %5283 = vmatpush2.msra.mxu0 0.0
        %5284 = vmatprep.subr.mxu0 0.0
        %5285 = vmatpush2.msra.mxu0 0.0
        %5286 = vmatprep.subr.mxu0 0.0
        %5287 = vmatpush2.msra.mxu0 0.0
        %5288 = vmatprep.subr.mxu0 0.0
        %5289 = vmatpush2.msra.mxu0 0.0
        %5290 = vmatprep.subr.mxu0 0.0
        %5291 = vmatpush2.msra.mxu0 0.0
        %5292 = vmatprep.subr.mxu0 0.0
        %5293 = vmatpush2.msra.mxu0 0.0
        %5294 = vmatprep.mubr.f32.mxu0 0.0
        %5295 = vmatmul.mubr.f32.gmra.mxu0 %v5224
        %v5296 = vpop.f32.mrf.mxu0
        %v5297 = vadd.f32 %v5220, %v5296
        %v5298 = vpop.f32.mrf.mxu0
        %5299 = vdwg.mxu0
        %v5300 = vld [vmem:[%s10] sm:$0xff]
        %v5301 = vld [vmem:[%s10 + $0x8] sm:$0xff]
        %v5302 = vld [vmem:[%s10 + $0x10] sm:$0xff]
        %v5303 = vld [vmem:[%s10 + $0x18] sm:$0xff]
        %v5304 = vld [vmem:[%s11] sm:$0xff]
        %vm5305 = vcmask 64512
        %v5307 = vsel %vm5305, %v5297, 0
        %5309 = vmatprep.subr.mxu0 0.0
        %5310 = vmatpush1.msra.mxu0 0.0
        %5311 = vmatprep.subr.mxu0 0.0
        %5312 = vmatpush1.msra.mxu0 0.0
        %5313 = vmatprep.subr.mxu0 0.0
        %5314 = vmatpush1.msra.mxu0 0.0
        %5315 = vmatprep.subr.mxu0 0.0
        %5316 = vmatpush1.msra.mxu0 0.0
        %5317 = vmatprep.subr.mxu0 0.0
        %5318 = vmatpush1.msra.mxu0 0.0
        %5319 = vmatprep.subr.mxu0 0.0
        %5320 = vmatpush1.msra.mxu0 0.0
        %5321 = vmatprep.subr.mxu0 0.0
        %5322 = vmatpush1.msra.mxu0 0.0
        %5323 = vmatprep.subr.mxu0 0.0
        %5324 = vmatpush1.msra.mxu0 0.0
        %5325 = vmatprep.subr.mxu0 0.0
        %5326 = vmatpush1.msra.mxu0 0.0
        %5327 = vmatprep.subr.mxu0 0.0
        %5328 = vmatpush1.msra.mxu0 0.0
        %5329 = vmatprep.subr.mxu0 0.0
        %5330 = vmatpush1.msra.mxu0 0.0
        %5331 = vmatprep.subr.mxu0 0.0
        %5332 = vmatpush1.msra.mxu0 0.0
        %5333 = vmatprep.subr.mxu0 0.0
        %5334 = vmatpush1.msra.mxu0 0.0
        %5335 = vmatprep.subr.mxu0 0.0
        %5336 = vmatpush1.msra.mxu0 0.0
        %5337 = vmatprep.subr.mxu0 0.0
        %5338 = vmatpush1.msra.mxu0 0.0
        %5339 = vmatprep.subr.mxu0 0.0
        %5340 = vmatpush1.msra.mxu0 %v5304
        %5341 = vmatprep.subr.mxu0 0.0
        %5342 = vmatpush2.msra.mxu0 0.0
        %5343 = vmatprep.subr.mxu0 0.0
        %5344 = vmatpush2.msra.mxu0 0.0
        %5345 = vmatprep.subr.mxu0 0.0
        %5346 = vmatpush2.msra.mxu0 0.0
        %5347 = vmatprep.subr.mxu0 0.0
        %5348 = vmatpush2.msra.mxu0 0.0
        %5349 = vmatprep.subr.mxu0 0.0
        %5350 = vmatpush2.msra.mxu0 0.0
        %5351 = vmatprep.subr.mxu0 0.0
        %5352 = vmatpush2.msra.mxu0 0.0
        %5353 = vmatprep.subr.mxu0 0.0
        %5354 = vmatpush2.msra.mxu0 0.0
        %5355 = vmatprep.subr.mxu0 0.0
        %5356 = vmatpush2.msra.mxu0 0.0
        %5357 = vmatprep.subr.mxu0 0.0
        %5358 = vmatpush2.msra.mxu0 0.0
        %5359 = vmatprep.subr.mxu0 0.0
        %5360 = vmatpush2.msra.mxu0 0.0
        %5361 = vmatprep.subr.mxu0 0.0
        %5362 = vmatpush2.msra.mxu0 0.0
        %5363 = vmatprep.subr.mxu0 0.0
        %5364 = vmatpush2.msra.mxu0 0.0
        %5365 = vmatprep.subr.mxu0 0.0
        %5366 = vmatpush2.msra.mxu0 0.0
        %5367 = vmatprep.subr.mxu0 0.0
        %5368 = vmatpush2.msra.mxu0 0.0
        %5369 = vmatprep.subr.mxu0 0.0
        %5370 = vmatpush2.msra.mxu0 0.0
        %5371 = vmatprep.subr.mxu0 0.0
        %5372 = vmatpush2.msra.mxu0 0.0
        %5373 = vmatprep.mubr.f32.mxu0 0.0
        %5374 = vmatmul.mubr.f32.gmra.mxu0 %v5307
        %v5375 = vpop.f32.mrf.mxu0
        %v5376 = vadd.f32 0.0, %v5375
        %v5377 = vpop.f32.mrf.mxu0
        %5378 = vdwg.mxu0
        %vm5387 = vcmask 1041409
        %v5388 = vsel %vm5387, %v5206, %v5205
        %vm5389 = vcmask 1042434
        %v5390 = vsel %vm5389, %v5207, %v5388
        %vm5391 = vcmask 1043459
        %v5392 = vsel %vm5391, %v5208, %v5390
        %vm5393 = vcmask 1044484
        %v5394 = vsel %vm5393, %v5209, %v5392
        %vm5395 = vcmask 1045509
        %v5396 = vsel %vm5395, %v5210, %v5394
        %vm5397 = vcmask 1046534
        %v5398 = vsel %vm5397, %v5211, %v5396
        %vm5399 = vcmask 1047559
        %v5400 = vsel %vm5399, %v5212, %v5398
        %v5401 = vsel %vm576, %v5400, 0
        %5403 = vmatprep.subr.mxu0 0.0
        %5404 = vmatpush1.msra.mxu0 0.0
        %5405 = vmatprep.subr.mxu0 0.0
        %5406 = vmatpush1.msra.mxu0 0.0
        %5407 = vmatprep.subr.mxu0 0.0
        %5408 = vmatpush1.msra.mxu0 0.0
        %5409 = vmatprep.subr.mxu0 0.0
        %5410 = vmatpush1.msra.mxu0 0.0
        %5411 = vmatprep.subr.mxu0 0.0
        %5412 = vmatpush1.msra.mxu0 0.0
        %5413 = vmatprep.subr.mxu0 0.0
        %5414 = vmatpush1.msra.mxu0 0.0
        %5415 = vmatprep.subr.mxu0 0.0
        %5416 = vmatpush1.msra.mxu0 0.0
        %5417 = vmatprep.subr.mxu0 0.0
        %5418 = vmatpush1.msra.mxu0 0.0
        %5419 = vmatprep.subr.mxu0 0.0
        %5420 = vmatpush1.msra.mxu0 0.0
        %5421 = vmatprep.subr.mxu0 0.0
        %5422 = vmatpush1.msra.mxu0 0.0
        %5423 = vmatprep.subr.mxu0 0.0
        %5424 = vmatpush1.msra.mxu0 0.0
        %5425 = vmatprep.subr.mxu0 0.0
        %5426 = vmatpush1.msra.mxu0 0.0
        %5427 = vmatprep.subr.mxu0 0.0
        %5428 = vmatpush1.msra.mxu0 %v5303
        %5429 = vmatprep.subr.mxu0 0.0
        %5430 = vmatpush1.msra.mxu0 %v5302
        %5431 = vmatprep.subr.mxu0 0.0
        %5432 = vmatpush1.msra.mxu0 %v5301
        %5433 = vmatprep.subr.mxu0 0.0
        %5434 = vmatpush1.msra.mxu0 %v5300
        %5435 = vmatprep.subr.mxu0 0.0
        %5436 = vmatpush2.msra.mxu0 0.0
        %5437 = vmatprep.subr.mxu0 0.0
        %5438 = vmatpush2.msra.mxu0 0.0
        %5439 = vmatprep.subr.mxu0 0.0
        %5440 = vmatpush2.msra.mxu0 0.0
        %5441 = vmatprep.subr.mxu0 0.0
        %5442 = vmatpush2.msra.mxu0 0.0
        %5443 = vmatprep.subr.mxu0 0.0
        %5444 = vmatpush2.msra.mxu0 0.0
        %5445 = vmatprep.subr.mxu0 0.0
        %5446 = vmatpush2.msra.mxu0 0.0
        %5447 = vmatprep.subr.mxu0 0.0
        %5448 = vmatpush2.msra.mxu0 0.0
        %5449 = vmatprep.subr.mxu0 0.0
        %5450 = vmatpush2.msra.mxu0 0.0
        %5451 = vmatprep.subr.mxu0 0.0
        %5452 = vmatpush2.msra.mxu0 0.0
        %5453 = vmatprep.subr.mxu0 0.0
        %5454 = vmatpush2.msra.mxu0 0.0
        %5455 = vmatprep.subr.mxu0 0.0
        %5456 = vmatpush2.msra.mxu0 0.0
        %5457 = vmatprep.subr.mxu0 0.0
        %5458 = vmatpush2.msra.mxu0 0.0
        %5459 = vmatprep.subr.mxu0 0.0
        %5460 = vmatpush2.msra.mxu0 0.0
        %5461 = vmatprep.subr.mxu0 0.0
        %5462 = vmatpush2.msra.mxu0 0.0
        %5463 = vmatprep.subr.mxu0 0.0
        %5464 = vmatpush2.msra.mxu0 0.0
        %5465 = vmatprep.subr.mxu0 0.0
        %5466 = vmatpush2.msra.mxu0 0.0
        %5467 = vmatprep.mubr.f32.mxu0 0.0
        %5468 = vmatmul.mubr.f32.gmra.mxu0 %v5401
        %v5469 = vpop.f32.mrf.mxu0
        %v5470 = vadd.f32 %v5376, %v5469
        %v5471 = vpop.f32.mrf.mxu0
        %5472 = vdwg.mxu0
        %v5473 = vld [vmem:[%s12] sm:$0x1]
        %v5475 = vlaneseq
        %v5476 = vshrl.u32 %v5475, 7
        %v5477 = vsub.s32 0, %v5476
        %v5478 = vrot.slane %v5473, %v5477
        %v5480 = vadd.f32 %v5470, %v5478
        %vm5481 = vcmp.gt.f32.partialorder %v5480, 0.0
        %v5482 = vmul.f32 %v5480, 0.01
        %v5483 = vsel %vm5481, %v5480, %v5482
        %v5484 = vld [vmem:[%s13] sm:$0xff]
        %v5485 = vld [vmem:[%s13 + $0x8] sm:$0xff]
        %v5486 = vld [vmem:[%s13 + $0x10] sm:$0xff]
        %v5487 = vld [vmem:[%s13 + $0x18] sm:$0xff]
        %v5488 = vld [vmem:[%s14] sm:$0x1]
        %v5490 = vlaneseq
        %v5491 = vshrl.u32 %v5490, 7
        %v5492 = vsub.s32 0, %v5491
        %v5493 = vrot.slane %v5488, %v5492
        %v5496 = vsel %vm576, %v5483, 0
        %5498 = vmatprep.subr.mxu0 0.0
        %5499 = vmatpush1.msra.mxu0 0.0
        %5500 = vmatprep.subr.mxu0 0.0
        %5501 = vmatpush1.msra.mxu0 0.0
        %5502 = vmatprep.subr.mxu0 0.0
        %5503 = vmatpush1.msra.mxu0 0.0
        %5504 = vmatprep.subr.mxu0 0.0
        %5505 = vmatpush1.msra.mxu0 0.0
        %5506 = vmatprep.subr.mxu0 0.0
        %5507 = vmatpush1.msra.mxu0 0.0
        %5508 = vmatprep.subr.mxu0 0.0
        %5509 = vmatpush1.msra.mxu0 0.0
        %5510 = vmatprep.subr.mxu0 0.0
        %5511 = vmatpush1.msra.mxu0 0.0
        %5512 = vmatprep.subr.mxu0 0.0
        %5513 = vmatpush1.msra.mxu0 0.0
        %5514 = vmatprep.subr.mxu0 0.0
        %5515 = vmatpush1.msra.mxu0 0.0
        %5516 = vmatprep.subr.mxu0 0.0
        %5517 = vmatpush1.msra.mxu0 0.0
        %5518 = vmatprep.subr.mxu0 0.0
        %5519 = vmatpush1.msra.mxu0 0.0
        %5520 = vmatprep.subr.mxu0 0.0
        %5521 = vmatpush1.msra.mxu0 0.0
        %5522 = vmatprep.subr.mxu0 0.0
        %5523 = vmatpush1.msra.mxu0 %v5487
        %5524 = vmatprep.subr.mxu0 0.0
        %5525 = vmatpush1.msra.mxu0 %v5486
        %5526 = vmatprep.subr.mxu0 0.0
        %5527 = vmatpush1.msra.mxu0 %v5485
        %5528 = vmatprep.subr.mxu0 0.0
        %5529 = vmatpush1.msra.mxu0 %v5484
        %5530 = vmatprep.subr.mxu0 0.0
        %5531 = vmatpush2.msra.mxu0 0.0
        %5532 = vmatprep.subr.mxu0 0.0
        %5533 = vmatpush2.msra.mxu0 0.0
        %5534 = vmatprep.subr.mxu0 0.0
        %5535 = vmatpush2.msra.mxu0 0.0
        %5536 = vmatprep.subr.mxu0 0.0
        %5537 = vmatpush2.msra.mxu0 0.0
        %5538 = vmatprep.subr.mxu0 0.0
        %5539 = vmatpush2.msra.mxu0 0.0
        %5540 = vmatprep.subr.mxu0 0.0
        %5541 = vmatpush2.msra.mxu0 0.0
        %5542 = vmatprep.subr.mxu0 0.0
        %5543 = vmatpush2.msra.mxu0 0.0
        %5544 = vmatprep.subr.mxu0 0.0
        %5545 = vmatpush2.msra.mxu0 0.0
        %5546 = vmatprep.subr.mxu0 0.0
        %5547 = vmatpush2.msra.mxu0 0.0
        %5548 = vmatprep.subr.mxu0 0.0
        %5549 = vmatpush2.msra.mxu0 0.0
        %5550 = vmatprep.subr.mxu0 0.0
        %5551 = vmatpush2.msra.mxu0 0.0
        %5552 = vmatprep.subr.mxu0 0.0
        %5553 = vmatpush2.msra.mxu0 0.0
        %5554 = vmatprep.subr.mxu0 0.0
        %5555 = vmatpush2.msra.mxu0 0.0
        %5556 = vmatprep.subr.mxu0 0.0
        %5557 = vmatpush2.msra.mxu0 0.0
        %5558 = vmatprep.subr.mxu0 0.0
        %5559 = vmatpush2.msra.mxu0 0.0
        %5560 = vmatprep.subr.mxu0 0.0
        %5561 = vmatpush2.msra.mxu0 0.0
        %5562 = vmatprep.mubr.f32.mxu0 0.0
        %5563 = vmatmul.mubr.f32.gmra.mxu0 %v5496
        %v5564 = vpop.f32.mrf.mxu0
        %v5565 = vadd.f32 %v5493, %v5564
        %v5566 = vpop.f32.mrf.mxu0
        %5567 = vdwg.mxu0
        %vm5568 = vcmask 23552
        %5569 = vst.msk [vmem:[%s575] sm:$0xff] %vm5568, %v5565
        %p5570 = scmp.lt.s32.totalorder %s31, 1
        %s5571 = scalar_select %p5570, %s31, 1
        %s5572 = smul.addr %s5571, 8
        %s5573 = scalar_lea.vmem %s15, %s5572
        // Predicated region
        $region97: #{tpu_custom_call.1} parent=79 // pred_check
          %p5574 = pneg %p374
        $region98: #{tpu_custom_call.1} parent=79 // pred_check_branch
          %5576 = sbr.rel (%p5574) target = $region100
        $region99: #{tpu_custom_call.1} parent=79 // pred_region
          _
        $region100: #{tpu_custom_call.1} parent=79 // pred_fallthru
          _
      $region80: #{tpu_custom_call.1} parent=5 // pred_fallthru
        _
      %p5577 = scmp.le.s32.totalorder 2, %s26
      // Predicated region
      $region101: #{tpu_custom_call.1} parent=5 // pred_check
        %p5578 = pneg %p5577
      $region102: #{tpu_custom_call.1} parent=5 // pred_check_branch
        %5580 = sbr.rel (%p5578) target = $region104
      $region103: #{tpu_custom_call.1} parent=5 // pred_region
        %s5581 = ssub.s32 %s26, 2
        // Predicated region
        $region105: #{tpu_custom_call.1} parent=103 // pred_check
          %p5582 = pneg %p380
        $region106: #{tpu_custom_call.1} parent=103 // pred_check_branch
          %5584 = sbr.rel (%p5582) target = $region108
        $region107: #{tpu_custom_call.1} parent=103 // pred_region
          %p5585 = scmp.lt.s32.totalorder %s32, 1
          %s5586 = scalar_select %p5585, %s32, 1
          %s5587 = smul.addr %s5586, 8
          %s5588 = scalar_lea.vmem %s15, %s5587
        $region108: #{tpu_custom_call.1} parent=103 // pred_fallthru
          _
      $region104: #{tpu_custom_call.1} parent=5 // pred_fallthru
        _
    $region6: #{tpu_custom_call.1} parent=1 // loop_footer
      %s30 = sadd.s32 1, %s26
    $region7: #{tpu_custom_call.1} parent=1 // loop_footer_branch
      %25 = sbr.rel target = $region3
    $region8: #{tpu_custom_call.1} parent=1 // loop_exit
      _
    %5589 = vsyncpa [#allocation4], 1
    %s5590 = scalar_lea.sflag [#allocation4], 1
    %5591 = vsyncpa %s5590, 1
    %5592 = vsyncpa [#allocation6], 1
    %5593 = vsyncpa [#allocation9], 1

</llo_original>
